<compile_context>
chip_gen: v7x
topology: tpu7x:2x2x1
jax: 0.10.0
libtpu: 0.0.40
codegen_flags: <defaults>
</compile_context>

<pallas_src>
import numpy as np
import jax
import jax.numpy as jnp
from jax import lax
from jax.experimental import pallas as pl
from jax.experimental.pallas import tpu as pltpu

F = 7            # NetSimile topological node features
FP = 8           # lane-slab width (features padded to 8 lanes)
OUT_W = 5 * FP   # kernel output width: 5 slabs of 8 lanes


def _netsimile_kernel(und_ref, a_hbm_ref, b_ref, gid_r_ref, gid_c_ref,
                      out_ref, a_vmem):
    f32 = jnp.float32
    bf16 = jnp.bfloat16

    # Single-buffered manual copy of the only large input (HBM -> VMEM, bf16).
    pltpu.sync_copy(a_hbm_ref, a_vmem)
    A = a_vmem[...]             # (N,N) 0/1 adjacency in bf16, A[i,j]=1 iff edge i->j
    B = b_ref[...]              # (G,N) 0/1 graph-membership one-hot (f32)
    gid_r = gid_r_ref[...]      # (1,N) per-node graph id (-1 on padded nodes)
    gid_c = gid_c_ref[...]      # (N,1) same values, column layout
    N = A.shape[0]

    lane_fp = lax.broadcasted_iota(jnp.int32, (1, FP), 1)
    lane_is = lambda c: (lane_fp == c).astype(f32)

    def split_bf16(x):
        # x (f32) ~= hi + lo with hi exactly bf16-representable; lo's bf16
        # rounding is ~2^-16 relative overall.  Exact for integer x < 65536.
        hi = x.astype(bf16).astype(f32)
        return hi, x - hi

    # ---------------- per-node topological features ----------------
    # out-degree via a skinny bf16 MXU matmul with f32 accumulation (exact
    # integer sums for any N; avoids an f32 upcast of A for a row-reduce).
    ones_lane0 = jnp.broadcast_to((lane_fp == 0).astype(bf16), (N, FP))
    deg = jnp.dot(A, ones_lane0, preferred_element_type=f32)[:, 0:1]   # (N,1)
    safe_deg = jnp.where(deg > 0.0, deg, 1.0)

    r_ids = lax.broadcasted_iota(jnp.int32, (N, 1), 0)
    c_ids = lax.broadcasted_iota(jnp.int32, (1, N), 1)
    eye = (r_ids == c_ids).astype(bf16)          # (N,N) bf16; no (N,N) int32 iotas
    ego = jnp.maximum(A, eye)                    # bf16 0/1: node + its out-neighbours

    # the single O(N^3) matmul; 0/1 bf16 operands + f32 accumulation are exact.
    ego_a = jnp.dot(ego, A, preferred_element_type=f32)          # (N,N) f32
    feat4 = jnp.sum(ego_a * ego, axis=1, keepdims=True)          # edges inside ego net
    # A is 0/1, so ego@A == ego@bool(A): reuse it for the closed 2-hop set.
    two_hop = jnp.maximum(ego, (ego_a > 0.0).astype(bf16))       # bf16 0/1

    # fused skinny bf16 RHS [deg_hi | deg_lo | ones]: feat5/feat6 in one matmul.
    d_hi, d_lo = split_bf16(deg)
    rhs_th = (d_hi * lane_is(0) + d_lo * lane_is(1) + lane_is(2)).astype(bf16)
    th = jnp.dot(two_hop, rhs_th, preferred_element_type=f32)    # (N,FP)
    feat5 = th[:, 0:1] + th[:, 1:2] - 2.0 * feat4                # two_hop@deg - 2*feat4
    feat6 = th[:, 2:3] - deg - 1.0                               # |two_hop| - deg - 1

    # clustering coefficient (exact divides on tiny (N,1) vectors).
    denom = deg * (deg - 1.0)
    feat1 = jnp.where(deg > 1.0,
                      (feat4 - deg) / jnp.where(denom != 0.0, denom, 1.0), 0.0)

    und = und_ref[0]                                             # 1 iff graph undirected
    feat1 = feat1 * jnp.where(und > 0, 2.0, 1.0).astype(f32)
    feat4 = feat4 * jnp.where(und > 0, 0.5, 1.0).astype(f32)

    # fused neighbour means: A @ [deg_hi | deg_lo | f1_hi | f1_lo] -> feat2, feat3.
    f1_hi, f1_lo = split_bf16(feat1)
    rhs_nb = (d_hi * lane_is(0) + d_lo * lane_is(1)
              + f1_hi * lane_is(2) + f1_lo * lane_is(3)).astype(bf16)
    nb = jnp.dot(A, rhs_nb, preferred_element_type=f32)
    feat2 = jnp.where(deg > 0.0, (nb[:, 0:1] + nb[:, 1:2]) / safe_deg, 0.0)
    feat3 = jnp.where(deg > 0.0, (nb[:, 2:3] + nb[:, 3:4]) / safe_deg, 0.0)

    cols = [deg, feat1, feat2, feat3, feat4, feat5, feat6]
    feat = jnp.zeros((N, FP), f32)
    for c, col in enumerate(cols):
        feat = feat + col * lane_is(c)          # lane FP-1 stays zero

    # ---------------- per-graph aggregation ----------------
    counts = jnp.sum(B, axis=1, keepdims=True)                   # (G,1) nodes per graph
    counts_safe = jnp.maximum(counts, 1.0)                       # padded graphs are empty
    inv_counts = 1.0 / counts_safe
    mean = jnp.dot(B, feat, preferred_element_type=f32) * inv_counts   # (G,FP)

    # stash per-graph node count in the spare lane so one B^T matmul gives both
    # mean[batch] and the per-node own-graph size (no (N,N) B^T B matrix).
    mean_aug = mean + counts * lane_is(FP - 1)
    mpn = lax.dot_general(B, mean_aug, (((0,), (0,)), ((), ())),
                          preferred_element_type=f32)            # (N,FP) = mean[batch]
    cnt_node = mpn[:, FP - 1:FP]                                 # own-graph size per node
    centred = feat - mpn         # lane FP-1 holds -cnt_node: harmless, sliced away
    c2 = centred * centred

    # lower median per (graph, feature) via stable-rank counting.  Masks are
    # built HERE (after the matmul phase) so no (N,N) mask is live across it.
    same = gid_r == gid_c                                        # (N,N) same-graph mask
    same_lower = same & (c_ids < r_ids)                          # stable tie break j < i
    k_node = jnp.floor((cnt_node - 1.0) * 0.5)                   # lower-median rank
    feat_t = jnp.transpose(feat)                                 # (FP,N), exact value copy
    med_sel = jnp.zeros((N, FP), f32)
    for c in range(F):
        vi = cols[c]                                             # (N,1)
        vj = feat_t[c:c + 1, :]                                  # (1,N), same values as vi
        mask = (same & (vj < vi)) | (same_lower & (vj == vi))
        rank = jnp.sum(mask.astype(f32), axis=1, keepdims=True)
        sel = (rank == k_node).astype(f32)                       # exactly one node / graph
        med_sel = med_sel + (vi * sel) * lane_is(c)

    # one lane-dense aggregation matmul: B @ [c2 | c3 | c4 | median-select].
    rhs_big = jnp.concatenate([c2, c2 * centred, c2 * c2, med_sel], axis=1)  # (N,4*FP)
    M = jnp.dot(B, rhs_big, preferred_element_type=f32)          # (G,4*FP)
    m2 = M[:, 0:FP] * inv_counts
    m3 = M[:, FP:2 * FP] * inv_counts
    m4 = M[:, 2 * FP:3 * FP] * inv_counts
    median = M[:, 3 * FP:4 * FP]

    sqrt_m2 = jnp.sqrt(m2)
    # exact divisions: operands are tiny (G,8) slabs, approx reciprocal buys nothing.
    skew = m3 / jnp.maximum(m2 * sqrt_m2, 0.0001)
    kurt = m4 / jnp.maximum(m2 * m2, 0.0001)

    # single lane-dense store; the wrapper slices the 7 valid lanes of each slab.
    out_ref[...] = jnp.concatenate([mean, median, sqrt_m2, skew, kurt], axis=1)


def netsimile_signature(adjacency, batch, num_graphs):
    """NetSimile signature (num_graphs, 35) f32: [mean|median|sqrt(m2)|skew|kurtosis]."""
    N = adjacency.shape[0]
    G = int(num_graphs)
    # MXU / sublane friendly padding: lanes to a multiple of 128, graphs to 8.
    NP = max(128, -(-N // 128) * 128)
    GP = max(8, -(-G // 8) * 8)

    # adjacency ships as bf16 (exact for 0/1): halves the HBM->VMEM DMA and the
    # in-kernel residency of the single large input.
    a_pad = jnp.zeros((NP, NP), jnp.bfloat16).at[:N, :N].set(
        adjacency.astype(jnp.bfloat16))
    batch_pad = jnp.concatenate(
        [batch.astype(jnp.int32), jnp.full((NP - N,), -1, jnp.int32)])
    b_onehot = (batch_pad[None, :] ==
                jnp.arange(GP, dtype=jnp.int32)[:, None]).astype(jnp.float32)
    gid_row = batch_pad.astype(jnp.float32).reshape(1, NP)
    gid_col = batch_pad.astype(jnp.float32).reshape(NP, 1)
    und = jnp.all(adjacency == adjacency.T).astype(jnp.int32).reshape(1)  # is_undirected()

    cost = pl.CostEstimate(
        flops=2 * NP ** 3 + 6 * FP * NP * NP + 10 * FP * GP * NP,
        transcendentals=GP * FP,
        bytes_accessed=NP * NP * 2 + (GP + 2) * NP * 4 + GP * OUT_W * 4)

    out = pl.pallas_call(
        _netsimile_kernel,
        out_shape=jax.ShapeDtypeStruct((GP, OUT_W), jnp.float32),
        grid=(1,),
        in_specs=[
            pl.BlockSpec(memory_space=pltpu.MemorySpace.SMEM),   # undirected flag (1,) i32
            pl.BlockSpec(memory_space=pl.ANY),                   # adjacency (bf16), manual DMA
            pl.BlockSpec((GP, NP), lambda i: (0, 0)),            # batch one-hot
            pl.BlockSpec((1, NP), lambda i: (0, 0)),             # graph id, row layout
            pl.BlockSpec((NP, 1), lambda i: (0, 0)),             # graph id, col layout
        ],
        out_specs=pl.BlockSpec((GP, OUT_W), lambda i: (0, 0)),
        scratch_shapes=[pltpu.VMEM((NP, NP), jnp.bfloat16)],     # single-buffered A copy
        compiler_params=pltpu.CompilerParams(
            dimension_semantics=("arbitrary",),
            # 64 MiB fits every chip (v7x physical cap); v5e/v6e (128 MiB) can go
            # higher to admit larger N in this monolithic form.
            vmem_limit_bytes=64 * 1024 * 1024),
        cost_estimate=cost,
    )(und, a_pad, b_onehot, gid_row, gid_col)

    # strip padding: keep the 7 valid lanes of each 8-wide slab and the real graphs.
    return jnp.concatenate([out[:G, k * FP:k * FP + F] for k in range(5)], axis=1)


def _netsimile_reference(A, batch, G):
    """Plain-JAX dense reimplementation of the torch semantics (for validation)."""
    N = A.shape[0]
    deg = A.sum(1)
    safe_deg = jnp.where(deg > 0, deg, 1.0)
    feat2 = jnp.where(deg > 0, (A @ deg) / safe_deg, 0.0)
    a_bool = (A > 0).astype(jnp.float32)
    ego = jnp.maximum(a_bool, jnp.eye(N, dtype=jnp.float32))
    feat4 = ((ego @ A) * ego).sum(1)
    two_hop = jnp.maximum(ego, ((ego @ a_bool) > 0).astype(jnp.float32))
    feat5 = two_hop @ deg - 2.0 * feat4
    feat6 = two_hop.sum(1) - deg - 1.0
    denom = deg * (deg - 1.0)
    feat1 = jnp.where(deg > 1, (feat4 - deg) / jnp.where(denom != 0, denom, 1.0), 0.0)
    if bool(jnp.all(A == A.T)):
        feat1 = feat1 * 2.0
        feat4 = feat4 / 2.0
    feat3 = jnp.where(deg > 0, (A @ feat1) / safe_deg, 0.0)
    feat = jnp.stack([deg, feat1, feat2, feat3, feat4, feat5, feat6], axis=1)

    onehot = (batch[None, :] == jnp.arange(G)[:, None]).astype(jnp.float32)
    counts = onehot.sum(1, keepdims=True)
    mean = onehot @ feat / counts
    centred = feat - mean[batch]
    m2 = onehot @ (centred ** 2) / counts
    m3 = onehot @ (centred ** 3) / counts
    m4 = onehot @ (centred ** 4) / counts
    meds = []
    for g in range(G):
        idx = jnp.nonzero(batch == g)[0]
        rows = feat[idx]
        srt = jnp.sort(rows, axis=0)
        meds.append(srt[(rows.shape[0] - 1) // 2])               # torch lower median
    median = jnp.stack(meds, axis=0)
    return jnp.concatenate(
        [mean, median, jnp.sqrt(m2),
         m3 / jnp.maximum(m2 ** 1.5, 0.0001),
         m4 / jnp.maximum(m2 ** 2, 0.0001)], axis=1)


if __name__ == "__main__":
    key = jax.random.PRNGKey(0)
    nodes_per_graph = 16
    num_graphs = 2
    N = nodes_per_graph * num_graphs

    # deterministic batch of 2 disconnected undirected graphs (block-diag adjacency)
    keys = jax.random.split(key, num_graphs)
    A = jnp.zeros((N, N), jnp.float32)
    for g in range(num_graphs):
        m = (jax.random.uniform(keys[g], (nodes_per_graph, nodes_per_graph)) < 0.35)
        upper = jnp.triu(m.astype(jnp.float32), k=1)
        block = upper + upper.T
        s = g * nodes_per_graph
        A = A.at[s:s + nodes_per_graph, s:s + nodes_per_graph].set(block)

    batch = jnp.repeat(jnp.arange(num_graphs, dtype=jnp.int32), nodes_per_graph)

    sig = netsimile_signature(A, batch, num_graphs)
    sig = jax.block_until_ready(sig)

    ref = _netsimile_reference(A, batch, num_graphs)
    np.testing.assert_allclose(np.asarray(sig), np.asarray(ref), rtol=2e-2, atol=2e-2)
    print("KERNEL_OK")
</pallas_src>

<mosaic_0001>
module attributes {stable_mosaic.version = 11 : i64} {
  func.func @_netsimile_kernel(%arg0: i32, %arg1: memref<1xi32, #tpu.memory_space<smem>>, %arg2: memref<128x128xbf16, #tpu.memory_space<any>>, %arg3: memref<8x128xf32, #tpu.memory_space<vmem>>, %arg4: memref<1x128xf32, #tpu.memory_space<vmem>>, %arg5: memref<128x1xf32, #tpu.memory_space<vmem>>, %arg6: memref<8x40xf32, #tpu.memory_space<vmem>>, %arg7: memref<128x128xbf16, #tpu.memory_space<vmem>>) attributes {dimension_semantics = [#tpu.dimension_semantics<arbitrary>], iteration_bounds = array<i64: 1>, scalar_prefetch = 0 : i64, scratch_operands = 1 : i64, tpu.core_type = #tpu.core_type<tc>, window_params = [{transform_indices = @transform_0, window_bounds = array<i64: 1>}, {}, {pipeline_mode = #tpu.pipeline_mode<synchronous>, transform_indices = @transform_2, window_bounds = array<i64: 8, 128>}, {pipeline_mode = #tpu.pipeline_mode<synchronous>, transform_indices = @transform_3, window_bounds = array<i64: 1, 128>}, {pipeline_mode = #tpu.pipeline_mode<synchronous>, transform_indices = @transform_4, window_bounds = array<i64: 128, 1>}, {pipeline_mode = #tpu.pipeline_mode<synchronous>, transform_indices = @transform_5, window_bounds = array<i64: 8, 40>}]} {
    "tpu.region"() ({
      %447 = tpu.sem_alloc : memref<!tpu.dma_semaphore, #tpu.memory_space<semaphore_mem>>
      tpu.enqueue_dma source(%arg2 : memref<128x128xbf16, #tpu.memory_space<any>>) target(%arg7 : memref<128x128xbf16, #tpu.memory_space<vmem>>) target_semaphore(%447 : memref<!tpu.dma_semaphore, #tpu.memory_space<semaphore_mem>>)
      tpu.wait_dma2 semaphore(%447 : memref<!tpu.dma_semaphore, #tpu.memory_space<semaphore_mem>>) src(%arg2 : memref<128x128xbf16, #tpu.memory_space<any>>) dst(%arg7 : memref<128x128xbf16, #tpu.memory_space<vmem>>)
      tpu.yield
    }) : () -> ()
    %c0 = arith.constant 0 : index
    %c0_0 = arith.constant 0 : index
    %0 = vector.load %arg7[%c0, %c0_0] : memref<128x128xbf16, #tpu.memory_space<vmem>>, vector<128x128xbf16>
    %c0_1 = arith.constant 0 : index
    %c0_2 = arith.constant 0 : index
    %1 = vector.load %arg3[%c0_1, %c0_2] : memref<8x128xf32, #tpu.memory_space<vmem>>, vector<8x128xf32>
    %c0_3 = arith.constant 0 : index
    %c0_4 = arith.constant 0 : index
    %2 = vector.load %arg4[%c0_3, %c0_4] : memref<1x128xf32, #tpu.memory_space<vmem>>, vector<1x128xf32>
    %c0_5 = arith.constant 0 : index
    %c0_6 = arith.constant 0 : index
    %3 = vector.load %arg5[%c0_5, %c0_6] : memref<128x1xf32, #tpu.memory_space<vmem>>, vector<128x1xf32>
    %4 = tpu.iota {dimensions = array<i32: 1>} : vector<1x8xi32>
    %c0_i32 = arith.constant 0 : i32
    %5 = vector.broadcast %c0_i32 : i32 to vector<1x8xi32>
    %6 = arith.cmpi eq, %4, %5 : vector<1x8xi32>
    %7 = arith.extui %6 : vector<1x8xi1> to vector<1x8xi32>
    %8 = arith.sitofp %7 : vector<1x8xi32> to vector<1x8xf32>
    %9 = arith.truncf %8 : vector<1x8xf32> to vector<1x8xbf16>
    %10 = vector.shape_cast %9 : vector<1x8xbf16> to vector<1x8xbf16>
    %11 = vector.broadcast %10 : vector<1x8xbf16> to vector<128x8xbf16>
    %cst = arith.constant dense<0.000000e+00> : vector<128x8xf32>
    %12 = tpu.matmul %0, %11, %cst {dimension_numbers = #tpu.dot_dimension_numbers<[1], [0], [0], [1], [0, 0, 1, 1], [], []>} : vector<128x128xbf16>, vector<128x8xbf16>, vector<128x8xf32> -> vector<128x8xf32>
    %13 = vector.extract_strided_slice %12 {offsets = [0, 0], sizes = [128, 1], strides = [1, 1]} : vector<128x8xf32> to vector<128x1xf32>
    %cst_7 = arith.constant 0.000000e+00 : f32
    %14 = vector.broadcast %cst_7 : f32 to vector<128x1xf32>
    %15 = arith.cmpf ogt, %13, %14 : vector<128x1xf32>
    %cst_8 = arith.constant 1.000000e+00 : f32
    %16 = vector.broadcast %cst_8 : f32 to vector<128x1xf32>
    %17 = arith.select %15, %13, %16 : vector<128x1xi1>, vector<128x1xf32>
    %18 = tpu.iota {dimensions = array<i32: 0>} : vector<128x1xi32>
    %19 = tpu.iota {dimensions = array<i32: 1>} : vector<1x128xi32>
    %20 = vector.broadcast %18 : vector<128x1xi32> to vector<128x128xi32>
    %21 = vector.broadcast %19 : vector<1x128xi32> to vector<128x128xi32>
    %22 = arith.cmpi eq, %20, %21 : vector<128x128xi32>
    %23 = arith.extui %22 : vector<128x128xi1> to vector<128x128xi32>
    %24 = arith.sitofp %23 : vector<128x128xi32> to vector<128x128xf32>
    %25 = arith.truncf %24 : vector<128x128xf32> to vector<128x128xbf16>
    %26 = arith.maximumf %0, %25 : vector<128x128xbf16>
    %cst_9 = arith.constant dense<0.000000e+00> : vector<128x128xf32>
    %27 = tpu.matmul %26, %0, %cst_9 {dimension_numbers = #tpu.dot_dimension_numbers<[1], [0], [0], [1], [0, 0, 1, 1], [], []>} : vector<128x128xbf16>, vector<128x128xbf16>, vector<128x128xf32> -> vector<128x128xf32>
    %28 = arith.extf %26 : vector<128x128xbf16> to vector<128x128xf32>
    %29 = arith.mulf %27, %28 : vector<128x128xf32>
    %cst_10 = arith.constant dense<0.000000e+00> : vector<128xf32>
    %30 = vector.multi_reduction <add>, %29, %cst_10 [1] : vector<128x128xf32> to vector<128xf32>
    %31 = vector.shape_cast %30 : vector<128xf32> to vector<128x1xf32>
    %cst_11 = arith.constant 0.000000e+00 : f32
    %32 = vector.broadcast %cst_11 : f32 to vector<128x128xf32>
    %33 = arith.cmpf ogt, %27, %32 : vector<128x128xf32>
    %34 = arith.extui %33 : vector<128x128xi1> to vector<128x128xi32>
    %35 = arith.sitofp %34 : vector<128x128xi32> to vector<128x128xf32>
    %36 = arith.truncf %35 : vector<128x128xf32> to vector<128x128xbf16>
    %37 = arith.maximumf %26, %36 : vector<128x128xbf16>
    %38 = arith.truncf %13 : vector<128x1xf32> to vector<128x1xbf16>
    %39 = arith.extf %38 : vector<128x1xbf16> to vector<128x1xf32>
    %40 = arith.subf %13, %39 : vector<128x1xf32>
    %c0_i32_12 = arith.constant 0 : i32
    %41 = vector.broadcast %c0_i32_12 : i32 to vector<1x8xi32>
    %42 = arith.cmpi eq, %4, %41 : vector<1x8xi32>
    %43 = arith.extui %42 : vector<1x8xi1> to vector<1x8xi32>
    %44 = arith.sitofp %43 : vector<1x8xi32> to vector<1x8xf32>
    %45 = vector.broadcast %39 : vector<128x1xf32> to vector<128x8xf32>
    %46 = vector.broadcast %44 : vector<1x8xf32> to vector<128x8xf32>
    %47 = arith.mulf %45, %46 : vector<128x8xf32>
    %c1_i32 = arith.constant 1 : i32
    %48 = vector.broadcast %c1_i32 : i32 to vector<1x8xi32>
    %49 = arith.cmpi eq, %4, %48 : vector<1x8xi32>
    %50 = arith.extui %49 : vector<1x8xi1> to vector<1x8xi32>
    %51 = arith.sitofp %50 : vector<1x8xi32> to vector<1x8xf32>
    %52 = vector.broadcast %40 : vector<128x1xf32> to vector<128x8xf32>
    %53 = vector.broadcast %51 : vector<1x8xf32> to vector<128x8xf32>
    %54 = arith.mulf %52, %53 : vector<128x8xf32>
    %55 = arith.addf %47, %54 : vector<128x8xf32>
    %c2_i32 = arith.constant 2 : i32
    %56 = vector.broadcast %c2_i32 : i32 to vector<1x8xi32>
    %57 = arith.cmpi eq, %4, %56 : vector<1x8xi32>
    %58 = arith.extui %57 : vector<1x8xi1> to vector<1x8xi32>
    %59 = arith.sitofp %58 : vector<1x8xi32> to vector<1x8xf32>
    %60 = vector.broadcast %59 : vector<1x8xf32> to vector<128x8xf32>
    %61 = arith.addf %55, %60 : vector<128x8xf32>
    %62 = arith.truncf %61 : vector<128x8xf32> to vector<128x8xbf16>
    %cst_13 = arith.constant dense<0.000000e+00> : vector<128x8xf32>
    %63 = tpu.matmul %37, %62, %cst_13 {dimension_numbers = #tpu.dot_dimension_numbers<[1], [0], [0], [1], [0, 0, 1, 1], [], []>} : vector<128x128xbf16>, vector<128x8xbf16>, vector<128x8xf32> -> vector<128x8xf32>
    %64 = vector.extract_strided_slice %63 {offsets = [0, 0], sizes = [128, 1], strides = [1, 1]} : vector<128x8xf32> to vector<128x1xf32>
    %65 = vector.extract_strided_slice %63 {offsets = [0, 1], sizes = [128, 1], strides = [1, 1]} : vector<128x8xf32> to vector<128x1xf32>
    %66 = arith.addf %64, %65 : vector<128x1xf32>
    %cst_14 = arith.constant 2.000000e+00 : f32
    %67 = vector.broadcast %cst_14 : f32 to vector<128x1xf32>
    %68 = arith.mulf %67, %31 : vector<128x1xf32>
    %69 = arith.subf %66, %68 : vector<128x1xf32>
    %70 = vector.extract_strided_slice %63 {offsets = [0, 2], sizes = [128, 1], strides = [1, 1]} : vector<128x8xf32> to vector<128x1xf32>
    %71 = arith.subf %70, %13 : vector<128x1xf32>
    %cst_15 = arith.constant 1.000000e+00 : f32
    %72 = vector.broadcast %cst_15 : f32 to vector<128x1xf32>
    %73 = arith.subf %71, %72 : vector<128x1xf32>
    %cst_16 = arith.constant 1.000000e+00 : f32
    %74 = vector.broadcast %cst_16 : f32 to vector<128x1xf32>
    %75 = arith.subf %13, %74 : vector<128x1xf32>
    %76 = arith.mulf %13, %75 : vector<128x1xf32>
    %cst_17 = arith.constant 1.000000e+00 : f32
    %77 = vector.broadcast %cst_17 : f32 to vector<128x1xf32>
    %78 = arith.cmpf ogt, %13, %77 : vector<128x1xf32>
    %79 = arith.subf %31, %13 : vector<128x1xf32>
    %cst_18 = arith.constant 0.000000e+00 : f32
    %80 = vector.broadcast %cst_18 : f32 to vector<128x1xf32>
    %81 = arith.cmpf one, %76, %80 : vector<128x1xf32>
    %cst_19 = arith.constant 1.000000e+00 : f32
    %82 = vector.broadcast %cst_19 : f32 to vector<128x1xf32>
    %83 = arith.select %81, %76, %82 : vector<128x1xi1>, vector<128x1xf32>
    %84 = arith.divf %79, %83 : vector<128x1xf32>
    %cst_20 = arith.constant 0.000000e+00 : f32
    %85 = vector.broadcast %cst_20 : f32 to vector<128x1xf32>
    %86 = arith.select %78, %84, %85 : vector<128x1xi1>, vector<128x1xf32>
    %c0_21 = arith.constant 0 : index
    %87 = memref.load %arg1[%c0_21] : memref<1xi32, #tpu.memory_space<smem>>
    %c0_i32_22 = arith.constant 0 : i32
    %88 = arith.cmpi sgt, %87, %c0_i32_22 : i32
    %cst_23 = arith.constant 2.000000e+00 : f32
    %cst_24 = arith.constant 1.000000e+00 : f32
    %89 = arith.select %88, %cst_23, %cst_24 : f32
    %90 = vector.broadcast %89 : f32 to vector<128x1xf32>
    %91 = arith.mulf %86, %90 : vector<128x1xf32>
    %c0_i32_25 = arith.constant 0 : i32
    %92 = arith.cmpi sgt, %87, %c0_i32_25 : i32
    %cst_26 = arith.constant 5.000000e-01 : f32
    %cst_27 = arith.constant 1.000000e+00 : f32
    %93 = arith.select %92, %cst_26, %cst_27 : f32
    %94 = vector.broadcast %93 : f32 to vector<128x1xf32>
    %95 = arith.mulf %31, %94 : vector<128x1xf32>
    %96 = arith.truncf %91 : vector<128x1xf32> to vector<128x1xbf16>
    %97 = arith.extf %96 : vector<128x1xbf16> to vector<128x1xf32>
    %98 = arith.subf %91, %97 : vector<128x1xf32>
    %c0_i32_28 = arith.constant 0 : i32
    %99 = vector.broadcast %c0_i32_28 : i32 to vector<1x8xi32>
    %100 = arith.cmpi eq, %4, %99 : vector<1x8xi32>
    %101 = arith.extui %100 : vector<1x8xi1> to vector<1x8xi32>
    %102 = arith.sitofp %101 : vector<1x8xi32> to vector<1x8xf32>
    %103 = vector.broadcast %39 : vector<128x1xf32> to vector<128x8xf32>
    %104 = vector.broadcast %102 : vector<1x8xf32> to vector<128x8xf32>
    %105 = arith.mulf %103, %104 : vector<128x8xf32>
    %c1_i32_29 = arith.constant 1 : i32
    %106 = vector.broadcast %c1_i32_29 : i32 to vector<1x8xi32>
    %107 = arith.cmpi eq, %4, %106 : vector<1x8xi32>
    %108 = arith.extui %107 : vector<1x8xi1> to vector<1x8xi32>
    %109 = arith.sitofp %108 : vector<1x8xi32> to vector<1x8xf32>
    %110 = vector.broadcast %40 : vector<128x1xf32> to vector<128x8xf32>
    %111 = vector.broadcast %109 : vector<1x8xf32> to vector<128x8xf32>
    %112 = arith.mulf %110, %111 : vector<128x8xf32>
    %113 = arith.addf %105, %112 : vector<128x8xf32>
    %c2_i32_30 = arith.constant 2 : i32
    %114 = vector.broadcast %c2_i32_30 : i32 to vector<1x8xi32>
    %115 = arith.cmpi eq, %4, %114 : vector<1x8xi32>
    %116 = arith.extui %115 : vector<1x8xi1> to vector<1x8xi32>
    %117 = arith.sitofp %116 : vector<1x8xi32> to vector<1x8xf32>
    %118 = vector.broadcast %97 : vector<128x1xf32> to vector<128x8xf32>
    %119 = vector.broadcast %117 : vector<1x8xf32> to vector<128x8xf32>
    %120 = arith.mulf %118, %119 : vector<128x8xf32>
    %121 = arith.addf %113, %120 : vector<128x8xf32>
    %c3_i32 = arith.constant 3 : i32
    %122 = vector.broadcast %c3_i32 : i32 to vector<1x8xi32>
    %123 = arith.cmpi eq, %4, %122 : vector<1x8xi32>
    %124 = arith.extui %123 : vector<1x8xi1> to vector<1x8xi32>
    %125 = arith.sitofp %124 : vector<1x8xi32> to vector<1x8xf32>
    %126 = vector.broadcast %98 : vector<128x1xf32> to vector<128x8xf32>
    %127 = vector.broadcast %125 : vector<1x8xf32> to vector<128x8xf32>
    %128 = arith.mulf %126, %127 : vector<128x8xf32>
    %129 = arith.addf %121, %128 : vector<128x8xf32>
    %130 = arith.truncf %129 : vector<128x8xf32> to vector<128x8xbf16>
    %cst_31 = arith.constant dense<0.000000e+00> : vector<128x8xf32>
    %131 = tpu.matmul %0, %130, %cst_31 {dimension_numbers = #tpu.dot_dimension_numbers<[1], [0], [0], [1], [0, 0, 1, 1], [], []>} : vector<128x128xbf16>, vector<128x8xbf16>, vector<128x8xf32> -> vector<128x8xf32>
    %cst_32 = arith.constant 0.000000e+00 : f32
    %132 = vector.broadcast %cst_32 : f32 to vector<128x1xf32>
    %133 = arith.cmpf ogt, %13, %132 : vector<128x1xf32>
    %134 = vector.extract_strided_slice %131 {offsets = [0, 0], sizes = [128, 1], strides = [1, 1]} : vector<128x8xf32> to vector<128x1xf32>
    %135 = vector.extract_strided_slice %131 {offsets = [0, 1], sizes = [128, 1], strides = [1, 1]} : vector<128x8xf32> to vector<128x1xf32>
    %136 = arith.addf %134, %135 : vector<128x1xf32>
    %137 = arith.divf %136, %17 : vector<128x1xf32>
    %cst_33 = arith.constant 0.000000e+00 : f32
    %138 = vector.broadcast %cst_33 : f32 to vector<128x1xf32>
    %139 = arith.select %133, %137, %138 : vector<128x1xi1>, vector<128x1xf32>
    %cst_34 = arith.constant 0.000000e+00 : f32
    %140 = vector.broadcast %cst_34 : f32 to vector<128x1xf32>
    %141 = arith.cmpf ogt, %13, %140 : vector<128x1xf32>
    %142 = vector.extract_strided_slice %131 {offsets = [0, 2], sizes = [128, 1], strides = [1, 1]} : vector<128x8xf32> to vector<128x1xf32>
    %143 = vector.extract_strided_slice %131 {offsets = [0, 3], sizes = [128, 1], strides = [1, 1]} : vector<128x8xf32> to vector<128x1xf32>
    %144 = arith.addf %142, %143 : vector<128x1xf32>
    %145 = arith.divf %144, %17 : vector<128x1xf32>
    %cst_35 = arith.constant 0.000000e+00 : f32
    %146 = vector.broadcast %cst_35 : f32 to vector<128x1xf32>
    %147 = arith.select %141, %145, %146 : vector<128x1xi1>, vector<128x1xf32>
    %cst_36 = arith.constant 0.000000e+00 : f32
    %148 = vector.broadcast %cst_36 : f32 to vector<128x8xf32>
    %c0_i32_37 = arith.constant 0 : i32
    %149 = vector.broadcast %c0_i32_37 : i32 to vector<1x8xi32>
    %150 = arith.cmpi eq, %4, %149 : vector<1x8xi32>
    %151 = arith.extui %150 : vector<1x8xi1> to vector<1x8xi32>
    %152 = arith.sitofp %151 : vector<1x8xi32> to vector<1x8xf32>
    %153 = vector.broadcast %13 : vector<128x1xf32> to vector<128x8xf32>
    %154 = vector.broadcast %152 : vector<1x8xf32> to vector<128x8xf32>
    %155 = arith.mulf %153, %154 : vector<128x8xf32>
    %156 = arith.addf %148, %155 : vector<128x8xf32>
    %c1_i32_38 = arith.constant 1 : i32
    %157 = vector.broadcast %c1_i32_38 : i32 to vector<1x8xi32>
    %158 = arith.cmpi eq, %4, %157 : vector<1x8xi32>
    %159 = arith.extui %158 : vector<1x8xi1> to vector<1x8xi32>
    %160 = arith.sitofp %159 : vector<1x8xi32> to vector<1x8xf32>
    %161 = vector.broadcast %91 : vector<128x1xf32> to vector<128x8xf32>
    %162 = vector.broadcast %160 : vector<1x8xf32> to vector<128x8xf32>
    %163 = arith.mulf %161, %162 : vector<128x8xf32>
    %164 = arith.addf %156, %163 : vector<128x8xf32>
    %c2_i32_39 = arith.constant 2 : i32
    %165 = vector.broadcast %c2_i32_39 : i32 to vector<1x8xi32>
    %166 = arith.cmpi eq, %4, %165 : vector<1x8xi32>
    %167 = arith.extui %166 : vector<1x8xi1> to vector<1x8xi32>
    %168 = arith.sitofp %167 : vector<1x8xi32> to vector<1x8xf32>
    %169 = vector.broadcast %139 : vector<128x1xf32> to vector<128x8xf32>
    %170 = vector.broadcast %168 : vector<1x8xf32> to vector<128x8xf32>
    %171 = arith.mulf %169, %170 : vector<128x8xf32>
    %172 = arith.addf %164, %171 : vector<128x8xf32>
    %c3_i32_40 = arith.constant 3 : i32
    %173 = vector.broadcast %c3_i32_40 : i32 to vector<1x8xi32>
    %174 = arith.cmpi eq, %4, %173 : vector<1x8xi32>
    %175 = arith.extui %174 : vector<1x8xi1> to vector<1x8xi32>
    %176 = arith.sitofp %175 : vector<1x8xi32> to vector<1x8xf32>
    %177 = vector.broadcast %147 : vector<128x1xf32> to vector<128x8xf32>
    %178 = vector.broadcast %176 : vector<1x8xf32> to vector<128x8xf32>
    %179 = arith.mulf %177, %178 : vector<128x8xf32>
    %180 = arith.addf %172, %179 : vector<128x8xf32>
    %c4_i32 = arith.constant 4 : i32
    %181 = vector.broadcast %c4_i32 : i32 to vector<1x8xi32>
    %182 = arith.cmpi eq, %4, %181 : vector<1x8xi32>
    %183 = arith.extui %182 : vector<1x8xi1> to vector<1x8xi32>
    %184 = arith.sitofp %183 : vector<1x8xi32> to vector<1x8xf32>
    %185 = vector.broadcast %95 : vector<128x1xf32> to vector<128x8xf32>
    %186 = vector.broadcast %184 : vector<1x8xf32> to vector<128x8xf32>
    %187 = arith.mulf %185, %186 : vector<128x8xf32>
    %188 = arith.addf %180, %187 : vector<128x8xf32>
    %c5_i32 = arith.constant 5 : i32
    %189 = vector.broadcast %c5_i32 : i32 to vector<1x8xi32>
    %190 = arith.cmpi eq, %4, %189 : vector<1x8xi32>
    %191 = arith.extui %190 : vector<1x8xi1> to vector<1x8xi32>
    %192 = arith.sitofp %191 : vector<1x8xi32> to vector<1x8xf32>
    %193 = vector.broadcast %69 : vector<128x1xf32> to vector<128x8xf32>
    %194 = vector.broadcast %192 : vector<1x8xf32> to vector<128x8xf32>
    %195 = arith.mulf %193, %194 : vector<128x8xf32>
    %196 = arith.addf %188, %195 : vector<128x8xf32>
    %c6_i32 = arith.constant 6 : i32
    %197 = vector.broadcast %c6_i32 : i32 to vector<1x8xi32>
    %198 = arith.cmpi eq, %4, %197 : vector<1x8xi32>
    %199 = arith.extui %198 : vector<1x8xi1> to vector<1x8xi32>
    %200 = arith.sitofp %199 : vector<1x8xi32> to vector<1x8xf32>
    %201 = vector.broadcast %73 : vector<128x1xf32> to vector<128x8xf32>
    %202 = vector.broadcast %200 : vector<1x8xf32> to vector<128x8xf32>
    %203 = arith.mulf %201, %202 : vector<128x8xf32>
    %204 = arith.addf %196, %203 : vector<128x8xf32>
    %cst_41 = arith.constant dense<0.000000e+00> : vector<8xf32>
    %205 = vector.multi_reduction <add>, %1, %cst_41 [1] : vector<8x128xf32> to vector<8xf32>
    %206 = vector.shape_cast %205 : vector<8xf32> to vector<8x1xf32>
    %cst_42 = arith.constant 1.000000e+00 : f32
    %207 = vector.broadcast %cst_42 : f32 to vector<8x1xf32>
    %208 = arith.maximumf %206, %207 : vector<8x1xf32>
    %cst_43 = arith.constant 1.000000e+00 : f32
    %209 = vector.broadcast %cst_43 : f32 to vector<8x1xf32>
    %210 = arith.divf %209, %208 : vector<8x1xf32>
    %cst_44 = arith.constant dense<0.000000e+00> : vector<8x8xf32>
    %211 = tpu.matmul %1, %204, %cst_44 {dimension_numbers = #tpu.dot_dimension_numbers<[1], [0], [0], [1], [0, 0, 1, 1], [], []>} : vector<8x128xf32>, vector<128x8xf32>, vector<8x8xf32> -> vector<8x8xf32>
    %212 = vector.broadcast %210 : vector<8x1xf32> to vector<8x8xf32>
    %213 = arith.mulf %211, %212 : vector<8x8xf32>
    %c7_i32 = arith.constant 7 : i32
    %214 = vector.broadcast %c7_i32 : i32 to vector<1x8xi32>
    %215 = arith.cmpi eq, %4, %214 : vector<1x8xi32>
    %216 = arith.extui %215 : vector<1x8xi1> to vector<1x8xi32>
    %217 = arith.sitofp %216 : vector<1x8xi32> to vector<1x8xf32>
    %218 = vector.broadcast %206 : vector<8x1xf32> to vector<8x8xf32>
    %219 = vector.broadcast %217 : vector<1x8xf32> to vector<8x8xf32>
    %220 = arith.mulf %218, %219 : vector<8x8xf32>
    %221 = arith.addf %213, %220 : vector<8x8xf32>
    %cst_45 = arith.constant dense<0.000000e+00> : vector<128x8xf32>
    %222 = tpu.matmul %1, %221, %cst_45 {dimension_numbers = #tpu.dot_dimension_numbers<[0], [0], [1], [1], [0, 1, 1, 1], [], []>} : vector<8x128xf32>, vector<8x8xf32>, vector<128x8xf32> -> vector<128x8xf32>
    %223 = vector.extract_strided_slice %222 {offsets = [0, 7], sizes = [128, 1], strides = [1, 1]} : vector<128x8xf32> to vector<128x1xf32>
    %224 = arith.subf %204, %222 : vector<128x8xf32>
    %225 = arith.mulf %224, %224 : vector<128x8xf32>
    %226 = vector.broadcast %2 : vector<1x128xf32> to vector<128x128xf32>
    %227 = vector.broadcast %3 : vector<128x1xf32> to vector<128x128xf32>
    %228 = arith.cmpf oeq, %226, %227 : vector<128x128xf32>
    %229 = vector.broadcast %19 : vector<1x128xi32> to vector<128x128xi32>
    %230 = vector.broadcast %18 : vector<128x1xi32> to vector<128x128xi32>
    %231 = arith.cmpi slt, %229, %230 : vector<128x128xi32>
    %232 = arith.andi %228, %231 : vector<128x128xi1>
    %cst_46 = arith.constant 1.000000e+00 : f32
    %233 = vector.broadcast %cst_46 : f32 to vector<128x1xf32>
    %234 = arith.subf %223, %233 : vector<128x1xf32>
    %cst_47 = arith.constant 5.000000e-01 : f32
    %235 = vector.broadcast %cst_47 : f32 to vector<128x1xf32>
    %236 = arith.mulf %234, %235 : vector<128x1xf32>
    %237 = math.floor %236 : vector<128x1xf32>
    %238 = tpu.transpose %204, [1, 0] : vector<128x8xf32> -> vector<8x128xf32>
    %cst_48 = arith.constant 0.000000e+00 : f32
    %239 = vector.broadcast %cst_48 : f32 to vector<128x8xf32>
    %240 = vector.extract_strided_slice %238 {offsets = [0, 0], sizes = [1, 128], strides = [1, 1]} : vector<8x128xf32> to vector<1x128xf32>
    %241 = vector.broadcast %240 : vector<1x128xf32> to vector<128x128xf32>
    %242 = vector.broadcast %13 : vector<128x1xf32> to vector<128x128xf32>
    %243 = arith.cmpf olt, %241, %242 : vector<128x128xf32>
    %244 = arith.andi %228, %243 : vector<128x128xi1>
    %245 = vector.broadcast %240 : vector<1x128xf32> to vector<128x128xf32>
    %246 = vector.broadcast %13 : vector<128x1xf32> to vector<128x128xf32>
    %247 = arith.cmpf oeq, %245, %246 : vector<128x128xf32>
    %248 = arith.andi %232, %247 : vector<128x128xi1>
    %249 = arith.ori %244, %248 : vector<128x128xi1>
    %250 = arith.extui %249 : vector<128x128xi1> to vector<128x128xi32>
    %251 = arith.sitofp %250 : vector<128x128xi32> to vector<128x128xf32>
    %cst_49 = arith.constant dense<0.000000e+00> : vector<128xf32>
    %252 = vector.multi_reduction <add>, %251, %cst_49 [1] : vector<128x128xf32> to vector<128xf32>
    %253 = vector.shape_cast %252 : vector<128xf32> to vector<128x1xf32>
    %254 = arith.cmpf oeq, %253, %237 : vector<128x1xf32>
    %255 = arith.extui %254 : vector<128x1xi1> to vector<128x1xi32>
    %256 = arith.sitofp %255 : vector<128x1xi32> to vector<128x1xf32>
    %257 = arith.mulf %13, %256 : vector<128x1xf32>
    %c0_i32_50 = arith.constant 0 : i32
    %258 = vector.broadcast %c0_i32_50 : i32 to vector<1x8xi32>
    %259 = arith.cmpi eq, %4, %258 : vector<1x8xi32>
    %260 = arith.extui %259 : vector<1x8xi1> to vector<1x8xi32>
    %261 = arith.sitofp %260 : vector<1x8xi32> to vector<1x8xf32>
    %262 = vector.broadcast %257 : vector<128x1xf32> to vector<128x8xf32>
    %263 = vector.broadcast %261 : vector<1x8xf32> to vector<128x8xf32>
    %264 = arith.mulf %262, %263 : vector<128x8xf32>
    %265 = arith.addf %239, %264 : vector<128x8xf32>
    %266 = vector.extract_strided_slice %238 {offsets = [1, 0], sizes = [1, 128], strides = [1, 1]} : vector<8x128xf32> to vector<1x128xf32>
    %267 = vector.broadcast %266 : vector<1x128xf32> to vector<128x128xf32>
    %268 = vector.broadcast %91 : vector<128x1xf32> to vector<128x128xf32>
    %269 = arith.cmpf olt, %267, %268 : vector<128x128xf32>
    %270 = arith.andi %228, %269 : vector<128x128xi1>
    %271 = vector.broadcast %266 : vector<1x128xf32> to vector<128x128xf32>
    %272 = vector.broadcast %91 : vector<128x1xf32> to vector<128x128xf32>
    %273 = arith.cmpf oeq, %271, %272 : vector<128x128xf32>
    %274 = arith.andi %232, %273 : vector<128x128xi1>
    %275 = arith.ori %270, %274 : vector<128x128xi1>
    %276 = arith.extui %275 : vector<128x128xi1> to vector<128x128xi32>
    %277 = arith.sitofp %276 : vector<128x128xi32> to vector<128x128xf32>
    %cst_51 = arith.constant dense<0.000000e+00> : vector<128xf32>
    %278 = vector.multi_reduction <add>, %277, %cst_51 [1] : vector<128x128xf32> to vector<128xf32>
    %279 = vector.shape_cast %278 : vector<128xf32> to vector<128x1xf32>
    %280 = arith.cmpf oeq, %279, %237 : vector<128x1xf32>
    %281 = arith.extui %280 : vector<128x1xi1> to vector<128x1xi32>
    %282 = arith.sitofp %281 : vector<128x1xi32> to vector<128x1xf32>
    %283 = arith.mulf %91, %282 : vector<128x1xf32>
    %c1_i32_52 = arith.constant 1 : i32
    %284 = vector.broadcast %c1_i32_52 : i32 to vector<1x8xi32>
    %285 = arith.cmpi eq, %4, %284 : vector<1x8xi32>
    %286 = arith.extui %285 : vector<1x8xi1> to vector<1x8xi32>
    %287 = arith.sitofp %286 : vector<1x8xi32> to vector<1x8xf32>
    %288 = vector.broadcast %283 : vector<128x1xf32> to vector<128x8xf32>
    %289 = vector.broadcast %287 : vector<1x8xf32> to vector<128x8xf32>
    %290 = arith.mulf %288, %289 : vector<128x8xf32>
    %291 = arith.addf %265, %290 : vector<128x8xf32>
    %292 = vector.extract_strided_slice %238 {offsets = [2, 0], sizes = [1, 128], strides = [1, 1]} : vector<8x128xf32> to vector<1x128xf32>
    %293 = vector.broadcast %292 : vector<1x128xf32> to vector<128x128xf32>
    %294 = vector.broadcast %139 : vector<128x1xf32> to vector<128x128xf32>
    %295 = arith.cmpf olt, %293, %294 : vector<128x128xf32>
    %296 = arith.andi %228, %295 : vector<128x128xi1>
    %297 = vector.broadcast %292 : vector<1x128xf32> to vector<128x128xf32>
    %298 = vector.broadcast %139 : vector<128x1xf32> to vector<128x128xf32>
    %299 = arith.cmpf oeq, %297, %298 : vector<128x128xf32>
    %300 = arith.andi %232, %299 : vector<128x128xi1>
    %301 = arith.ori %296, %300 : vector<128x128xi1>
    %302 = arith.extui %301 : vector<128x128xi1> to vector<128x128xi32>
    %303 = arith.sitofp %302 : vector<128x128xi32> to vector<128x128xf32>
    %cst_53 = arith.constant dense<0.000000e+00> : vector<128xf32>
    %304 = vector.multi_reduction <add>, %303, %cst_53 [1] : vector<128x128xf32> to vector<128xf32>
    %305 = vector.shape_cast %304 : vector<128xf32> to vector<128x1xf32>
    %306 = arith.cmpf oeq, %305, %237 : vector<128x1xf32>
    %307 = arith.extui %306 : vector<128x1xi1> to vector<128x1xi32>
    %308 = arith.sitofp %307 : vector<128x1xi32> to vector<128x1xf32>
    %309 = arith.mulf %139, %308 : vector<128x1xf32>
    %c2_i32_54 = arith.constant 2 : i32
    %310 = vector.broadcast %c2_i32_54 : i32 to vector<1x8xi32>
    %311 = arith.cmpi eq, %4, %310 : vector<1x8xi32>
    %312 = arith.extui %311 : vector<1x8xi1> to vector<1x8xi32>
    %313 = arith.sitofp %312 : vector<1x8xi32> to vector<1x8xf32>
    %314 = vector.broadcast %309 : vector<128x1xf32> to vector<128x8xf32>
    %315 = vector.broadcast %313 : vector<1x8xf32> to vector<128x8xf32>
    %316 = arith.mulf %314, %315 : vector<128x8xf32>
    %317 = arith.addf %291, %316 : vector<128x8xf32>
    %318 = vector.extract_strided_slice %238 {offsets = [3, 0], sizes = [1, 128], strides = [1, 1]} : vector<8x128xf32> to vector<1x128xf32>
    %319 = vector.broadcast %318 : vector<1x128xf32> to vector<128x128xf32>
    %320 = vector.broadcast %147 : vector<128x1xf32> to vector<128x128xf32>
    %321 = arith.cmpf olt, %319, %320 : vector<128x128xf32>
    %322 = arith.andi %228, %321 : vector<128x128xi1>
    %323 = vector.broadcast %318 : vector<1x128xf32> to vector<128x128xf32>
    %324 = vector.broadcast %147 : vector<128x1xf32> to vector<128x128xf32>
    %325 = arith.cmpf oeq, %323, %324 : vector<128x128xf32>
    %326 = arith.andi %232, %325 : vector<128x128xi1>
    %327 = arith.ori %322, %326 : vector<128x128xi1>
    %328 = arith.extui %327 : vector<128x128xi1> to vector<128x128xi32>
    %329 = arith.sitofp %328 : vector<128x128xi32> to vector<128x128xf32>
    %cst_55 = arith.constant dense<0.000000e+00> : vector<128xf32>
    %330 = vector.multi_reduction <add>, %329, %cst_55 [1] : vector<128x128xf32> to vector<128xf32>
    %331 = vector.shape_cast %330 : vector<128xf32> to vector<128x1xf32>
    %332 = arith.cmpf oeq, %331, %237 : vector<128x1xf32>
    %333 = arith.extui %332 : vector<128x1xi1> to vector<128x1xi32>
    %334 = arith.sitofp %333 : vector<128x1xi32> to vector<128x1xf32>
    %335 = arith.mulf %147, %334 : vector<128x1xf32>
    %c3_i32_56 = arith.constant 3 : i32
    %336 = vector.broadcast %c3_i32_56 : i32 to vector<1x8xi32>
    %337 = arith.cmpi eq, %4, %336 : vector<1x8xi32>
    %338 = arith.extui %337 : vector<1x8xi1> to vector<1x8xi32>
    %339 = arith.sitofp %338 : vector<1x8xi32> to vector<1x8xf32>
    %340 = vector.broadcast %335 : vector<128x1xf32> to vector<128x8xf32>
    %341 = vector.broadcast %339 : vector<1x8xf32> to vector<128x8xf32>
    %342 = arith.mulf %340, %341 : vector<128x8xf32>
    %343 = arith.addf %317, %342 : vector<128x8xf32>
    %344 = vector.extract_strided_slice %238 {offsets = [4, 0], sizes = [1, 128], strides = [1, 1]} : vector<8x128xf32> to vector<1x128xf32>
    %345 = vector.broadcast %344 : vector<1x128xf32> to vector<128x128xf32>
    %346 = vector.broadcast %95 : vector<128x1xf32> to vector<128x128xf32>
    %347 = arith.cmpf olt, %345, %346 : vector<128x128xf32>
    %348 = arith.andi %228, %347 : vector<128x128xi1>
    %349 = vector.broadcast %344 : vector<1x128xf32> to vector<128x128xf32>
    %350 = vector.broadcast %95 : vector<128x1xf32> to vector<128x128xf32>
    %351 = arith.cmpf oeq, %349, %350 : vector<128x128xf32>
    %352 = arith.andi %232, %351 : vector<128x128xi1>
    %353 = arith.ori %348, %352 : vector<128x128xi1>
    %354 = arith.extui %353 : vector<128x128xi1> to vector<128x128xi32>
    %355 = arith.sitofp %354 : vector<128x128xi32> to vector<128x128xf32>
    %cst_57 = arith.constant dense<0.000000e+00> : vector<128xf32>
    %356 = vector.multi_reduction <add>, %355, %cst_57 [1] : vector<128x128xf32> to vector<128xf32>
    %357 = vector.shape_cast %356 : vector<128xf32> to vector<128x1xf32>
    %358 = arith.cmpf oeq, %357, %237 : vector<128x1xf32>
    %359 = arith.extui %358 : vector<128x1xi1> to vector<128x1xi32>
    %360 = arith.sitofp %359 : vector<128x1xi32> to vector<128x1xf32>
    %361 = arith.mulf %95, %360 : vector<128x1xf32>
    %c4_i32_58 = arith.constant 4 : i32
    %362 = vector.broadcast %c4_i32_58 : i32 to vector<1x8xi32>
    %363 = arith.cmpi eq, %4, %362 : vector<1x8xi32>
    %364 = arith.extui %363 : vector<1x8xi1> to vector<1x8xi32>
    %365 = arith.sitofp %364 : vector<1x8xi32> to vector<1x8xf32>
    %366 = vector.broadcast %361 : vector<128x1xf32> to vector<128x8xf32>
    %367 = vector.broadcast %365 : vector<1x8xf32> to vector<128x8xf32>
    %368 = arith.mulf %366, %367 : vector<128x8xf32>
    %369 = arith.addf %343, %368 : vector<128x8xf32>
    %370 = vector.extract_strided_slice %238 {offsets = [5, 0], sizes = [1, 128], strides = [1, 1]} : vector<8x128xf32> to vector<1x128xf32>
    %371 = vector.broadcast %370 : vector<1x128xf32> to vector<128x128xf32>
    %372 = vector.broadcast %69 : vector<128x1xf32> to vector<128x128xf32>
    %373 = arith.cmpf olt, %371, %372 : vector<128x128xf32>
    %374 = arith.andi %228, %373 : vector<128x128xi1>
    %375 = vector.broadcast %370 : vector<1x128xf32> to vector<128x128xf32>
    %376 = vector.broadcast %69 : vector<128x1xf32> to vector<128x128xf32>
    %377 = arith.cmpf oeq, %375, %376 : vector<128x128xf32>
    %378 = arith.andi %232, %377 : vector<128x128xi1>
    %379 = arith.ori %374, %378 : vector<128x128xi1>
    %380 = arith.extui %379 : vector<128x128xi1> to vector<128x128xi32>
    %381 = arith.sitofp %380 : vector<128x128xi32> to vector<128x128xf32>
    %cst_59 = arith.constant dense<0.000000e+00> : vector<128xf32>
    %382 = vector.multi_reduction <add>, %381, %cst_59 [1] : vector<128x128xf32> to vector<128xf32>
    %383 = vector.shape_cast %382 : vector<128xf32> to vector<128x1xf32>
    %384 = arith.cmpf oeq, %383, %237 : vector<128x1xf32>
    %385 = arith.extui %384 : vector<128x1xi1> to vector<128x1xi32>
    %386 = arith.sitofp %385 : vector<128x1xi32> to vector<128x1xf32>
    %387 = arith.mulf %69, %386 : vector<128x1xf32>
    %c5_i32_60 = arith.constant 5 : i32
    %388 = vector.broadcast %c5_i32_60 : i32 to vector<1x8xi32>
    %389 = arith.cmpi eq, %4, %388 : vector<1x8xi32>
    %390 = arith.extui %389 : vector<1x8xi1> to vector<1x8xi32>
    %391 = arith.sitofp %390 : vector<1x8xi32> to vector<1x8xf32>
    %392 = vector.broadcast %387 : vector<128x1xf32> to vector<128x8xf32>
    %393 = vector.broadcast %391 : vector<1x8xf32> to vector<128x8xf32>
    %394 = arith.mulf %392, %393 : vector<128x8xf32>
    %395 = arith.addf %369, %394 : vector<128x8xf32>
    %396 = vector.extract_strided_slice %238 {offsets = [6, 0], sizes = [1, 128], strides = [1, 1]} : vector<8x128xf32> to vector<1x128xf32>
    %397 = vector.broadcast %396 : vector<1x128xf32> to vector<128x128xf32>
    %398 = vector.broadcast %73 : vector<128x1xf32> to vector<128x128xf32>
    %399 = arith.cmpf olt, %397, %398 : vector<128x128xf32>
    %400 = arith.andi %228, %399 : vector<128x128xi1>
    %401 = vector.broadcast %396 : vector<1x128xf32> to vector<128x128xf32>
    %402 = vector.broadcast %73 : vector<128x1xf32> to vector<128x128xf32>
    %403 = arith.cmpf oeq, %401, %402 : vector<128x128xf32>
    %404 = arith.andi %232, %403 : vector<128x128xi1>
    %405 = arith.ori %400, %404 : vector<128x128xi1>
    %406 = arith.extui %405 : vector<128x128xi1> to vector<128x128xi32>
    %407 = arith.sitofp %406 : vector<128x128xi32> to vector<128x128xf32>
    %cst_61 = arith.constant dense<0.000000e+00> : vector<128xf32>
    %408 = vector.multi_reduction <add>, %407, %cst_61 [1] : vector<128x128xf32> to vector<128xf32>
    %409 = vector.shape_cast %408 : vector<128xf32> to vector<128x1xf32>
    %410 = arith.cmpf oeq, %409, %237 : vector<128x1xf32>
    %411 = arith.extui %410 : vector<128x1xi1> to vector<128x1xi32>
    %412 = arith.sitofp %411 : vector<128x1xi32> to vector<128x1xf32>
    %413 = arith.mulf %73, %412 : vector<128x1xf32>
    %c6_i32_62 = arith.constant 6 : i32
    %414 = vector.broadcast %c6_i32_62 : i32 to vector<1x8xi32>
    %415 = arith.cmpi eq, %4, %414 : vector<1x8xi32>
    %416 = arith.extui %415 : vector<1x8xi1> to vector<1x8xi32>
    %417 = arith.sitofp %416 : vector<1x8xi32> to vector<1x8xf32>
    %418 = vector.broadcast %413 : vector<128x1xf32> to vector<128x8xf32>
    %419 = vector.broadcast %417 : vector<1x8xf32> to vector<128x8xf32>
    %420 = arith.mulf %418, %419 : vector<128x8xf32>
    %421 = arith.addf %395, %420 : vector<128x8xf32>
    %422 = arith.mulf %225, %224 : vector<128x8xf32>
    %423 = arith.mulf %225, %225 : vector<128x8xf32>
    %424 = tpu.concatenate %225, %422, %423, %421 in 1 : vector<128x8xf32>, vector<128x8xf32>, vector<128x8xf32>, vector<128x8xf32> -> vector<128x32xf32>
    %cst_63 = arith.constant dense<0.000000e+00> : vector<8x32xf32>
    %425 = tpu.matmul %1, %424, %cst_63 {dimension_numbers = #tpu.dot_dimension_numbers<[1], [0], [0], [1], [0, 0, 1, 1], [], []>} : vector<8x128xf32>, vector<128x32xf32>, vector<8x32xf32> -> vector<8x32xf32>
    %426 = vector.extract_strided_slice %425 {offsets = [0, 0], sizes = [8, 8], strides = [1, 1]} : vector<8x32xf32> to vector<8x8xf32>
    %427 = vector.broadcast %210 : vector<8x1xf32> to vector<8x8xf32>
    %428 = arith.mulf %426, %427 : vector<8x8xf32>
    %429 = vector.extract_strided_slice %425 {offsets = [0, 8], sizes = [8, 8], strides = [1, 1]} : vector<8x32xf32> to vector<8x8xf32>
    %430 = vector.broadcast %210 : vector<8x1xf32> to vector<8x8xf32>
    %431 = arith.mulf %429, %430 : vector<8x8xf32>
    %432 = vector.extract_strided_slice %425 {offsets = [0, 16], sizes = [8, 8], strides = [1, 1]} : vector<8x32xf32> to vector<8x8xf32>
    %433 = vector.broadcast %210 : vector<8x1xf32> to vector<8x8xf32>
    %434 = arith.mulf %432, %433 : vector<8x8xf32>
    %435 = vector.extract_strided_slice %425 {offsets = [0, 24], sizes = [8, 8], strides = [1, 1]} : vector<8x32xf32> to vector<8x8xf32>
    %436 = math.sqrt %428 : vector<8x8xf32>
    %437 = arith.mulf %428, %436 : vector<8x8xf32>
    %cst_64 = arith.constant 9.99999974E-5 : f32
    %438 = vector.broadcast %cst_64 : f32 to vector<8x8xf32>
    %439 = arith.maximumf %437, %438 : vector<8x8xf32>
    %440 = arith.divf %431, %439 : vector<8x8xf32>
    %441 = arith.mulf %428, %428 : vector<8x8xf32>
    %cst_65 = arith.constant 9.99999974E-5 : f32
    %442 = vector.broadcast %cst_65 : f32 to vector<8x8xf32>
    %443 = arith.maximumf %441, %442 : vector<8x8xf32>
    %444 = arith.divf %434, %443 : vector<8x8xf32>
    %445 = tpu.concatenate %213, %435, %436, %440, %444 in 1 : vector<8x8xf32>, vector<8x8xf32>, vector<8x8xf32>, vector<8x8xf32>, vector<8x8xf32> -> vector<8x40xf32>
    %c0_66 = arith.constant 0 : index
    %c0_67 = arith.constant 0 : index
    %446 = vector.load %arg6[%c0_66, %c0_67] : memref<8x40xf32, #tpu.memory_space<vmem>>, vector<8x40xf32>
    tpu.vector_store %arg6[%c0_66, %c0_67], %445 {strides = array<i32>} : memref<8x40xf32, #tpu.memory_space<vmem>>, vector<8x40xf32>,
    return
  }
  func.func @transform_0(%arg0: i32) -> i32 {
    %c0_i32 = arith.constant 0 : i32
    %c0_i32_0 = arith.constant 0 : i32
    return %c0_i32 : i32
  }
  func.func @transform_2(%arg0: i32) -> (i32, i32) {
    %c0_i32 = arith.constant 0 : i32
    %c0_i32_0 = arith.constant 0 : i32
    %c0_i32_1 = arith.constant 0 : i32
    return %c0_i32, %c0_i32_0 : i32, i32
  }
  func.func @transform_3(%arg0: i32) -> (i32, i32) {
    %c0_i32 = arith.constant 0 : i32
    %c0_i32_0 = arith.constant 0 : i32
    %c0_i32_1 = arith.constant 0 : i32
    return %c0_i32, %c0_i32_0 : i32, i32
  }
  func.func @transform_4(%arg0: i32) -> (i32, i32) {
    %c0_i32 = arith.constant 0 : i32
    %c0_i32_0 = arith.constant 0 : i32
    %c0_i32_1 = arith.constant 0 : i32
    return %c0_i32, %c0_i32_0 : i32, i32
  }
  func.func @transform_5(%arg0: i32) -> (i32, i32) {
    %c0_i32 = arith.constant 0 : i32
    %c0_i32_0 = arith.constant 0 : i32
    %c0_i32_1 = arith.constant 0 : i32
    return %c0_i32, %c0_i32_0 : i32, i32
  }
}

</mosaic_0001>

<llo_original>
// kernel: tpu_custom_call.1
$region0: #{tpu_custom_call.1}
  #allocation0 [shape = 'u32[]', space=smem, size = 0x4, offset = 0x4, fixed_abs, tag = 'smem constant byte address 0x4 - core index']
  #allocation1 [shape = 'u32[144,128]{1,0:T(1,128)}', space=vmem, size = 0x12000, scoped, tag = 'internal scratch']
  #allocation2 [shape = 'bf16[128,128]{1,0:T(16,128)(2,1)}', space=vmem, size = 0x8000, scoped, tag = 'scratch operand']
  #allocation3 [shape = 's32[1]{0:T(128)S(6)}', space=smem, size = 0x200, scoped, tag = 'scoped memory for tpu_custom_call.1']
  #allocation12 [shape = 's32[]', space=sflag, size = 0x4, offset = 0, fixed_abs, tag = 'sflag constant byte address 0x0 - dummy sync flag']
  #allocation13 [shape = 's32[]', space=sflag, size = 0x4, offset = 0, fixed_abs, tag = 'sflag constant byte address 0x0 - dummy sync flag']
  #allocation14 [shape = 'u32[]', space=smem, size = 0x4, offset = 0x44, fixed_abs, tag = 'smem constant byte address 0x44 - assertion arg 0']
  #allocation15 [shape = 'u32[]', space=smem, size = 0x4, offset = 0x48, fixed_abs, tag = 'smem constant byte address 0x48 - assertion arg 1']
  %s0 = inlined_call_operand.<no memory space> [shape: s32[1], index: 0, kind: input, shape index: {}]
  %s1 = inlined_call_operand.hbm [shape: bf16[128,128], index: 1, kind: input, shape index: {}]
  %s2 = inlined_call_operand.hbm [shape: f32[8,128], index: 2, kind: input, shape index: {}]
  %s3 = inlined_call_operand.hbm [shape: f32[1,128], index: 3, kind: input, shape index: {}]
  %s4 = inlined_call_operand.hbm [shape: f32[128,1], index: 4, kind: input, shape index: {}]
  %s5 = inlined_call_operand.hbm [shape: f32[8,40], index: 5, kind: output, shape index: {}]
  %s6 = sld [smem:[#allocation0]]
  $region43: #{tpu_custom_call.1} parent=0
    _
  %s8 = ssub.s32 1, %s6
  %s9 = scalar_select 0, %s8, %s6
  %10 = sst [smem:[#allocation3]] %s0
  $region1: #{tpu_custom_call.1} parent=0
    #allocation4 [shape = 'u8[4096]{0}', space=vmem, size = 0x1000, scoped, tag = 'input window, operand 2, single buffered']
    #allocation5 [shape = 's32[1]{0}', space=sflag, size = 0x4, scoped, tag = 'scoped memory for tpu_custom_call.1']
    #allocation6 [shape = 's32[1]{0}', space=sflag, size = 0x4, scoped, tag = 'scoped memory for tpu_custom_call.1']
    #allocation7 [shape = 'u8[512]{0}', space=vmem, size = 0x400, scoped, tag = 'input window, operand 3, single buffered']
    #allocation8 [shape = 's32[1]{0}', space=sflag, size = 0x4, scoped, tag = 'scoped memory for tpu_custom_call.1']
    #allocation9 [shape = 'u8[65536]{0}', space=vmem, size = 0x10000, scoped, tag = 'input window, operand 4, single buffered']
    #allocation10 [shape = 'u8[4096]{0}', space=vmem, size = 0x1000, scoped, tag = 'output window, operand 0, single buffered']
    %11 = vsyncpa [#allocation5], 0
    %12 = vsyncpa [#allocation8], 0
    %13 = vsyncpa [#allocation6], 0
    // Predicated region
    $region2: #{tpu_custom_call.1} parent=1 // pred_check
      _
    $region3: #{tpu_custom_call.1} parent=1 // pred_check_branch
      %15 = sbr.rel (0) target = $region5
    $region4: #{tpu_custom_call.1} parent=1 // pred_region
      _
    $region5: #{tpu_custom_call.1} parent=1 // pred_fallthru
      _
    // Predicated region
    $region6: #{tpu_custom_call.1} parent=1 // pred_check
      _
    $region7: #{tpu_custom_call.1} parent=1 // pred_check_branch
      %17 = sbr.rel (0) target = $region9
    $region8: #{tpu_custom_call.1} parent=1 // pred_region
      %s19 = ssub.s32 128, 128
      %20 = vsyncadd [#allocation5], %s19
      %s22 = sshll.u32 [#allocation4], 4
      %s23 = int_to_ptr.vmem [resolvable:$true] %s22
      %25 = dma.hbm_to_vmem [thread:$0]  %s2, 128, %s23, [#allocation5]
    $region9: #{tpu_custom_call.1} parent=1 // pred_fallthru
      _
    // Predicated region
    $region10: #{tpu_custom_call.1} parent=1 // pred_check
      _
    $region11: #{tpu_custom_call.1} parent=1 // pred_check_branch
      %27 = sbr.rel (0) target = $region13
    $region12: #{tpu_custom_call.1} parent=1 // pred_region
      %s29 = ssub.s32 16, 16
      %30 = vsyncadd [#allocation8], %s29
      %s32 = sshll.u32 [#allocation7], 4
      %s33 = int_to_ptr.vmem [resolvable:$true] %s32
      %35 = dma.hbm_to_vmem [thread:$0]  %s3, 16, %s33, [#allocation8]
    $region13: #{tpu_custom_call.1} parent=1 // pred_fallthru
      _
    // Predicated region
    $region14: #{tpu_custom_call.1} parent=1 // pred_check
      _
    $region15: #{tpu_custom_call.1} parent=1 // pred_check_branch
      %37 = sbr.rel (0) target = $region17
    $region16: #{tpu_custom_call.1} parent=1 // pred_region
      %s39 = ssub.s32 2048, 2048
      %40 = vsyncadd [#allocation8], %s39
      %s41 = sshll.u32 [#allocation9], 4
      %s42 = int_to_ptr.vmem [resolvable:$true] %s41
      %47 = dma.hbm_to_vmem [thread:$0]  %s4, 2048, %s42, [#allocation8], 128, 128, 8
    $region17: #{tpu_custom_call.1} parent=1 // pred_fallthru
      _
    // Predicated region
    $region18: #{tpu_custom_call.1} parent=1 // pred_check
      _
    $region19: #{tpu_custom_call.1} parent=1 // pred_check_branch
      %49 = sbr.rel (0) target = $region21
    $region20: #{tpu_custom_call.1} parent=1 // pred_region
      %50 = dma.done [#allocation5], 128
    $region21: #{tpu_custom_call.1} parent=1 // pred_fallthru
      _
    // Predicated region
    $region22: #{tpu_custom_call.1} parent=1 // pred_check
      _
    $region23: #{tpu_custom_call.1} parent=1 // pred_check_branch
      %52 = sbr.rel (0) target = $region25
    $region24: #{tpu_custom_call.1} parent=1 // pred_region
      %53 = dma.done [#allocation8], 16
    $region25: #{tpu_custom_call.1} parent=1 // pred_fallthru
      _
    // Predicated region
    $region26: #{tpu_custom_call.1} parent=1 // pred_check
      _
    $region27: #{tpu_custom_call.1} parent=1 // pred_check_branch
      %55 = sbr.rel (0) target = $region29
    $region28: #{tpu_custom_call.1} parent=1 // pred_region
      %56 = dma.done [#allocation8], 2048
    $region29: #{tpu_custom_call.1} parent=1 // pred_fallthru
      _
    $region30: #{tpu_custom_call.1} parent=1
      #allocation11 [shape = 's32[1]{0}', space=sflag, size = 0x4, scoped, tag = 'scoped memory for tpu_custom_call.1']
      // Predicated region
      $region31: #{tpu_custom_call.1} parent=30 // pred_check
        _
      $region32: #{tpu_custom_call.1} parent=30 // pred_check_branch
        %59 = sbr.rel target = $region34
      $region33: #{tpu_custom_call.1} parent=30 // pred_region
        %60 = sst [smem:[#allocation14]] [#allocation13]
        %61 = sst [smem:[#allocation15]] [#allocation12]
      $region34: #{tpu_custom_call.1} parent=30 // pred_fallthru
        _
      %63 = shalt.err (0)
      %s65 = sshll.u32 [#allocation2], 4
      %s66 = int_to_ptr.vmem [resolvable:$true] %s65
      %68 = dma.hbm_to_vmem [thread:$0]  %s1, 1024, %s66, [#allocation11]
      %s69 = smul.u32 4, 16
      %s70 = smul.u32 %s69, 1
      %s71 = sshll.u32 %s70, 4
      %72 = dma.done [#allocation11], %s71
    %v73 = vld [vmem:[#allocation2] sm:$0xff]
    %v74 = vld [vmem:[#allocation2 + $0x8] sm:$0xff]
    %v75 = vld [vmem:[#allocation2 + $0x10] sm:$0xff]
    %v76 = vld [vmem:[#allocation2 + $0x18] sm:$0xff]
    %v77 = vld [vmem:[#allocation2 + $0x20] sm:$0xff]
    %v78 = vld [vmem:[#allocation2 + $0x28] sm:$0xff]
    %v79 = vld [vmem:[#allocation2 + $0x30] sm:$0xff]
    %v80 = vld [vmem:[#allocation2 + $0x38] sm:$0xff]
    %v81 = vld [vmem:[#allocation4] sm:$0xff]
    %v82 = vld [vmem:[#allocation7] sm:$0x1]
    %v83 = vld [vmem:[#allocation9] sm:$0xff]
    %v84 = vld [vmem:[#allocation9 + $0x8] sm:$0xff]
    %v85 = vld [vmem:[#allocation9 + $0x10] sm:$0xff]
    %v86 = vld [vmem:[#allocation9 + $0x18] sm:$0xff]
    %v87 = vld [vmem:[#allocation9 + $0x20] sm:$0xff]
    %v88 = vld [vmem:[#allocation9 + $0x28] sm:$0xff]
    %v89 = vld [vmem:[#allocation9 + $0x30] sm:$0xff]
    %v90 = vld [vmem:[#allocation9 + $0x38] sm:$0xff]
    %v91 = vld [vmem:[#allocation9 + $0x40] sm:$0xff]
    %v92 = vld [vmem:[#allocation9 + $0x48] sm:$0xff]
    %v93 = vld [vmem:[#allocation9 + $0x50] sm:$0xff]
    %v94 = vld [vmem:[#allocation9 + $0x58] sm:$0xff]
    %v95 = vld [vmem:[#allocation9 + $0x60] sm:$0xff]
    %v96 = vld [vmem:[#allocation9 + $0x68] sm:$0xff]
    %v97 = vld [vmem:[#allocation9 + $0x70] sm:$0xff]
    %v98 = vld [vmem:[#allocation9 + $0x78] sm:$0xff]
    %v99 = vlaneseq
    %v100 = vand.u32 %v99, 127
    %vm101 = vcmp.eq.s32.totalorder %v100, 0
    %v102 = vsel %vm101, 1, 0
    %v103 = vcvt.s32.f32 %v102
    %v104 = vpack.c.bf16 %v103, %v103
    %105 = vmatprep.subr.bf16.mxu0 0
    %106 = vmatpush1.bf16.msra.mxu0 %v104
    %107 = vmatprep.subr.bf16.mxu0 0
    %108 = vmatpush1.bf16.msra.mxu0 %v104
    %109 = vmatprep.subr.bf16.mxu0 0
    %110 = vmatpush1.bf16.msra.mxu0 %v104
    %111 = vmatprep.subr.bf16.mxu0 0
    %112 = vmatpush1.bf16.msra.mxu0 %v104
    %113 = vmatprep.subr.bf16.mxu0 0
    %114 = vmatpush1.bf16.msra.mxu0 %v104
    %115 = vmatprep.subr.bf16.mxu0 0
    %116 = vmatpush1.bf16.msra.mxu0 %v104
    %117 = vmatprep.subr.bf16.mxu0 0
    %118 = vmatpush1.bf16.msra.mxu0 %v104
    %119 = vmatprep.subr.bf16.mxu0 0
    %120 = vmatpush1.bf16.msra.mxu0 %v104
    %121 = vmatprep.subr.bf16.mxu0 0
    %122 = vmatpush1.bf16.msra.mxu0 0
    %123 = vmatprep.subr.bf16.mxu0 0
    %124 = vmatpush1.bf16.msra.mxu0 0
    %125 = vmatprep.subr.bf16.mxu0 0
    %126 = vmatpush1.bf16.msra.mxu0 0
    %127 = vmatprep.subr.bf16.mxu0 0
    %128 = vmatpush1.bf16.msra.mxu0 0
    %129 = vmatprep.subr.bf16.mxu0 0
    %130 = vmatpush1.bf16.msra.mxu0 0
    %131 = vmatprep.subr.bf16.mxu0 0
    %132 = vmatpush1.bf16.msra.mxu0 0
    %133 = vmatprep.subr.bf16.mxu0 0
    %134 = vmatpush1.bf16.msra.mxu0 0
    %135 = vmatprep.subr.bf16.mxu0 0
    %136 = vmatpush1.bf16.msra.mxu0 0
    %137 = vmatprep.mubr.bf16.mxu0 0
    %138 = vmatmul.mubr.bf16.gmra.mrb[0].mxu0 %v73
    %v139 = vpop.f32.mrb[0].mxu0
    %v140 = vadd.f32 0.0, %v139
    %v141 = vpop.f32.mrb[0].mxu0
    %v142 = vpop.f32.mrb[0].mxu0
    %v143 = vadd.f32 0.0, %v142
    %v144 = vpop.f32.mrb[0].mxu0
    %145 = vmatprep.mubr.bf16.mxu0 0
    %146 = vmatmul.mubr.bf16.gmra.mrb[0].mxu0 %v74
    %v147 = vpop.f32.mrb[0].mxu0
    %v148 = vadd.f32 0.0, %v147
    %v149 = vpop.f32.mrb[0].mxu0
    %v150 = vpop.f32.mrb[0].mxu0
    %v151 = vadd.f32 0.0, %v150
    %v152 = vpop.f32.mrb[0].mxu0
    %153 = vmatprep.mubr.bf16.mxu0 0
    %154 = vmatmul.mubr.bf16.gmra.mrb[0].mxu0 %v75
    %v155 = vpop.f32.mrb[0].mxu0
    %v156 = vadd.f32 0.0, %v155
    %v157 = vpop.f32.mrb[0].mxu0
    %v158 = vpop.f32.mrb[0].mxu0
    %v159 = vadd.f32 0.0, %v158
    %v160 = vpop.f32.mrb[0].mxu0
    %161 = vmatprep.mubr.bf16.mxu0 0
    %162 = vmatmul.mubr.bf16.gmra.mrb[0].mxu0 %v76
    %v163 = vpop.f32.mrb[0].mxu0
    %v164 = vadd.f32 0.0, %v163
    %v165 = vpop.f32.mrb[0].mxu0
    %v166 = vpop.f32.mrb[0].mxu0
    %v167 = vadd.f32 0.0, %v166
    %v168 = vpop.f32.mrb[0].mxu0
    %169 = vmatprep.mubr.bf16.mxu0 0
    %170 = vmatmul.mubr.bf16.gmra.mrb[0].mxu0 %v77
    %v171 = vpop.f32.mrb[0].mxu0
    %v172 = vadd.f32 0.0, %v171
    %v173 = vpop.f32.mrb[0].mxu0
    %v174 = vpop.f32.mrb[0].mxu0
    %v175 = vadd.f32 0.0, %v174
    %v176 = vpop.f32.mrb[0].mxu0
    %177 = vmatprep.mubr.bf16.mxu0 0
    %178 = vmatmul.mubr.bf16.gmra.mrb[0].mxu0 %v78
    %v179 = vpop.f32.mrb[0].mxu0
    %v180 = vadd.f32 0.0, %v179
    %v181 = vpop.f32.mrb[0].mxu0
    %v182 = vpop.f32.mrb[0].mxu0
    %v183 = vadd.f32 0.0, %v182
    %v184 = vpop.f32.mrb[0].mxu0
    %185 = vmatprep.mubr.bf16.mxu0 0
    %186 = vmatmul.mubr.bf16.gmra.mrb[0].mxu0 %v79
    %v187 = vpop.f32.mrb[0].mxu0
    %v188 = vadd.f32 0.0, %v187
    %v189 = vpop.f32.mrb[0].mxu0
    %v190 = vpop.f32.mrb[0].mxu0
    %v191 = vadd.f32 0.0, %v190
    %v192 = vpop.f32.mrb[0].mxu0
    %193 = vmatprep.mubr.bf16.mxu0 0
    %194 = vmatmul.mubr.bf16.gmra.mrb[0].mxu0 %v80
    %v195 = vpop.f32.mrb[0].mxu0
    %v196 = vadd.f32 0.0, %v195
    %v197 = vpop.f32.mrb[0].mxu0
    %v198 = vpop.f32.mrb[0].mxu0
    %v199 = vadd.f32 0.0, %v198
    %v200 = vpop.f32.mrb[0].mxu0
    %201 = vdwg.mxu0
    %vm202 = vcmp.gt.f32.partialorder %v140, 0.0
    %vm203 = vcmp.gt.f32.partialorder %v143, 0.0
    %vm204 = vcmp.gt.f32.partialorder %v148, 0.0
    %vm205 = vcmp.gt.f32.partialorder %v151, 0.0
    %vm206 = vcmp.gt.f32.partialorder %v156, 0.0
    %vm207 = vcmp.gt.f32.partialorder %v159, 0.0
    %vm208 = vcmp.gt.f32.partialorder %v164, 0.0
    %vm209 = vcmp.gt.f32.partialorder %v167, 0.0
    %vm210 = vcmp.gt.f32.partialorder %v172, 0.0
    %vm211 = vcmp.gt.f32.partialorder %v175, 0.0
    %vm212 = vcmp.gt.f32.partialorder %v180, 0.0
    %vm213 = vcmp.gt.f32.partialorder %v183, 0.0
    %vm214 = vcmp.gt.f32.partialorder %v188, 0.0
    %vm215 = vcmp.gt.f32.partialorder %v191, 0.0
    %vm216 = vcmp.gt.f32.partialorder %v196, 0.0
    %vm217 = vcmp.gt.f32.partialorder %v199, 0.0
    %v218 = vsel %vm202, %v140, 1.0
    %v219 = vsel %vm203, %v143, 1.0
    %v220 = vsel %vm204, %v148, 1.0
    %v221 = vsel %vm205, %v151, 1.0
    %v222 = vsel %vm206, %v156, 1.0
    %v223 = vsel %vm207, %v159, 1.0
    %v224 = vsel %vm208, %v164, 1.0
    %v225 = vsel %vm209, %v167, 1.0
    %v226 = vsel %vm210, %v172, 1.0
    %v227 = vsel %vm211, %v175, 1.0
    %v228 = vsel %vm212, %v180, 1.0
    %v229 = vsel %vm213, %v183, 1.0
    %v230 = vsel %vm214, %v188, 1.0
    %v231 = vsel %vm215, %v191, 1.0
    %v232 = vsel %vm216, %v196, 1.0
    %v233 = vsel %vm217, %v199, 1.0
    %v234 = vlaneseq
    %v235 = vshrl.u32 %v234, 7
    %v236 = vadd.s32 %v235, 8
    %v237 = vadd.s32 %v235, 16
    %v238 = vadd.s32 %v235, 24
    %v239 = vadd.s32 %v235, 32
    %v240 = vadd.s32 %v235, 40
    %v241 = vadd.s32 %v235, 48
    %v242 = vadd.s32 %v235, 56
    %v243 = vadd.s32 %v235, 64
    %v244 = vadd.s32 %v235, 72
    %v245 = vadd.s32 %v235, 80
    %v246 = vadd.s32 %v235, 88
    %v247 = vadd.s32 %v235, 96
    %v248 = vadd.s32 %v235, 104
    %v249 = vadd.s32 %v235, 112
    %v250 = vadd.s32 %v235, 120
    %vm251 = vcmp.eq.s32.totalorder %v235, %v100
    %vm252 = vcmp.eq.s32.totalorder %v236, %v100
    %vm253 = vcmp.eq.s32.totalorder %v237, %v100
    %vm254 = vcmp.eq.s32.totalorder %v238, %v100
    %vm255 = vcmp.eq.s32.totalorder %v239, %v100
    %vm256 = vcmp.eq.s32.totalorder %v240, %v100
    %vm257 = vcmp.eq.s32.totalorder %v241, %v100
    %vm258 = vcmp.eq.s32.totalorder %v242, %v100
    %vm259 = vcmp.eq.s32.totalorder %v243, %v100
    %vm260 = vcmp.eq.s32.totalorder %v244, %v100
    %vm261 = vcmp.eq.s32.totalorder %v245, %v100
    %vm262 = vcmp.eq.s32.totalorder %v246, %v100
    %vm263 = vcmp.eq.s32.totalorder %v247, %v100
    %vm264 = vcmp.eq.s32.totalorder %v248, %v100
    %vm265 = vcmp.eq.s32.totalorder %v249, %v100
    %vm266 = vcmp.eq.s32.totalorder %v250, %v100
    %v267 = vsel %vm251, 1, 0
    %v268 = vsel %vm252, 1, 0
    %v269 = vsel %vm253, 1, 0
    %v270 = vsel %vm254, 1, 0
    %v271 = vsel %vm255, 1, 0
    %v272 = vsel %vm256, 1, 0
    %v273 = vsel %vm257, 1, 0
    %v274 = vsel %vm258, 1, 0
    %v275 = vsel %vm259, 1, 0
    %v276 = vsel %vm260, 1, 0
    %v277 = vsel %vm261, 1, 0
    %v278 = vsel %vm262, 1, 0
    %v279 = vsel %vm263, 1, 0
    %v280 = vsel %vm264, 1, 0
    %v281 = vsel %vm265, 1, 0
    %v282 = vsel %vm266, 1, 0
    %v283 = vcvt.s32.f32 %v267
    %v284 = vcvt.s32.f32 %v268
    %v285 = vcvt.s32.f32 %v269
    %v286 = vcvt.s32.f32 %v270
    %v287 = vcvt.s32.f32 %v271
    %v288 = vcvt.s32.f32 %v272
    %v289 = vcvt.s32.f32 %v273
    %v290 = vcvt.s32.f32 %v274
    %v291 = vcvt.s32.f32 %v275
    %v292 = vcvt.s32.f32 %v276
    %v293 = vcvt.s32.f32 %v277
    %v294 = vcvt.s32.f32 %v278
    %v295 = vcvt.s32.f32 %v279
    %v296 = vcvt.s32.f32 %v280
    %v297 = vcvt.s32.f32 %v281
    %v298 = vcvt.s32.f32 %v282
    %v299 = vpack.c.bf16 %v284, %v283
    %v300 = vpack.c.bf16 %v286, %v285
    %v301 = vpack.c.bf16 %v288, %v287
    %v302 = vpack.c.bf16 %v290, %v289
    %v303 = vpack.c.bf16 %v292, %v291
    %v304 = vpack.c.bf16 %v294, %v293
    %v305 = vpack.c.bf16 %v296, %v295
    %v306 = vpack.c.bf16 %v298, %v297
    %v307 = vmax.bf16 %v73, %v299
    %v308 = vmax.bf16 %v74, %v300
    %v309 = vmax.bf16 %v75, %v301
    %v310 = vmax.bf16 %v76, %v302
    %v311 = vmax.bf16 %v77, %v303
    %v312 = vmax.bf16 %v78, %v304
    %v313 = vmax.bf16 %v79, %v305
    %v314 = vmax.bf16 %v80, %v306
    %315 = vmatprep.subr.bf16.mxu0 0
    %316 = vmatpush1.bf16.msra.mxu0 %v73
    %317 = vmatprep.subr.bf16.mxu0 0
    %318 = vmatpush1.bf16.msra.mxu0 %v74
    %319 = vmatprep.subr.bf16.mxu0 0
    %320 = vmatpush1.bf16.msra.mxu0 %v75
    %321 = vmatprep.subr.bf16.mxu0 0
    %322 = vmatpush1.bf16.msra.mxu0 %v76
    %323 = vmatprep.subr.bf16.mxu0 0
    %324 = vmatpush1.bf16.msra.mxu0 %v77
    %325 = vmatprep.subr.bf16.mxu0 0
    %326 = vmatpush1.bf16.msra.mxu0 %v78
    %327 = vmatprep.subr.bf16.mxu0 0
    %328 = vmatpush1.bf16.msra.mxu0 %v79
    %329 = vmatprep.subr.bf16.mxu0 0
    %330 = vmatpush1.bf16.msra.mxu0 %v80
    %331 = vmatprep.subr.bf16.mxu0 0
    %332 = vmatpush1.bf16.msra.mxu0 0
    %333 = vmatprep.subr.bf16.mxu0 0
    %334 = vmatpush1.bf16.msra.mxu0 0
    %335 = vmatprep.subr.bf16.mxu0 0
    %336 = vmatpush1.bf16.msra.mxu0 0
    %337 = vmatprep.subr.bf16.mxu0 0
    %338 = vmatpush1.bf16.msra.mxu0 0
    %339 = vmatprep.subr.bf16.mxu0 0
    %340 = vmatpush1.bf16.msra.mxu0 0
    %341 = vmatprep.subr.bf16.mxu0 0
    %342 = vmatpush1.bf16.msra.mxu0 0
    %343 = vmatprep.subr.bf16.mxu0 0
    %344 = vmatpush1.bf16.msra.mxu0 0
    %345 = vmatprep.subr.bf16.mxu0 0
    %346 = vmatpush1.bf16.msra.mxu0 0
    %347 = vmatprep.mubr.bf16.mxu0 0
    %348 = vmatmul.mubr.bf16.gmra.mrb[0].mxu0 %v307
    %v349 = vpop.f32.mrb[0].mxu0
    %v350 = vadd.f32 0.0, %v349
    %v351 = vpop.f32.mrb[0].mxu0
    %v352 = vpop.f32.mrb[0].mxu0
    %v353 = vadd.f32 0.0, %v352
    %v354 = vpop.f32.mrb[0].mxu0
    %355 = vmatprep.mubr.bf16.mxu0 0
    %356 = vmatmul.mubr.bf16.gmra.mrb[0].mxu0 %v308
    %v357 = vpop.f32.mrb[0].mxu0
    %v358 = vadd.f32 0.0, %v357
    %v359 = vpop.f32.mrb[0].mxu0
    %v360 = vpop.f32.mrb[0].mxu0
    %v361 = vadd.f32 0.0, %v360
    %v362 = vpop.f32.mrb[0].mxu0
    %363 = vmatprep.mubr.bf16.mxu0 0
    %364 = vmatmul.mubr.bf16.gmra.mrb[0].mxu0 %v309
    %v365 = vpop.f32.mrb[0].mxu0
    %v366 = vadd.f32 0.0, %v365
    %v367 = vpop.f32.mrb[0].mxu0
    %v368 = vpop.f32.mrb[0].mxu0
    %v369 = vadd.f32 0.0, %v368
    %v370 = vpop.f32.mrb[0].mxu0
    %371 = vmatprep.mubr.bf16.mxu0 0
    %372 = vmatmul.mubr.bf16.gmra.mrb[0].mxu0 %v310
    %v373 = vpop.f32.mrb[0].mxu0
    %v374 = vadd.f32 0.0, %v373
    %v375 = vpop.f32.mrb[0].mxu0
    %v376 = vpop.f32.mrb[0].mxu0
    %v377 = vadd.f32 0.0, %v376
    %v378 = vpop.f32.mrb[0].mxu0
    %379 = vmatprep.mubr.bf16.mxu0 0
    %380 = vmatmul.mubr.bf16.gmra.mrb[0].mxu0 %v311
    %v381 = vpop.f32.mrb[0].mxu0
    %v382 = vadd.f32 0.0, %v381
    %v383 = vpop.f32.mrb[0].mxu0
    %v384 = vpop.f32.mrb[0].mxu0
    %v385 = vadd.f32 0.0, %v384
    %v386 = vpop.f32.mrb[0].mxu0
    %387 = vmatprep.mubr.bf16.mxu0 0
    %388 = vmatmul.mubr.bf16.gmra.mrb[0].mxu0 %v312
    %v389 = vpop.f32.mrb[0].mxu0
    %v390 = vadd.f32 0.0, %v389
    %v391 = vpop.f32.mrb[0].mxu0
    %v392 = vpop.f32.mrb[0].mxu0
    %v393 = vadd.f32 0.0, %v392
    %v394 = vpop.f32.mrb[0].mxu0
    %395 = vmatprep.mubr.bf16.mxu0 0
    %396 = vmatmul.mubr.bf16.gmra.mrb[0].mxu0 %v313
    %v397 = vpop.f32.mrb[0].mxu0
    %v398 = vadd.f32 0.0, %v397
    %v399 = vpop.f32.mrb[0].mxu0
    %v400 = vpop.f32.mrb[0].mxu0
    %v401 = vadd.f32 0.0, %v400
    %v402 = vpop.f32.mrb[0].mxu0
    %403 = vmatprep.mubr.bf16.mxu0 0
    %404 = vmatmul.mubr.bf16.gmra.mrb[0].mxu0 %v314
    %v405 = vpop.f32.mrb[0].mxu0
    %v406 = vadd.f32 0.0, %v405
    %v407 = vpop.f32.mrb[0].mxu0
    %v408 = vpop.f32.mrb[0].mxu0
    %v409 = vadd.f32 0.0, %v408
    %v410 = vpop.f32.mrb[0].mxu0
    %411 = vdwg.mxu0
    %v412 = vunpack.c.l.bf16 %v307
    %v413 = vunpack.c.h.bf16 %v307
    %v414 = vunpack.c.l.bf16 %v308
    %v415 = vunpack.c.h.bf16 %v308
    %v416 = vunpack.c.l.bf16 %v309
    %v417 = vunpack.c.h.bf16 %v309
    %v418 = vunpack.c.l.bf16 %v310
    %v419 = vunpack.c.h.bf16 %v310
    %v420 = vunpack.c.l.bf16 %v311
    %v421 = vunpack.c.h.bf16 %v311
    %v422 = vunpack.c.l.bf16 %v312
    %v423 = vunpack.c.h.bf16 %v312
    %v424 = vunpack.c.l.bf16 %v313
    %v425 = vunpack.c.h.bf16 %v313
    %v426 = vunpack.c.l.bf16 %v314
    %v427 = vunpack.c.h.bf16 %v314
    %v428 = vmul.f32 %v350, %v412
    %v429 = vmul.f32 %v353, %v413
    %v430 = vmul.f32 %v358, %v414
    %v431 = vmul.f32 %v361, %v415
    %v432 = vmul.f32 %v366, %v416
    %v433 = vmul.f32 %v369, %v417
    %v434 = vmul.f32 %v374, %v418
    %v435 = vmul.f32 %v377, %v419
    %v436 = vmul.f32 %v382, %v420
    %v437 = vmul.f32 %v385, %v421
    %v438 = vmul.f32 %v390, %v422
    %v439 = vmul.f32 %v393, %v423
    %v440 = vmul.f32 %v398, %v424
    %v441 = vmul.f32 %v401, %v425
    %v442 = vmul.f32 %v406, %v426
    %v443 = vmul.f32 %v409, %v427
    %444 = vadd.xlane.f32.xlu0 %v428
    %v445 = vpop.xlane.xlu0 %444
    %446 = vadd.xlane.f32.xlu0 %v429
    %v447 = vpop.xlane.xlu0 %446
    %448 = vadd.xlane.f32.xlu0 %v430
    %v449 = vpop.xlane.xlu0 %448
    %450 = vadd.xlane.f32.xlu0 %v431
    %v451 = vpop.xlane.xlu0 %450
    %452 = vadd.xlane.f32.xlu0 %v432
    %v453 = vpop.xlane.xlu0 %452
    %454 = vadd.xlane.f32.xlu0 %v433
    %v455 = vpop.xlane.xlu0 %454
    %456 = vadd.xlane.f32.xlu0 %v434
    %v457 = vpop.xlane.xlu0 %456
    %458 = vadd.xlane.f32.xlu0 %v435
    %v459 = vpop.xlane.xlu0 %458
    %460 = vadd.xlane.f32.xlu0 %v436
    %v461 = vpop.xlane.xlu0 %460
    %462 = vadd.xlane.f32.xlu0 %v437
    %v463 = vpop.xlane.xlu0 %462
    %464 = vadd.xlane.f32.xlu0 %v438
    %v465 = vpop.xlane.xlu0 %464
    %466 = vadd.xlane.f32.xlu0 %v439
    %v467 = vpop.xlane.xlu0 %466
    %468 = vadd.xlane.f32.xlu0 %v440
    %v469 = vpop.xlane.xlu0 %468
    %470 = vadd.xlane.f32.xlu0 %v441
    %v471 = vpop.xlane.xlu0 %470
    %472 = vadd.xlane.f32.xlu0 %v442
    %v473 = vpop.xlane.xlu0 %472
    %474 = vadd.xlane.f32.xlu0 %v443
    %v475 = vpop.xlane.xlu0 %474
    %vm476 = vcmp.gt.f32.partialorder %v350, 0.0
    %vm477 = vcmp.gt.f32.partialorder %v353, 0.0
    %vm478 = vcmp.gt.f32.partialorder %v358, 0.0
    %vm479 = vcmp.gt.f32.partialorder %v361, 0.0
    %vm480 = vcmp.gt.f32.partialorder %v366, 0.0
    %vm481 = vcmp.gt.f32.partialorder %v369, 0.0
    %vm482 = vcmp.gt.f32.partialorder %v374, 0.0
    %vm483 = vcmp.gt.f32.partialorder %v377, 0.0
    %vm484 = vcmp.gt.f32.partialorder %v382, 0.0
    %vm485 = vcmp.gt.f32.partialorder %v385, 0.0
    %vm486 = vcmp.gt.f32.partialorder %v390, 0.0
    %vm487 = vcmp.gt.f32.partialorder %v393, 0.0
    %vm488 = vcmp.gt.f32.partialorder %v398, 0.0
    %vm489 = vcmp.gt.f32.partialorder %v401, 0.0
    %vm490 = vcmp.gt.f32.partialorder %v406, 0.0
    %vm491 = vcmp.gt.f32.partialorder %v409, 0.0
    %v492 = vsel %vm476, 1, 0
    %v493 = vsel %vm477, 1, 0
    %v494 = vsel %vm478, 1, 0
    %v495 = vsel %vm479, 1, 0
    %v496 = vsel %vm480, 1, 0
    %v497 = vsel %vm481, 1, 0
    %v498 = vsel %vm482, 1, 0
    %v499 = vsel %vm483, 1, 0
    %v500 = vsel %vm484, 1, 0
    %v501 = vsel %vm485, 1, 0
    %v502 = vsel %vm486, 1, 0
    %v503 = vsel %vm487, 1, 0
    %v504 = vsel %vm488, 1, 0
    %v505 = vsel %vm489, 1, 0
    %v506 = vsel %vm490, 1, 0
    %v507 = vsel %vm491, 1, 0
    %v508 = vcvt.s32.f32 %v492
    %v509 = vcvt.s32.f32 %v493
    %v510 = vcvt.s32.f32 %v494
    %v511 = vcvt.s32.f32 %v495
    %v512 = vcvt.s32.f32 %v496
    %v513 = vcvt.s32.f32 %v497
    %v514 = vcvt.s32.f32 %v498
    %v515 = vcvt.s32.f32 %v499
    %v516 = vcvt.s32.f32 %v500
    %v517 = vcvt.s32.f32 %v501
    %v518 = vcvt.s32.f32 %v502
    %v519 = vcvt.s32.f32 %v503
    %v520 = vcvt.s32.f32 %v504
    %v521 = vcvt.s32.f32 %v505
    %v522 = vcvt.s32.f32 %v506
    %v523 = vcvt.s32.f32 %v507
    %v524 = vpack.c.bf16 %v509, %v508
    %v525 = vpack.c.bf16 %v511, %v510
    %v526 = vpack.c.bf16 %v513, %v512
    %v527 = vpack.c.bf16 %v515, %v514
    %v528 = vpack.c.bf16 %v517, %v516
    %v529 = vpack.c.bf16 %v519, %v518
    %v530 = vpack.c.bf16 %v521, %v520
    %v531 = vpack.c.bf16 %v523, %v522
    %v532 = vmax.bf16 %v307, %v524
    %v533 = vmax.bf16 %v308, %v525
    %v534 = vmax.bf16 %v309, %v526
    %v535 = vmax.bf16 %v310, %v527
    %v536 = vmax.bf16 %v311, %v528
    %v537 = vmax.bf16 %v312, %v529
    %v538 = vmax.bf16 %v313, %v530
    %v539 = vmax.bf16 %v314, %v531
    %v540 = vpack.c.bf16 %v143, %v140
    %v541 = vpack.c.bf16 %v151, %v148
    %v542 = vpack.c.bf16 %v159, %v156
    %v543 = vpack.c.bf16 %v167, %v164
    %v544 = vpack.c.bf16 %v175, %v172
    %v545 = vpack.c.bf16 %v183, %v180
    %v546 = vpack.c.bf16 %v191, %v188
    %v547 = vpack.c.bf16 %v199, %v196
    %v548 = vunpack.c.l.bf16 %v540
    %v549 = vunpack.c.h.bf16 %v540
    %v550 = vunpack.c.l.bf16 %v541
    %v551 = vunpack.c.h.bf16 %v541
    %v552 = vunpack.c.l.bf16 %v542
    %v553 = vunpack.c.h.bf16 %v542
    %v554 = vunpack.c.l.bf16 %v543
    %v555 = vunpack.c.h.bf16 %v543
    %v556 = vunpack.c.l.bf16 %v544
    %v557 = vunpack.c.h.bf16 %v544
    %v558 = vunpack.c.l.bf16 %v545
    %v559 = vunpack.c.h.bf16 %v545
    %v560 = vunpack.c.l.bf16 %v546
    %v561 = vunpack.c.h.bf16 %v546
    %v562 = vunpack.c.l.bf16 %v547
    %v563 = vunpack.c.h.bf16 %v547
    %v564 = vsub.f32 %v140, %v548
    %v565 = vsub.f32 %v143, %v549
    %v566 = vsub.f32 %v148, %v550
    %v567 = vsub.f32 %v151, %v551
    %v568 = vsub.f32 %v156, %v552
    %v569 = vsub.f32 %v159, %v553
    %v570 = vsub.f32 %v164, %v554
    %v571 = vsub.f32 %v167, %v555
    %v572 = vsub.f32 %v172, %v556
    %v573 = vsub.f32 %v175, %v557
    %v574 = vsub.f32 %v180, %v558
    %v575 = vsub.f32 %v183, %v559
    %v576 = vsub.f32 %v188, %v560
    %v577 = vsub.f32 %v191, %v561
    %v578 = vsub.f32 %v196, %v562
    %v579 = vsub.f32 %v199, %v563
    %581 = vset.pattern.permute.xlu0 0
    %582 = vperm.xlu0 %581, %v548
    %v583 = vpop.permute.xlu0 %582
    %586 = vset.pattern.permute.xlu0 0
    %587 = vperm.xlu0 %586, %v549
    %v588 = vpop.permute.xlu0 %587
    %591 = vset.pattern.permute.xlu0 0
    %592 = vperm.xlu0 %591, %v550
    %v593 = vpop.permute.xlu0 %592
    %596 = vset.pattern.permute.xlu0 0
    %597 = vperm.xlu0 %596, %v551
    %v598 = vpop.permute.xlu0 %597
    %601 = vset.pattern.permute.xlu0 0
    %602 = vperm.xlu0 %601, %v552
    %v603 = vpop.permute.xlu0 %602
    %606 = vset.pattern.permute.xlu0 0
    %607 = vperm.xlu0 %606, %v553
    %v608 = vpop.permute.xlu0 %607
    %611 = vset.pattern.permute.xlu0 0
    %612 = vperm.xlu0 %611, %v554
    %v613 = vpop.permute.xlu0 %612
    %616 = vset.pattern.permute.xlu0 0
    %617 = vperm.xlu0 %616, %v555
    %v618 = vpop.permute.xlu0 %617
    %621 = vset.pattern.permute.xlu0 0
    %622 = vperm.xlu0 %621, %v556
    %v623 = vpop.permute.xlu0 %622
    %626 = vset.pattern.permute.xlu0 0
    %627 = vperm.xlu0 %626, %v557
    %v628 = vpop.permute.xlu0 %627
    %631 = vset.pattern.permute.xlu0 0
    %632 = vperm.xlu0 %631, %v558
    %v633 = vpop.permute.xlu0 %632
    %636 = vset.pattern.permute.xlu0 0
    %637 = vperm.xlu0 %636, %v559
    %v638 = vpop.permute.xlu0 %637
    %641 = vset.pattern.permute.xlu0 0
    %642 = vperm.xlu0 %641, %v560
    %v643 = vpop.permute.xlu0 %642
    %646 = vset.pattern.permute.xlu0 0
    %647 = vperm.xlu0 %646, %v561
    %v648 = vpop.permute.xlu0 %647
    %651 = vset.pattern.permute.xlu0 0
    %652 = vperm.xlu0 %651, %v562
    %v653 = vpop.permute.xlu0 %652
    %656 = vset.pattern.permute.xlu0 0
    %657 = vperm.xlu0 %656, %v563
    %v658 = vpop.permute.xlu0 %657
    %v660 = vmul.f32 %v583, %v103
    %v661 = vmul.f32 %v588, %v103
    %v662 = vmul.f32 %v593, %v103
    %v663 = vmul.f32 %v598, %v103
    %v664 = vmul.f32 %v603, %v103
    %v665 = vmul.f32 %v608, %v103
    %v666 = vmul.f32 %v613, %v103
    %v667 = vmul.f32 %v618, %v103
    %v668 = vmul.f32 %v623, %v103
    %v669 = vmul.f32 %v628, %v103
    %v670 = vmul.f32 %v633, %v103
    %v671 = vmul.f32 %v638, %v103
    %v672 = vmul.f32 %v643, %v103
    %v673 = vmul.f32 %v648, %v103
    %v674 = vmul.f32 %v653, %v103
    %v675 = vmul.f32 %v658, %v103
    %vm676 = vcmp.eq.s32.totalorder %v100, 1
    %v677 = vsel %vm676, 1, 0
    %v678 = vcvt.s32.f32 %v677
    %680 = vset.pattern.permute.xlu0 0
    %681 = vperm.xlu0 %680, %v564
    %v682 = vpop.permute.xlu0 %681
    %685 = vset.pattern.permute.xlu0 0
    %686 = vperm.xlu0 %685, %v565
    %v687 = vpop.permute.xlu0 %686
    %690 = vset.pattern.permute.xlu0 0
    %691 = vperm.xlu0 %690, %v566
    %v692 = vpop.permute.xlu0 %691
    %695 = vset.pattern.permute.xlu0 0
    %696 = vperm.xlu0 %695, %v567
    %v697 = vpop.permute.xlu0 %696
    %700 = vset.pattern.permute.xlu0 0
    %701 = vperm.xlu0 %700, %v568
    %v702 = vpop.permute.xlu0 %701
    %705 = vset.pattern.permute.xlu0 0
    %706 = vperm.xlu0 %705, %v569
    %v707 = vpop.permute.xlu0 %706
    %710 = vset.pattern.permute.xlu0 0
    %711 = vperm.xlu0 %710, %v570
    %v712 = vpop.permute.xlu0 %711
    %715 = vset.pattern.permute.xlu0 0
    %716 = vperm.xlu0 %715, %v571
    %v717 = vpop.permute.xlu0 %716
    %720 = vset.pattern.permute.xlu0 0
    %721 = vperm.xlu0 %720, %v572
    %v722 = vpop.permute.xlu0 %721
    %725 = vset.pattern.permute.xlu0 0
    %726 = vperm.xlu0 %725, %v573
    %v727 = vpop.permute.xlu0 %726
    %730 = vset.pattern.permute.xlu0 0
    %731 = vperm.xlu0 %730, %v574
    %v732 = vpop.permute.xlu0 %731
    %735 = vset.pattern.permute.xlu0 0
    %736 = vperm.xlu0 %735, %v575
    %v737 = vpop.permute.xlu0 %736
    %740 = vset.pattern.permute.xlu0 0
    %741 = vperm.xlu0 %740, %v576
    %v742 = vpop.permute.xlu0 %741
    %745 = vset.pattern.permute.xlu0 0
    %746 = vperm.xlu0 %745, %v577
    %v747 = vpop.permute.xlu0 %746
    %750 = vset.pattern.permute.xlu0 0
    %751 = vperm.xlu0 %750, %v578
    %v752 = vpop.permute.xlu0 %751
    %755 = vset.pattern.permute.xlu0 0
    %756 = vperm.xlu0 %755, %v579
    %v757 = vpop.permute.xlu0 %756
    %v759 = vmul.f32 %v682, %v678
    %v760 = vmul.f32 %v687, %v678
    %v761 = vmul.f32 %v692, %v678
    %v762 = vmul.f32 %v697, %v678
    %v763 = vmul.f32 %v702, %v678
    %v764 = vmul.f32 %v707, %v678
    %v765 = vmul.f32 %v712, %v678
    %v766 = vmul.f32 %v717, %v678
    %v767 = vmul.f32 %v722, %v678
    %v768 = vmul.f32 %v727, %v678
    %v769 = vmul.f32 %v732, %v678
    %v770 = vmul.f32 %v737, %v678
    %v771 = vmul.f32 %v742, %v678
    %v772 = vmul.f32 %v747, %v678
    %v773 = vmul.f32 %v752, %v678
    %v774 = vmul.f32 %v757, %v678
    %v775 = vadd.f32 %v660, %v759
    %v776 = vadd.f32 %v661, %v760
    %v777 = vadd.f32 %v662, %v761
    %v778 = vadd.f32 %v663, %v762
    %v779 = vadd.f32 %v664, %v763
    %v780 = vadd.f32 %v665, %v764
    %v781 = vadd.f32 %v666, %v765
    %v782 = vadd.f32 %v667, %v766
    %v783 = vadd.f32 %v668, %v767
    %v784 = vadd.f32 %v669, %v768
    %v785 = vadd.f32 %v670, %v769
    %v786 = vadd.f32 %v671, %v770
    %v787 = vadd.f32 %v672, %v771
    %v788 = vadd.f32 %v673, %v772
    %v789 = vadd.f32 %v674, %v773
    %v790 = vadd.f32 %v675, %v774
    %vm791 = vcmp.eq.s32.totalorder %v100, 2
    %v792 = vsel %vm791, 1, 0
    %v793 = vcvt.s32.f32 %v792
    %v794 = vadd.f32 %v775, %v793
    %v795 = vadd.f32 %v776, %v793
    %v796 = vadd.f32 %v777, %v793
    %v797 = vadd.f32 %v778, %v793
    %v798 = vadd.f32 %v779, %v793
    %v799 = vadd.f32 %v780, %v793
    %v800 = vadd.f32 %v781, %v793
    %v801 = vadd.f32 %v782, %v793
    %v802 = vadd.f32 %v783, %v793
    %v803 = vadd.f32 %v784, %v793
    %v804 = vadd.f32 %v785, %v793
    %v805 = vadd.f32 %v786, %v793
    %v806 = vadd.f32 %v787, %v793
    %v807 = vadd.f32 %v788, %v793
    %v808 = vadd.f32 %v789, %v793
    %v809 = vadd.f32 %v790, %v793
    %v810 = vpack.c.bf16 %v795, %v794
    %v811 = vpack.c.bf16 %v797, %v796
    %v812 = vpack.c.bf16 %v799, %v798
    %v813 = vpack.c.bf16 %v801, %v800
    %v814 = vpack.c.bf16 %v803, %v802
    %v815 = vpack.c.bf16 %v805, %v804
    %v816 = vpack.c.bf16 %v807, %v806
    %v817 = vpack.c.bf16 %v809, %v808
    %818 = vmatprep.subr.bf16.mxu0 0
    %819 = vmatpush1.bf16.msra.mxu0 %v810
    %820 = vmatprep.subr.bf16.mxu0 0
    %821 = vmatpush1.bf16.msra.mxu0 %v811
    %822 = vmatprep.subr.bf16.mxu0 0
    %823 = vmatpush1.bf16.msra.mxu0 %v812
    %824 = vmatprep.subr.bf16.mxu0 0
    %825 = vmatpush1.bf16.msra.mxu0 %v813
    %826 = vmatprep.subr.bf16.mxu0 0
    %827 = vmatpush1.bf16.msra.mxu0 %v814
    %828 = vmatprep.subr.bf16.mxu0 0
    %829 = vmatpush1.bf16.msra.mxu0 %v815
    %830 = vmatprep.subr.bf16.mxu0 0
    %831 = vmatpush1.bf16.msra.mxu0 %v816
    %832 = vmatprep.subr.bf16.mxu0 0
    %833 = vmatpush1.bf16.msra.mxu0 %v817
    %834 = vmatprep.subr.bf16.mxu0 0
    %835 = vmatpush1.bf16.msra.mxu0 0
    %836 = vmatprep.subr.bf16.mxu0 0
    %837 = vmatpush1.bf16.msra.mxu0 0
    %838 = vmatprep.subr.bf16.mxu0 0
    %839 = vmatpush1.bf16.msra.mxu0 0
    %840 = vmatprep.subr.bf16.mxu0 0
    %841 = vmatpush1.bf16.msra.mxu0 0
    %842 = vmatprep.subr.bf16.mxu0 0
    %843 = vmatpush1.bf16.msra.mxu0 0
    %844 = vmatprep.subr.bf16.mxu0 0
    %845 = vmatpush1.bf16.msra.mxu0 0
    %846 = vmatprep.subr.bf16.mxu0 0
    %847 = vmatpush1.bf16.msra.mxu0 0
    %848 = vmatprep.subr.bf16.mxu0 0
    %849 = vmatpush1.bf16.msra.mxu0 0
    %850 = vmatprep.mubr.bf16.mxu0 0
    %851 = vmatmul.mubr.bf16.gmra.mrb[0].mxu0 %v532
    %v852 = vpop.f32.mrb[0].mxu0
    %v853 = vadd.f32 0.0, %v852
    %v854 = vpop.f32.mrb[0].mxu0
    %v855 = vpop.f32.mrb[0].mxu0
    %v856 = vadd.f32 0.0, %v855
    %v857 = vpop.f32.mrb[0].mxu0
    %858 = vmatprep.mubr.bf16.mxu0 0
    %859 = vmatmul.mubr.bf16.gmra.mrb[0].mxu0 %v533
    %v860 = vpop.f32.mrb[0].mxu0
    %v861 = vadd.f32 0.0, %v860
    %v862 = vpop.f32.mrb[0].mxu0
    %v863 = vpop.f32.mrb[0].mxu0
    %v864 = vadd.f32 0.0, %v863
    %v865 = vpop.f32.mrb[0].mxu0
    %866 = vmatprep.mubr.bf16.mxu0 0
    %867 = vmatmul.mubr.bf16.gmra.mrb[0].mxu0 %v534
    %v868 = vpop.f32.mrb[0].mxu0
    %v869 = vadd.f32 0.0, %v868
    %v870 = vpop.f32.mrb[0].mxu0
    %v871 = vpop.f32.mrb[0].mxu0
    %v872 = vadd.f32 0.0, %v871
    %v873 = vpop.f32.mrb[0].mxu0
    %874 = vmatprep.mubr.bf16.mxu0 0
    %875 = vmatmul.mubr.bf16.gmra.mrb[0].mxu0 %v535
    %v876 = vpop.f32.mrb[0].mxu0
    %v877 = vadd.f32 0.0, %v876
    %v878 = vpop.f32.mrb[0].mxu0
    %v879 = vpop.f32.mrb[0].mxu0
    %v880 = vadd.f32 0.0, %v879
    %v881 = vpop.f32.mrb[0].mxu0
    %882 = vmatprep.mubr.bf16.mxu0 0
    %883 = vmatmul.mubr.bf16.gmra.mrb[0].mxu0 %v536
    %v884 = vpop.f32.mrb[0].mxu0
    %v885 = vadd.f32 0.0, %v884
    %v886 = vpop.f32.mrb[0].mxu0
    %v887 = vpop.f32.mrb[0].mxu0
    %v888 = vadd.f32 0.0, %v887
    %v889 = vpop.f32.mrb[0].mxu0
    %890 = vmatprep.mubr.bf16.mxu0 0
    %891 = vmatmul.mubr.bf16.gmra.mrb[0].mxu0 %v537
    %v892 = vpop.f32.mrb[0].mxu0
    %v893 = vadd.f32 0.0, %v892
    %v894 = vpop.f32.mrb[0].mxu0
    %v895 = vpop.f32.mrb[0].mxu0
    %v896 = vadd.f32 0.0, %v895
    %v897 = vpop.f32.mrb[0].mxu0
    %898 = vmatprep.mubr.bf16.mxu0 0
    %899 = vmatmul.mubr.bf16.gmra.mrb[0].mxu0 %v538
    %v900 = vpop.f32.mrb[0].mxu0
    %v901 = vadd.f32 0.0, %v900
    %v902 = vpop.f32.mrb[0].mxu0
    %v903 = vpop.f32.mrb[0].mxu0
    %v904 = vadd.f32 0.0, %v903
    %v905 = vpop.f32.mrb[0].mxu0
    %906 = vmatprep.mubr.bf16.mxu0 0
    %907 = vmatmul.mubr.bf16.gmra.mrb[0].mxu0 %v539
    %v908 = vpop.f32.mrb[0].mxu0
    %v909 = vadd.f32 0.0, %v908
    %v910 = vpop.f32.mrb[0].mxu0
    %v911 = vpop.f32.mrb[0].mxu0
    %v912 = vadd.f32 0.0, %v911
    %v913 = vpop.f32.mrb[0].mxu0
    %914 = vdwg.mxu0
    %931 = vrot.lane.b32.xlu0 %v853, 127
    %v932 = vpop.permute.xlu0 %931
    %933 = vrot.lane.b32.xlu0 %v856, 127
    %v934 = vpop.permute.xlu0 %933
    %935 = vrot.lane.b32.xlu0 %v861, 127
    %v936 = vpop.permute.xlu0 %935
    %937 = vrot.lane.b32.xlu0 %v864, 127
    %v938 = vpop.permute.xlu0 %937
    %939 = vrot.lane.b32.xlu0 %v869, 127
    %v940 = vpop.permute.xlu0 %939
    %941 = vrot.lane.b32.xlu0 %v872, 127
    %v942 = vpop.permute.xlu0 %941
    %943 = vrot.lane.b32.xlu0 %v877, 127
    %v944 = vpop.permute.xlu0 %943
    %945 = vrot.lane.b32.xlu0 %v880, 127
    %v946 = vpop.permute.xlu0 %945
    %947 = vrot.lane.b32.xlu0 %v885, 127
    %v948 = vpop.permute.xlu0 %947
    %949 = vrot.lane.b32.xlu0 %v888, 127
    %v950 = vpop.permute.xlu0 %949
    %951 = vrot.lane.b32.xlu0 %v893, 127
    %v952 = vpop.permute.xlu0 %951
    %953 = vrot.lane.b32.xlu0 %v896, 127
    %v954 = vpop.permute.xlu0 %953
    %955 = vrot.lane.b32.xlu0 %v901, 127
    %v956 = vpop.permute.xlu0 %955
    %957 = vrot.lane.b32.xlu0 %v904, 127
    %v958 = vpop.permute.xlu0 %957
    %959 = vrot.lane.b32.xlu0 %v909, 127
    %v960 = vpop.permute.xlu0 %959
    %961 = vrot.lane.b32.xlu0 %v912, 127
    %v962 = vpop.permute.xlu0 %961
    %v979 = vadd.f32 %v853, %v932
    %v980 = vadd.f32 %v856, %v934
    %v981 = vadd.f32 %v861, %v936
    %v982 = vadd.f32 %v864, %v938
    %v983 = vadd.f32 %v869, %v940
    %v984 = vadd.f32 %v872, %v942
    %v985 = vadd.f32 %v877, %v944
    %v986 = vadd.f32 %v880, %v946
    %v987 = vadd.f32 %v885, %v948
    %v988 = vadd.f32 %v888, %v950
    %v989 = vadd.f32 %v893, %v952
    %v990 = vadd.f32 %v896, %v954
    %v991 = vadd.f32 %v901, %v956
    %v992 = vadd.f32 %v904, %v958
    %v993 = vadd.f32 %v909, %v960
    %v994 = vadd.f32 %v912, %v962
    %v995 = vmul.f32 %v445, 2.0
    %v996 = vmul.f32 %v447, 2.0
    %v997 = vmul.f32 %v449, 2.0
    %v998 = vmul.f32 %v451, 2.0
    %v999 = vmul.f32 %v453, 2.0
    %v1000 = vmul.f32 %v455, 2.0
    %v1001 = vmul.f32 %v457, 2.0
    %v1002 = vmul.f32 %v459, 2.0
    %v1003 = vmul.f32 %v461, 2.0
    %v1004 = vmul.f32 %v463, 2.0
    %v1005 = vmul.f32 %v465, 2.0
    %v1006 = vmul.f32 %v467, 2.0
    %v1007 = vmul.f32 %v469, 2.0
    %v1008 = vmul.f32 %v471, 2.0
    %v1009 = vmul.f32 %v473, 2.0
    %v1010 = vmul.f32 %v475, 2.0
    %v1011 = vsub.f32 %v979, %v995
    %v1012 = vsub.f32 %v980, %v996
    %v1013 = vsub.f32 %v981, %v997
    %v1014 = vsub.f32 %v982, %v998
    %v1015 = vsub.f32 %v983, %v999
    %v1016 = vsub.f32 %v984, %v1000
    %v1017 = vsub.f32 %v985, %v1001
    %v1018 = vsub.f32 %v986, %v1002
    %v1019 = vsub.f32 %v987, %v1003
    %v1020 = vsub.f32 %v988, %v1004
    %v1021 = vsub.f32 %v989, %v1005
    %v1022 = vsub.f32 %v990, %v1006
    %v1023 = vsub.f32 %v991, %v1007
    %v1024 = vsub.f32 %v992, %v1008
    %v1025 = vsub.f32 %v993, %v1009
    %v1026 = vsub.f32 %v994, %v1010
    %1043 = vrot.lane.b32.xlu0 %v140, 2
    %v1044 = vpop.permute.xlu0 %1043
    %1045 = vrot.lane.b32.xlu0 %v143, 2
    %v1046 = vpop.permute.xlu0 %1045
    %1047 = vrot.lane.b32.xlu0 %v148, 2
    %v1048 = vpop.permute.xlu0 %1047
    %1049 = vrot.lane.b32.xlu0 %v151, 2
    %v1050 = vpop.permute.xlu0 %1049
    %1051 = vrot.lane.b32.xlu0 %v156, 2
    %v1052 = vpop.permute.xlu0 %1051
    %1053 = vrot.lane.b32.xlu0 %v159, 2
    %v1054 = vpop.permute.xlu0 %1053
    %1055 = vrot.lane.b32.xlu0 %v164, 2
    %v1056 = vpop.permute.xlu0 %1055
    %1057 = vrot.lane.b32.xlu0 %v167, 2
    %v1058 = vpop.permute.xlu0 %1057
    %1059 = vrot.lane.b32.xlu0 %v172, 2
    %v1060 = vpop.permute.xlu0 %1059
    %1061 = vrot.lane.b32.xlu0 %v175, 2
    %v1062 = vpop.permute.xlu0 %1061
    %1063 = vrot.lane.b32.xlu0 %v180, 2
    %v1064 = vpop.permute.xlu0 %1063
    %1065 = vrot.lane.b32.xlu0 %v183, 2
    %v1066 = vpop.permute.xlu0 %1065
    %1067 = vrot.lane.b32.xlu0 %v188, 2
    %v1068 = vpop.permute.xlu0 %1067
    %1069 = vrot.lane.b32.xlu0 %v191, 2
    %v1070 = vpop.permute.xlu0 %1069
    %1071 = vrot.lane.b32.xlu0 %v196, 2
    %v1072 = vpop.permute.xlu0 %1071
    %1073 = vrot.lane.b32.xlu0 %v199, 2
    %v1074 = vpop.permute.xlu0 %1073
    %v1091 = vsub.f32 %v853, %v1044
    %v1092 = vsub.f32 %v856, %v1046
    %v1093 = vsub.f32 %v861, %v1048
    %v1094 = vsub.f32 %v864, %v1050
    %v1095 = vsub.f32 %v869, %v1052
    %v1096 = vsub.f32 %v872, %v1054
    %v1097 = vsub.f32 %v877, %v1056
    %v1098 = vsub.f32 %v880, %v1058
    %v1099 = vsub.f32 %v885, %v1060
    %v1100 = vsub.f32 %v888, %v1062
    %v1101 = vsub.f32 %v893, %v1064
    %v1102 = vsub.f32 %v896, %v1066
    %v1103 = vsub.f32 %v901, %v1068
    %v1104 = vsub.f32 %v904, %v1070
    %v1105 = vsub.f32 %v909, %v1072
    %v1106 = vsub.f32 %v912, %v1074
    %v1107 = vsub.f32 %v1091, 1.0
    %v1108 = vsub.f32 %v1092, 1.0
    %v1109 = vsub.f32 %v1093, 1.0
    %v1110 = vsub.f32 %v1094, 1.0
    %v1111 = vsub.f32 %v1095, 1.0
    %v1112 = vsub.f32 %v1096, 1.0
    %v1113 = vsub.f32 %v1097, 1.0
    %v1114 = vsub.f32 %v1098, 1.0
    %v1115 = vsub.f32 %v1099, 1.0
    %v1116 = vsub.f32 %v1100, 1.0
    %v1117 = vsub.f32 %v1101, 1.0
    %v1118 = vsub.f32 %v1102, 1.0
    %v1119 = vsub.f32 %v1103, 1.0
    %v1120 = vsub.f32 %v1104, 1.0
    %v1121 = vsub.f32 %v1105, 1.0
    %v1122 = vsub.f32 %v1106, 1.0
    %v1123 = vsub.f32 %v140, 1.0
    %v1124 = vsub.f32 %v143, 1.0
    %v1125 = vsub.f32 %v148, 1.0
    %v1126 = vsub.f32 %v151, 1.0
    %v1127 = vsub.f32 %v156, 1.0
    %v1128 = vsub.f32 %v159, 1.0
    %v1129 = vsub.f32 %v164, 1.0
    %v1130 = vsub.f32 %v167, 1.0
    %v1131 = vsub.f32 %v172, 1.0
    %v1132 = vsub.f32 %v175, 1.0
    %v1133 = vsub.f32 %v180, 1.0
    %v1134 = vsub.f32 %v183, 1.0
    %v1135 = vsub.f32 %v188, 1.0
    %v1136 = vsub.f32 %v191, 1.0
    %v1137 = vsub.f32 %v196, 1.0
    %v1138 = vsub.f32 %v199, 1.0
    %v1139 = vmul.f32 %v140, %v1123
    %v1140 = vmul.f32 %v143, %v1124
    %v1141 = vmul.f32 %v148, %v1125
    %v1142 = vmul.f32 %v151, %v1126
    %v1143 = vmul.f32 %v156, %v1127
    %v1144 = vmul.f32 %v159, %v1128
    %v1145 = vmul.f32 %v164, %v1129
    %v1146 = vmul.f32 %v167, %v1130
    %v1147 = vmul.f32 %v172, %v1131
    %v1148 = vmul.f32 %v175, %v1132
    %v1149 = vmul.f32 %v180, %v1133
    %v1150 = vmul.f32 %v183, %v1134
    %v1151 = vmul.f32 %v188, %v1135
    %v1152 = vmul.f32 %v191, %v1136
    %v1153 = vmul.f32 %v196, %v1137
    %v1154 = vmul.f32 %v199, %v1138
    %vm1155 = vcmp.gt.f32.partialorder %v140, 1.0
    %vm1156 = vcmp.gt.f32.partialorder %v143, 1.0
    %vm1157 = vcmp.gt.f32.partialorder %v148, 1.0
    %vm1158 = vcmp.gt.f32.partialorder %v151, 1.0
    %vm1159 = vcmp.gt.f32.partialorder %v156, 1.0
    %vm1160 = vcmp.gt.f32.partialorder %v159, 1.0
    %vm1161 = vcmp.gt.f32.partialorder %v164, 1.0
    %vm1162 = vcmp.gt.f32.partialorder %v167, 1.0
    %vm1163 = vcmp.gt.f32.partialorder %v172, 1.0
    %vm1164 = vcmp.gt.f32.partialorder %v175, 1.0
    %vm1165 = vcmp.gt.f32.partialorder %v180, 1.0
    %vm1166 = vcmp.gt.f32.partialorder %v183, 1.0
    %vm1167 = vcmp.gt.f32.partialorder %v188, 1.0
    %vm1168 = vcmp.gt.f32.partialorder %v191, 1.0
    %vm1169 = vcmp.gt.f32.partialorder %v196, 1.0
    %vm1170 = vcmp.gt.f32.partialorder %v199, 1.0
    %v1171 = vsub.f32 %v445, %v140
    %v1172 = vsub.f32 %v447, %v143
    %v1173 = vsub.f32 %v449, %v148
    %v1174 = vsub.f32 %v451, %v151
    %v1175 = vsub.f32 %v453, %v156
    %v1176 = vsub.f32 %v455, %v159
    %v1177 = vsub.f32 %v457, %v164
    %v1178 = vsub.f32 %v459, %v167
    %v1179 = vsub.f32 %v461, %v172
    %v1180 = vsub.f32 %v463, %v175
    %v1181 = vsub.f32 %v465, %v180
    %v1182 = vsub.f32 %v467, %v183
    %v1183 = vsub.f32 %v469, %v188
    %v1184 = vsub.f32 %v471, %v191
    %v1185 = vsub.f32 %v473, %v196
    %v1186 = vsub.f32 %v475, %v199
    %vm1187 = vcmp.ne.f32.partialorder %v1139, 0.0
    %vm1188 = vcmp.ne.f32.partialorder %v1140, 0.0
    %vm1189 = vcmp.ne.f32.partialorder %v1141, 0.0
    %vm1190 = vcmp.ne.f32.partialorder %v1142, 0.0
    %vm1191 = vcmp.ne.f32.partialorder %v1143, 0.0
    %vm1192 = vcmp.ne.f32.partialorder %v1144, 0.0
    %vm1193 = vcmp.ne.f32.partialorder %v1145, 0.0
    %vm1194 = vcmp.ne.f32.partialorder %v1146, 0.0
    %vm1195 = vcmp.ne.f32.partialorder %v1147, 0.0
    %vm1196 = vcmp.ne.f32.partialorder %v1148, 0.0
    %vm1197 = vcmp.ne.f32.partialorder %v1149, 0.0
    %vm1198 = vcmp.ne.f32.partialorder %v1150, 0.0
    %vm1199 = vcmp.ne.f32.partialorder %v1151, 0.0
    %vm1200 = vcmp.ne.f32.partialorder %v1152, 0.0
    %vm1201 = vcmp.ne.f32.partialorder %v1153, 0.0
    %vm1202 = vcmp.ne.f32.partialorder %v1154, 0.0
    %v1203 = vsel %vm1187, %v1139, 1.0
    %v1204 = vsel %vm1188, %v1140, 1.0
    %v1205 = vsel %vm1189, %v1141, 1.0
    %v1206 = vsel %vm1190, %v1142, 1.0
    %v1207 = vsel %vm1191, %v1143, 1.0
    %v1208 = vsel %vm1192, %v1144, 1.0
    %v1209 = vsel %vm1193, %v1145, 1.0
    %v1210 = vsel %vm1194, %v1146, 1.0
    %v1211 = vsel %vm1195, %v1147, 1.0
    %v1212 = vsel %vm1196, %v1148, 1.0
    %v1213 = vsel %vm1197, %v1149, 1.0
    %v1214 = vsel %vm1198, %v1150, 1.0
    %v1215 = vsel %vm1199, %v1151, 1.0
    %v1216 = vsel %vm1200, %v1152, 1.0
    %v1217 = vsel %vm1201, %v1153, 1.0
    %v1218 = vsel %vm1202, %v1154, 1.0
    %v1219 = vrcp.pop %v1203
    %v1220 = vmul.f32 %v1171, %v1219
    %v1221 = vrcp.pop %v1204
    %v1222 = vmul.f32 %v1172, %v1221
    %v1223 = vrcp.pop %v1205
    %v1224 = vmul.f32 %v1173, %v1223
    %v1225 = vrcp.pop %v1206
    %v1226 = vmul.f32 %v1174, %v1225
    %v1227 = vrcp.pop %v1207
    %v1228 = vmul.f32 %v1175, %v1227
    %v1229 = vrcp.pop %v1208
    %v1230 = vmul.f32 %v1176, %v1229
    %v1231 = vrcp.pop %v1209
    %v1232 = vmul.f32 %v1177, %v1231
    %v1233 = vrcp.pop %v1210
    %v1234 = vmul.f32 %v1178, %v1233
    %v1235 = vrcp.pop %v1211
    %v1236 = vmul.f32 %v1179, %v1235
    %v1237 = vrcp.pop %v1212
    %v1238 = vmul.f32 %v1180, %v1237
    %v1239 = vrcp.pop %v1213
    %v1240 = vmul.f32 %v1181, %v1239
    %v1241 = vrcp.pop %v1214
    %v1242 = vmul.f32 %v1182, %v1241
    %v1243 = vrcp.pop %v1215
    %v1244 = vmul.f32 %v1183, %v1243
    %v1245 = vrcp.pop %v1216
    %v1246 = vmul.f32 %v1184, %v1245
    %v1247 = vrcp.pop %v1217
    %v1248 = vmul.f32 %v1185, %v1247
    %v1249 = vrcp.pop %v1218
    %v1250 = vmul.f32 %v1186, %v1249
    %v1251 = vsel %vm1155, %v1220, 0.0
    %v1252 = vsel %vm1156, %v1222, 0.0
    %v1253 = vsel %vm1157, %v1224, 0.0
    %v1254 = vsel %vm1158, %v1226, 0.0
    %v1255 = vsel %vm1159, %v1228, 0.0
    %v1256 = vsel %vm1160, %v1230, 0.0
    %v1257 = vsel %vm1161, %v1232, 0.0
    %v1258 = vsel %vm1162, %v1234, 0.0
    %v1259 = vsel %vm1163, %v1236, 0.0
    %v1260 = vsel %vm1164, %v1238, 0.0
    %v1261 = vsel %vm1165, %v1240, 0.0
    %v1262 = vsel %vm1166, %v1242, 0.0
    %v1263 = vsel %vm1167, %v1244, 0.0
    %v1264 = vsel %vm1168, %v1246, 0.0
    %v1265 = vsel %vm1169, %v1248, 0.0
    %v1266 = vsel %vm1170, %v1250, 0.0
    %s1267 = sld [smem:[#allocation3]]
    %p1268 = scmp.gt.s32.totalorder %s1267, 0
    %s1269 = scalar_select %p1268, 2.0, 1.0
    %v1270 = vstv %s1269
    %v1271 = vmul.f32 %v1251, %v1270
    %v1272 = vmul.f32 %v1252, %v1270
    %v1273 = vmul.f32 %v1253, %v1270
    %v1274 = vmul.f32 %v1254, %v1270
    %v1275 = vmul.f32 %v1255, %v1270
    %v1276 = vmul.f32 %v1256, %v1270
    %v1277 = vmul.f32 %v1257, %v1270
    %v1278 = vmul.f32 %v1258, %v1270
    %v1279 = vmul.f32 %v1259, %v1270
    %v1280 = vmul.f32 %v1260, %v1270
    %v1281 = vmul.f32 %v1261, %v1270
    %v1282 = vmul.f32 %v1262, %v1270
    %v1283 = vmul.f32 %v1263, %v1270
    %v1284 = vmul.f32 %v1264, %v1270
    %v1285 = vmul.f32 %v1265, %v1270
    %v1286 = vmul.f32 %v1266, %v1270
    %s1287 = scalar_select %p1268, 0.5, 1.0
    %v1288 = vstv %s1287
    %v1289 = vmul.f32 %v445, %v1288
    %v1290 = vmul.f32 %v447, %v1288
    %v1291 = vmul.f32 %v449, %v1288
    %v1292 = vmul.f32 %v451, %v1288
    %v1293 = vmul.f32 %v453, %v1288
    %v1294 = vmul.f32 %v455, %v1288
    %v1295 = vmul.f32 %v457, %v1288
    %v1296 = vmul.f32 %v459, %v1288
    %v1297 = vmul.f32 %v461, %v1288
    %v1298 = vmul.f32 %v463, %v1288
    %v1299 = vmul.f32 %v465, %v1288
    %v1300 = vmul.f32 %v467, %v1288
    %v1301 = vmul.f32 %v469, %v1288
    %v1302 = vmul.f32 %v471, %v1288
    %v1303 = vmul.f32 %v473, %v1288
    %v1304 = vmul.f32 %v475, %v1288
    %v1305 = vpack.c.bf16 %v1272, %v1271
    %v1306 = vpack.c.bf16 %v1274, %v1273
    %v1307 = vpack.c.bf16 %v1276, %v1275
    %v1308 = vpack.c.bf16 %v1278, %v1277
    %v1309 = vpack.c.bf16 %v1280, %v1279
    %v1310 = vpack.c.bf16 %v1282, %v1281
    %v1311 = vpack.c.bf16 %v1284, %v1283
    %v1312 = vpack.c.bf16 %v1286, %v1285
    %v1313 = vunpack.c.l.bf16 %v1305
    %v1314 = vunpack.c.h.bf16 %v1305
    %v1315 = vunpack.c.l.bf16 %v1306
    %v1316 = vunpack.c.h.bf16 %v1306
    %v1317 = vunpack.c.l.bf16 %v1307
    %v1318 = vunpack.c.h.bf16 %v1307
    %v1319 = vunpack.c.l.bf16 %v1308
    %v1320 = vunpack.c.h.bf16 %v1308
    %v1321 = vunpack.c.l.bf16 %v1309
    %v1322 = vunpack.c.h.bf16 %v1309
    %v1323 = vunpack.c.l.bf16 %v1310
    %v1324 = vunpack.c.h.bf16 %v1310
    %v1325 = vunpack.c.l.bf16 %v1311
    %v1326 = vunpack.c.h.bf16 %v1311
    %v1327 = vunpack.c.l.bf16 %v1312
    %v1328 = vunpack.c.h.bf16 %v1312
    %v1329 = vsub.f32 %v1271, %v1313
    %v1330 = vsub.f32 %v1272, %v1314
    %v1331 = vsub.f32 %v1273, %v1315
    %v1332 = vsub.f32 %v1274, %v1316
    %v1333 = vsub.f32 %v1275, %v1317
    %v1334 = vsub.f32 %v1276, %v1318
    %v1335 = vsub.f32 %v1277, %v1319
    %v1336 = vsub.f32 %v1278, %v1320
    %v1337 = vsub.f32 %v1279, %v1321
    %v1338 = vsub.f32 %v1280, %v1322
    %v1339 = vsub.f32 %v1281, %v1323
    %v1340 = vsub.f32 %v1282, %v1324
    %v1341 = vsub.f32 %v1283, %v1325
    %v1342 = vsub.f32 %v1284, %v1326
    %v1343 = vsub.f32 %v1285, %v1327
    %v1344 = vsub.f32 %v1286, %v1328
    %1346 = vset.pattern.permute.xlu0 0
    %1347 = vperm.xlu0 %1346, %v1313
    %v1348 = vpop.permute.xlu0 %1347
    %1351 = vset.pattern.permute.xlu0 0
    %1352 = vperm.xlu0 %1351, %v1314
    %v1353 = vpop.permute.xlu0 %1352
    %1356 = vset.pattern.permute.xlu0 0
    %1357 = vperm.xlu0 %1356, %v1315
    %v1358 = vpop.permute.xlu0 %1357
    %1361 = vset.pattern.permute.xlu0 0
    %1362 = vperm.xlu0 %1361, %v1316
    %v1363 = vpop.permute.xlu0 %1362
    %1366 = vset.pattern.permute.xlu0 0
    %1367 = vperm.xlu0 %1366, %v1317
    %v1368 = vpop.permute.xlu0 %1367
    %1371 = vset.pattern.permute.xlu0 0
    %1372 = vperm.xlu0 %1371, %v1318
    %v1373 = vpop.permute.xlu0 %1372
    %1376 = vset.pattern.permute.xlu0 0
    %1377 = vperm.xlu0 %1376, %v1319
    %v1378 = vpop.permute.xlu0 %1377
    %1381 = vset.pattern.permute.xlu0 0
    %1382 = vperm.xlu0 %1381, %v1320
    %v1383 = vpop.permute.xlu0 %1382
    %1386 = vset.pattern.permute.xlu0 0
    %1387 = vperm.xlu0 %1386, %v1321
    %v1388 = vpop.permute.xlu0 %1387
    %1391 = vset.pattern.permute.xlu0 0
    %1392 = vperm.xlu0 %1391, %v1322
    %v1393 = vpop.permute.xlu0 %1392
    %1396 = vset.pattern.permute.xlu0 0
    %1397 = vperm.xlu0 %1396, %v1323
    %v1398 = vpop.permute.xlu0 %1397
    %1401 = vset.pattern.permute.xlu0 0
    %1402 = vperm.xlu0 %1401, %v1324
    %v1403 = vpop.permute.xlu0 %1402
    %1406 = vset.pattern.permute.xlu0 0
    %1407 = vperm.xlu0 %1406, %v1325
    %v1408 = vpop.permute.xlu0 %1407
    %1411 = vset.pattern.permute.xlu0 0
    %1412 = vperm.xlu0 %1411, %v1326
    %v1413 = vpop.permute.xlu0 %1412
    %1416 = vset.pattern.permute.xlu0 0
    %1417 = vperm.xlu0 %1416, %v1327
    %v1418 = vpop.permute.xlu0 %1417
    %1421 = vset.pattern.permute.xlu0 0
    %1422 = vperm.xlu0 %1421, %v1328
    %v1423 = vpop.permute.xlu0 %1422
    %v1425 = vmul.f32 %v1348, %v793
    %v1426 = vmul.f32 %v1353, %v793
    %v1427 = vmul.f32 %v1358, %v793
    %v1428 = vmul.f32 %v1363, %v793
    %v1429 = vmul.f32 %v1368, %v793
    %v1430 = vmul.f32 %v1373, %v793
    %v1431 = vmul.f32 %v1378, %v793
    %v1432 = vmul.f32 %v1383, %v793
    %v1433 = vmul.f32 %v1388, %v793
    %v1434 = vmul.f32 %v1393, %v793
    %v1435 = vmul.f32 %v1398, %v793
    %v1436 = vmul.f32 %v1403, %v793
    %v1437 = vmul.f32 %v1408, %v793
    %v1438 = vmul.f32 %v1413, %v793
    %v1439 = vmul.f32 %v1418, %v793
    %v1440 = vmul.f32 %v1423, %v793
    %v1441 = vadd.f32 %v775, %v1425
    %v1442 = vadd.f32 %v776, %v1426
    %v1443 = vadd.f32 %v777, %v1427
    %v1444 = vadd.f32 %v778, %v1428
    %v1445 = vadd.f32 %v779, %v1429
    %v1446 = vadd.f32 %v780, %v1430
    %v1447 = vadd.f32 %v781, %v1431
    %v1448 = vadd.f32 %v782, %v1432
    %v1449 = vadd.f32 %v783, %v1433
    %v1450 = vadd.f32 %v784, %v1434
    %v1451 = vadd.f32 %v785, %v1435
    %v1452 = vadd.f32 %v786, %v1436
    %v1453 = vadd.f32 %v787, %v1437
    %v1454 = vadd.f32 %v788, %v1438
    %v1455 = vadd.f32 %v789, %v1439
    %v1456 = vadd.f32 %v790, %v1440
    %vm1457 = vcmp.eq.s32.totalorder %v100, 3
    %v1458 = vsel %vm1457, 1, 0
    %v1459 = vcvt.s32.f32 %v1458
    %1461 = vset.pattern.permute.xlu0 0
    %1462 = vperm.xlu0 %1461, %v1329
    %v1463 = vpop.permute.xlu0 %1462
    %1466 = vset.pattern.permute.xlu0 0
    %1467 = vperm.xlu0 %1466, %v1330
    %v1468 = vpop.permute.xlu0 %1467
    %1471 = vset.pattern.permute.xlu0 0
    %1472 = vperm.xlu0 %1471, %v1331
    %v1473 = vpop.permute.xlu0 %1472
    %1476 = vset.pattern.permute.xlu0 0
    %1477 = vperm.xlu0 %1476, %v1332
    %v1478 = vpop.permute.xlu0 %1477
    %1481 = vset.pattern.permute.xlu0 0
    %1482 = vperm.xlu0 %1481, %v1333
    %v1483 = vpop.permute.xlu0 %1482
    %1486 = vset.pattern.permute.xlu0 0
    %1487 = vperm.xlu0 %1486, %v1334
    %v1488 = vpop.permute.xlu0 %1487
    %1491 = vset.pattern.permute.xlu0 0
    %1492 = vperm.xlu0 %1491, %v1335
    %v1493 = vpop.permute.xlu0 %1492
    %1496 = vset.pattern.permute.xlu0 0
    %1497 = vperm.xlu0 %1496, %v1336
    %v1498 = vpop.permute.xlu0 %1497
    %1501 = vset.pattern.permute.xlu0 0
    %1502 = vperm.xlu0 %1501, %v1337
    %v1503 = vpop.permute.xlu0 %1502
    %1506 = vset.pattern.permute.xlu0 0
    %1507 = vperm.xlu0 %1506, %v1338
    %v1508 = vpop.permute.xlu0 %1507
    %1511 = vset.pattern.permute.xlu0 0
    %1512 = vperm.xlu0 %1511, %v1339
    %v1513 = vpop.permute.xlu0 %1512
    %1516 = vset.pattern.permute.xlu0 0
    %1517 = vperm.xlu0 %1516, %v1340
    %v1518 = vpop.permute.xlu0 %1517
    %1521 = vset.pattern.permute.xlu0 0
    %1522 = vperm.xlu0 %1521, %v1341
    %v1523 = vpop.permute.xlu0 %1522
    %1526 = vset.pattern.permute.xlu0 0
    %1527 = vperm.xlu0 %1526, %v1342
    %v1528 = vpop.permute.xlu0 %1527
    %1531 = vset.pattern.permute.xlu0 0
    %1532 = vperm.xlu0 %1531, %v1343
    %v1533 = vpop.permute.xlu0 %1532
    %1536 = vset.pattern.permute.xlu0 0
    %1537 = vperm.xlu0 %1536, %v1344
    %v1538 = vpop.permute.xlu0 %1537
    %v1540 = vmul.f32 %v1463, %v1459
    %v1541 = vmul.f32 %v1468, %v1459
    %v1542 = vmul.f32 %v1473, %v1459
    %v1543 = vmul.f32 %v1478, %v1459
    %v1544 = vmul.f32 %v1483, %v1459
    %v1545 = vmul.f32 %v1488, %v1459
    %v1546 = vmul.f32 %v1493, %v1459
    %v1547 = vmul.f32 %v1498, %v1459
    %v1548 = vmul.f32 %v1503, %v1459
    %v1549 = vmul.f32 %v1508, %v1459
    %v1550 = vmul.f32 %v1513, %v1459
    %v1551 = vmul.f32 %v1518, %v1459
    %v1552 = vmul.f32 %v1523, %v1459
    %v1553 = vmul.f32 %v1528, %v1459
    %v1554 = vmul.f32 %v1533, %v1459
    %v1555 = vmul.f32 %v1538, %v1459
    %v1556 = vadd.f32 %v1441, %v1540
    %v1557 = vadd.f32 %v1442, %v1541
    %v1558 = vadd.f32 %v1443, %v1542
    %v1559 = vadd.f32 %v1444, %v1543
    %v1560 = vadd.f32 %v1445, %v1544
    %v1561 = vadd.f32 %v1446, %v1545
    %v1562 = vadd.f32 %v1447, %v1546
    %v1563 = vadd.f32 %v1448, %v1547
    %v1564 = vadd.f32 %v1449, %v1548
    %v1565 = vadd.f32 %v1450, %v1549
    %v1566 = vadd.f32 %v1451, %v1550
    %v1567 = vadd.f32 %v1452, %v1551
    %v1568 = vadd.f32 %v1453, %v1552
    %v1569 = vadd.f32 %v1454, %v1553
    %v1570 = vadd.f32 %v1455, %v1554
    %v1571 = vadd.f32 %v1456, %v1555
    %v1572 = vpack.c.bf16 %v1557, %v1556
    %v1573 = vpack.c.bf16 %v1559, %v1558
    %v1574 = vpack.c.bf16 %v1561, %v1560
    %v1575 = vpack.c.bf16 %v1563, %v1562
    %v1576 = vpack.c.bf16 %v1565, %v1564
    %v1577 = vpack.c.bf16 %v1567, %v1566
    %v1578 = vpack.c.bf16 %v1569, %v1568
    %v1579 = vpack.c.bf16 %v1571, %v1570
    %1580 = vmatprep.subr.bf16.mxu0 0
    %1581 = vmatpush1.bf16.msra.mxu0 %v1572
    %1582 = vmatprep.subr.bf16.mxu0 0
    %1583 = vmatpush1.bf16.msra.mxu0 %v1573
    %1584 = vmatprep.subr.bf16.mxu0 0
    %1585 = vmatpush1.bf16.msra.mxu0 %v1574
    %1586 = vmatprep.subr.bf16.mxu0 0
    %1587 = vmatpush1.bf16.msra.mxu0 %v1575
    %1588 = vmatprep.subr.bf16.mxu0 0
    %1589 = vmatpush1.bf16.msra.mxu0 %v1576
    %1590 = vmatprep.subr.bf16.mxu0 0
    %1591 = vmatpush1.bf16.msra.mxu0 %v1577
    %1592 = vmatprep.subr.bf16.mxu0 0
    %1593 = vmatpush1.bf16.msra.mxu0 %v1578
    %1594 = vmatprep.subr.bf16.mxu0 0
    %1595 = vmatpush1.bf16.msra.mxu0 %v1579
    %1596 = vmatprep.subr.bf16.mxu0 0
    %1597 = vmatpush1.bf16.msra.mxu0 0
    %1598 = vmatprep.subr.bf16.mxu0 0
    %1599 = vmatpush1.bf16.msra.mxu0 0
    %1600 = vmatprep.subr.bf16.mxu0 0
    %1601 = vmatpush1.bf16.msra.mxu0 0
    %1602 = vmatprep.subr.bf16.mxu0 0
    %1603 = vmatpush1.bf16.msra.mxu0 0
    %1604 = vmatprep.subr.bf16.mxu0 0
    %1605 = vmatpush1.bf16.msra.mxu0 0
    %1606 = vmatprep.subr.bf16.mxu0 0
    %1607 = vmatpush1.bf16.msra.mxu0 0
    %1608 = vmatprep.subr.bf16.mxu0 0
    %1609 = vmatpush1.bf16.msra.mxu0 0
    %1610 = vmatprep.subr.bf16.mxu0 0
    %1611 = vmatpush1.bf16.msra.mxu0 0
    %1612 = vmatprep.mubr.bf16.mxu0 0
    %1613 = vmatmul.mubr.bf16.gmra.mrb[0].mxu0 %v73
    %v1614 = vpop.f32.mrb[0].mxu0
    %v1615 = vadd.f32 0.0, %v1614
    %v1616 = vpop.f32.mrb[0].mxu0
    %v1617 = vpop.f32.mrb[0].mxu0
    %v1618 = vadd.f32 0.0, %v1617
    %v1619 = vpop.f32.mrb[0].mxu0
    %1620 = vmatprep.mubr.bf16.mxu0 0
    %1621 = vmatmul.mubr.bf16.gmra.mrb[0].mxu0 %v74
    %v1622 = vpop.f32.mrb[0].mxu0
    %v1623 = vadd.f32 0.0, %v1622
    %v1624 = vpop.f32.mrb[0].mxu0
    %v1625 = vpop.f32.mrb[0].mxu0
    %v1626 = vadd.f32 0.0, %v1625
    %v1627 = vpop.f32.mrb[0].mxu0
    %1628 = vmatprep.mubr.bf16.mxu0 0
    %1629 = vmatmul.mubr.bf16.gmra.mrb[0].mxu0 %v75
    %v1630 = vpop.f32.mrb[0].mxu0
    %v1631 = vadd.f32 0.0, %v1630
    %v1632 = vpop.f32.mrb[0].mxu0
    %v1633 = vpop.f32.mrb[0].mxu0
    %v1634 = vadd.f32 0.0, %v1633
    %v1635 = vpop.f32.mrb[0].mxu0
    %1636 = vmatprep.mubr.bf16.mxu0 0
    %1637 = vmatmul.mubr.bf16.gmra.mrb[0].mxu0 %v76
    %v1638 = vpop.f32.mrb[0].mxu0
    %v1639 = vadd.f32 0.0, %v1638
    %v1640 = vpop.f32.mrb[0].mxu0
    %v1641 = vpop.f32.mrb[0].mxu0
    %v1642 = vadd.f32 0.0, %v1641
    %v1643 = vpop.f32.mrb[0].mxu0
    %1644 = vmatprep.mubr.bf16.mxu0 0
    %1645 = vmatmul.mubr.bf16.gmra.mrb[0].mxu0 %v77
    %v1646 = vpop.f32.mrb[0].mxu0
    %v1647 = vadd.f32 0.0, %v1646
    %v1648 = vpop.f32.mrb[0].mxu0
    %v1649 = vpop.f32.mrb[0].mxu0
    %v1650 = vadd.f32 0.0, %v1649
    %v1651 = vpop.f32.mrb[0].mxu0
    %1652 = vmatprep.mubr.bf16.mxu0 0
    %1653 = vmatmul.mubr.bf16.gmra.mrb[0].mxu0 %v78
    %v1654 = vpop.f32.mrb[0].mxu0
    %v1655 = vadd.f32 0.0, %v1654
    %v1656 = vpop.f32.mrb[0].mxu0
    %v1657 = vpop.f32.mrb[0].mxu0
    %v1658 = vadd.f32 0.0, %v1657
    %v1659 = vpop.f32.mrb[0].mxu0
    %1660 = vmatprep.mubr.bf16.mxu0 0
    %1661 = vmatmul.mubr.bf16.gmra.mrb[0].mxu0 %v79
    %v1662 = vpop.f32.mrb[0].mxu0
    %v1663 = vadd.f32 0.0, %v1662
    %v1664 = vpop.f32.mrb[0].mxu0
    %v1665 = vpop.f32.mrb[0].mxu0
    %v1666 = vadd.f32 0.0, %v1665
    %v1667 = vpop.f32.mrb[0].mxu0
    %1668 = vmatprep.mubr.bf16.mxu0 0
    %1669 = vmatmul.mubr.bf16.gmra.mrb[0].mxu0 %v80
    %v1670 = vpop.f32.mrb[0].mxu0
    %v1671 = vadd.f32 0.0, %v1670
    %v1672 = vpop.f32.mrb[0].mxu0
    %v1673 = vpop.f32.mrb[0].mxu0
    %v1674 = vadd.f32 0.0, %v1673
    %v1675 = vpop.f32.mrb[0].mxu0
    %1676 = vdwg.mxu0
    %1693 = vrot.lane.b32.xlu0 %v1615, 127
    %v1694 = vpop.permute.xlu0 %1693
    %1695 = vrot.lane.b32.xlu0 %v1618, 127
    %v1696 = vpop.permute.xlu0 %1695
    %1697 = vrot.lane.b32.xlu0 %v1623, 127
    %v1698 = vpop.permute.xlu0 %1697
    %1699 = vrot.lane.b32.xlu0 %v1626, 127
    %v1700 = vpop.permute.xlu0 %1699
    %1701 = vrot.lane.b32.xlu0 %v1631, 127
    %v1702 = vpop.permute.xlu0 %1701
    %1703 = vrot.lane.b32.xlu0 %v1634, 127
    %v1704 = vpop.permute.xlu0 %1703
    %1705 = vrot.lane.b32.xlu0 %v1639, 127
    %v1706 = vpop.permute.xlu0 %1705
    %1707 = vrot.lane.b32.xlu0 %v1642, 127
    %v1708 = vpop.permute.xlu0 %1707
    %1709 = vrot.lane.b32.xlu0 %v1647, 127
    %v1710 = vpop.permute.xlu0 %1709
    %1711 = vrot.lane.b32.xlu0 %v1650, 127
    %v1712 = vpop.permute.xlu0 %1711
    %1713 = vrot.lane.b32.xlu0 %v1655, 127
    %v1714 = vpop.permute.xlu0 %1713
    %1715 = vrot.lane.b32.xlu0 %v1658, 127
    %v1716 = vpop.permute.xlu0 %1715
    %1717 = vrot.lane.b32.xlu0 %v1663, 127
    %v1718 = vpop.permute.xlu0 %1717
    %1719 = vrot.lane.b32.xlu0 %v1666, 127
    %v1720 = vpop.permute.xlu0 %1719
    %1721 = vrot.lane.b32.xlu0 %v1671, 127
    %v1722 = vpop.permute.xlu0 %1721
    %1723 = vrot.lane.b32.xlu0 %v1674, 127
    %v1724 = vpop.permute.xlu0 %1723
    %v1741 = vadd.f32 %v1615, %v1694
    %v1742 = vadd.f32 %v1618, %v1696
    %v1743 = vadd.f32 %v1623, %v1698
    %v1744 = vadd.f32 %v1626, %v1700
    %v1745 = vadd.f32 %v1631, %v1702
    %v1746 = vadd.f32 %v1634, %v1704
    %v1747 = vadd.f32 %v1639, %v1706
    %v1748 = vadd.f32 %v1642, %v1708
    %v1749 = vadd.f32 %v1647, %v1710
    %v1750 = vadd.f32 %v1650, %v1712
    %v1751 = vadd.f32 %v1655, %v1714
    %v1752 = vadd.f32 %v1658, %v1716
    %v1753 = vadd.f32 %v1663, %v1718
    %v1754 = vadd.f32 %v1666, %v1720
    %v1755 = vadd.f32 %v1671, %v1722
    %v1756 = vadd.f32 %v1674, %v1724
    %v1757 = vrcp.pop %v218
    %v1758 = vmul.f32 %v1741, %v1757
    %v1759 = vrcp.pop %v219
    %v1760 = vmul.f32 %v1742, %v1759
    %v1761 = vrcp.pop %v220
    %v1762 = vmul.f32 %v1743, %v1761
    %v1763 = vrcp.pop %v221
    %v1764 = vmul.f32 %v1744, %v1763
    %v1765 = vrcp.pop %v222
    %v1766 = vmul.f32 %v1745, %v1765
    %v1767 = vrcp.pop %v223
    %v1768 = vmul.f32 %v1746, %v1767
    %v1769 = vrcp.pop %v224
    %v1770 = vmul.f32 %v1747, %v1769
    %v1771 = vrcp.pop %v225
    %v1772 = vmul.f32 %v1748, %v1771
    %v1773 = vrcp.pop %v226
    %v1774 = vmul.f32 %v1749, %v1773
    %v1775 = vrcp.pop %v227
    %v1776 = vmul.f32 %v1750, %v1775
    %v1777 = vrcp.pop %v228
    %v1778 = vmul.f32 %v1751, %v1777
    %v1779 = vrcp.pop %v229
    %v1780 = vmul.f32 %v1752, %v1779
    %v1781 = vrcp.pop %v230
    %v1782 = vmul.f32 %v1753, %v1781
    %v1783 = vrcp.pop %v231
    %v1784 = vmul.f32 %v1754, %v1783
    %v1785 = vrcp.pop %v232
    %v1786 = vmul.f32 %v1755, %v1785
    %v1787 = vrcp.pop %v233
    %v1788 = vmul.f32 %v1756, %v1787
    %v1789 = vsel %vm202, %v1758, 0.0
    %v1790 = vsel %vm203, %v1760, 0.0
    %v1791 = vsel %vm204, %v1762, 0.0
    %v1792 = vsel %vm205, %v1764, 0.0
    %v1793 = vsel %vm206, %v1766, 0.0
    %v1794 = vsel %vm207, %v1768, 0.0
    %v1795 = vsel %vm208, %v1770, 0.0
    %v1796 = vsel %vm209, %v1772, 0.0
    %v1797 = vsel %vm210, %v1774, 0.0
    %v1798 = vsel %vm211, %v1776, 0.0
    %v1799 = vsel %vm212, %v1778, 0.0
    %v1800 = vsel %vm213, %v1780, 0.0
    %v1801 = vsel %vm214, %v1782, 0.0
    %v1802 = vsel %vm215, %v1784, 0.0
    %v1803 = vsel %vm216, %v1786, 0.0
    %v1804 = vsel %vm217, %v1788, 0.0
    %1821 = vrot.lane.b32.xlu0 %v218, 2
    %v1822 = vpop.permute.xlu0 %1821
    %1823 = vrot.lane.b32.xlu0 %v219, 2
    %v1824 = vpop.permute.xlu0 %1823
    %1825 = vrot.lane.b32.xlu0 %v220, 2
    %v1826 = vpop.permute.xlu0 %1825
    %1827 = vrot.lane.b32.xlu0 %v221, 2
    %v1828 = vpop.permute.xlu0 %1827
    %1829 = vrot.lane.b32.xlu0 %v222, 2
    %v1830 = vpop.permute.xlu0 %1829
    %1831 = vrot.lane.b32.xlu0 %v223, 2
    %v1832 = vpop.permute.xlu0 %1831
    %1833 = vrot.lane.b32.xlu0 %v224, 2
    %v1834 = vpop.permute.xlu0 %1833
    %1835 = vrot.lane.b32.xlu0 %v225, 2
    %v1836 = vpop.permute.xlu0 %1835
    %1837 = vrot.lane.b32.xlu0 %v226, 2
    %v1838 = vpop.permute.xlu0 %1837
    %1839 = vrot.lane.b32.xlu0 %v227, 2
    %v1840 = vpop.permute.xlu0 %1839
    %1841 = vrot.lane.b32.xlu0 %v228, 2
    %v1842 = vpop.permute.xlu0 %1841
    %1843 = vrot.lane.b32.xlu0 %v229, 2
    %v1844 = vpop.permute.xlu0 %1843
    %1845 = vrot.lane.b32.xlu0 %v230, 2
    %v1846 = vpop.permute.xlu0 %1845
    %1847 = vrot.lane.b32.xlu0 %v231, 2
    %v1848 = vpop.permute.xlu0 %1847
    %1849 = vrot.lane.b32.xlu0 %v232, 2
    %v1850 = vpop.permute.xlu0 %1849
    %1851 = vrot.lane.b32.xlu0 %v233, 2
    %v1852 = vpop.permute.xlu0 %1851
    %v1869 = vrcp.pop %v1822
    %v1870 = vmul.f32 %v1741, %v1869
    %v1871 = vrcp.pop %v1824
    %v1872 = vmul.f32 %v1742, %v1871
    %v1873 = vrcp.pop %v1826
    %v1874 = vmul.f32 %v1743, %v1873
    %v1875 = vrcp.pop %v1828
    %v1876 = vmul.f32 %v1744, %v1875
    %v1877 = vrcp.pop %v1830
    %v1878 = vmul.f32 %v1745, %v1877
    %v1879 = vrcp.pop %v1832
    %v1880 = vmul.f32 %v1746, %v1879
    %v1881 = vrcp.pop %v1834
    %v1882 = vmul.f32 %v1747, %v1881
    %v1883 = vrcp.pop %v1836
    %v1884 = vmul.f32 %v1748, %v1883
    %v1885 = vrcp.pop %v1838
    %v1886 = vmul.f32 %v1749, %v1885
    %v1887 = vrcp.pop %v1840
    %v1888 = vmul.f32 %v1750, %v1887
    %v1889 = vrcp.pop %v1842
    %v1890 = vmul.f32 %v1751, %v1889
    %v1891 = vrcp.pop %v1844
    %v1892 = vmul.f32 %v1752, %v1891
    %v1893 = vrcp.pop %v1846
    %v1894 = vmul.f32 %v1753, %v1893
    %v1895 = vrcp.pop %v1848
    %v1896 = vmul.f32 %v1754, %v1895
    %v1897 = vrcp.pop %v1850
    %v1898 = vmul.f32 %v1755, %v1897
    %v1899 = vrcp.pop %v1852
    %v1900 = vmul.f32 %v1756, %v1899
    %1917 = vrot.lane.b32.xlu0 %v1870, 126
    %v1918 = vpop.permute.xlu0 %1917
    %1919 = vrot.lane.b32.xlu0 %v1872, 126
    %v1920 = vpop.permute.xlu0 %1919
    %1921 = vrot.lane.b32.xlu0 %v1874, 126
    %v1922 = vpop.permute.xlu0 %1921
    %1923 = vrot.lane.b32.xlu0 %v1876, 126
    %v1924 = vpop.permute.xlu0 %1923
    %1925 = vrot.lane.b32.xlu0 %v1878, 126
    %v1926 = vpop.permute.xlu0 %1925
    %1927 = vrot.lane.b32.xlu0 %v1880, 126
    %v1928 = vpop.permute.xlu0 %1927
    %1929 = vrot.lane.b32.xlu0 %v1882, 126
    %v1930 = vpop.permute.xlu0 %1929
    %1931 = vrot.lane.b32.xlu0 %v1884, 126
    %v1932 = vpop.permute.xlu0 %1931
    %1933 = vrot.lane.b32.xlu0 %v1886, 126
    %v1934 = vpop.permute.xlu0 %1933
    %1935 = vrot.lane.b32.xlu0 %v1888, 126
    %v1936 = vpop.permute.xlu0 %1935
    %1937 = vrot.lane.b32.xlu0 %v1890, 126
    %v1938 = vpop.permute.xlu0 %1937
    %1939 = vrot.lane.b32.xlu0 %v1892, 126
    %v1940 = vpop.permute.xlu0 %1939
    %1941 = vrot.lane.b32.xlu0 %v1894, 126
    %v1942 = vpop.permute.xlu0 %1941
    %1943 = vrot.lane.b32.xlu0 %v1896, 126
    %v1944 = vpop.permute.xlu0 %1943
    %1945 = vrot.lane.b32.xlu0 %v1898, 126
    %v1946 = vpop.permute.xlu0 %1945
    %1947 = vrot.lane.b32.xlu0 %v1900, 126
    %v1948 = vpop.permute.xlu0 %1947
    %v1965 = vsel %vm202, %v1918, 0.0
    %v1966 = vsel %vm203, %v1920, 0.0
    %v1967 = vsel %vm204, %v1922, 0.0
    %v1968 = vsel %vm205, %v1924, 0.0
    %v1969 = vsel %vm206, %v1926, 0.0
    %v1970 = vsel %vm207, %v1928, 0.0
    %v1971 = vsel %vm208, %v1930, 0.0
    %v1972 = vsel %vm209, %v1932, 0.0
    %v1973 = vsel %vm210, %v1934, 0.0
    %v1974 = vsel %vm211, %v1936, 0.0
    %v1975 = vsel %vm212, %v1938, 0.0
    %v1976 = vsel %vm213, %v1940, 0.0
    %v1977 = vsel %vm214, %v1942, 0.0
    %v1978 = vsel %vm215, %v1944, 0.0
    %v1979 = vsel %vm216, %v1946, 0.0
    %v1980 = vsel %vm217, %v1948, 0.0
    %1981 = vset.pattern.permute.xlu0 0
    %1982 = vperm.xlu0 %1981, %v140
    %v1983 = vpop.permute.xlu0 %1982
    %1985 = vset.pattern.permute.xlu0 0
    %1986 = vperm.xlu0 %1985, %v143
    %v1987 = vpop.permute.xlu0 %1986
    %1989 = vset.pattern.permute.xlu0 0
    %1990 = vperm.xlu0 %1989, %v148
    %v1991 = vpop.permute.xlu0 %1990
    %1993 = vset.pattern.permute.xlu0 0
    %1994 = vperm.xlu0 %1993, %v151
    %v1995 = vpop.permute.xlu0 %1994
    %1997 = vset.pattern.permute.xlu0 0
    %1998 = vperm.xlu0 %1997, %v156
    %v1999 = vpop.permute.xlu0 %1998
    %2001 = vset.pattern.permute.xlu0 0
    %2002 = vperm.xlu0 %2001, %v159
    %v2003 = vpop.permute.xlu0 %2002
    %2005 = vset.pattern.permute.xlu0 0
    %2006 = vperm.xlu0 %2005, %v164
    %v2007 = vpop.permute.xlu0 %2006
    %2009 = vset.pattern.permute.xlu0 0
    %2010 = vperm.xlu0 %2009, %v167
    %v2011 = vpop.permute.xlu0 %2010
    %2013 = vset.pattern.permute.xlu0 0
    %2014 = vperm.xlu0 %2013, %v172
    %v2015 = vpop.permute.xlu0 %2014
    %2017 = vset.pattern.permute.xlu0 0
    %2018 = vperm.xlu0 %2017, %v175
    %v2019 = vpop.permute.xlu0 %2018
    %2021 = vset.pattern.permute.xlu0 0
    %2022 = vperm.xlu0 %2021, %v180
    %v2023 = vpop.permute.xlu0 %2022
    %2025 = vset.pattern.permute.xlu0 0
    %2026 = vperm.xlu0 %2025, %v183
    %v2027 = vpop.permute.xlu0 %2026
    %2029 = vset.pattern.permute.xlu0 0
    %2030 = vperm.xlu0 %2029, %v188
    %v2031 = vpop.permute.xlu0 %2030
    %2033 = vset.pattern.permute.xlu0 0
    %2034 = vperm.xlu0 %2033, %v191
    %v2035 = vpop.permute.xlu0 %2034
    %2037 = vset.pattern.permute.xlu0 0
    %2038 = vperm.xlu0 %2037, %v196
    %v2039 = vpop.permute.xlu0 %2038
    %2041 = vset.pattern.permute.xlu0 0
    %2042 = vperm.xlu0 %2041, %v199
    %v2043 = vpop.permute.xlu0 %2042
    %v2045 = vmul.f32 %v1983, %v103
    %v2046 = vmul.f32 %v1987, %v103
    %v2047 = vmul.f32 %v1991, %v103
    %v2048 = vmul.f32 %v1995, %v103
    %v2049 = vmul.f32 %v1999, %v103
    %v2050 = vmul.f32 %v2003, %v103
    %v2051 = vmul.f32 %v2007, %v103
    %v2052 = vmul.f32 %v2011, %v103
    %v2053 = vmul.f32 %v2015, %v103
    %v2054 = vmul.f32 %v2019, %v103
    %v2055 = vmul.f32 %v2023, %v103
    %v2056 = vmul.f32 %v2027, %v103
    %v2057 = vmul.f32 %v2031, %v103
    %v2058 = vmul.f32 %v2035, %v103
    %v2059 = vmul.f32 %v2039, %v103
    %v2060 = vmul.f32 %v2043, %v103
    %v2061 = vadd.f32 %v2045, 0.0
    %v2062 = vadd.f32 %v2046, 0.0
    %v2063 = vadd.f32 %v2047, 0.0
    %v2064 = vadd.f32 %v2048, 0.0
    %v2065 = vadd.f32 %v2049, 0.0
    %v2066 = vadd.f32 %v2050, 0.0
    %v2067 = vadd.f32 %v2051, 0.0
    %v2068 = vadd.f32 %v2052, 0.0
    %v2069 = vadd.f32 %v2053, 0.0
    %v2070 = vadd.f32 %v2054, 0.0
    %v2071 = vadd.f32 %v2055, 0.0
    %v2072 = vadd.f32 %v2056, 0.0
    %v2073 = vadd.f32 %v2057, 0.0
    %v2074 = vadd.f32 %v2058, 0.0
    %v2075 = vadd.f32 %v2059, 0.0
    %v2076 = vadd.f32 %v2060, 0.0
    %2078 = vset.pattern.permute.xlu0 0
    %2079 = vperm.xlu0 %2078, %v1271
    %v2080 = vpop.permute.xlu0 %2079
    %2083 = vset.pattern.permute.xlu0 0
    %2084 = vperm.xlu0 %2083, %v1272
    %v2085 = vpop.permute.xlu0 %2084
    %2088 = vset.pattern.permute.xlu0 0
    %2089 = vperm.xlu0 %2088, %v1273
    %v2090 = vpop.permute.xlu0 %2089
    %2093 = vset.pattern.permute.xlu0 0
    %2094 = vperm.xlu0 %2093, %v1274
    %v2095 = vpop.permute.xlu0 %2094
    %2098 = vset.pattern.permute.xlu0 0
    %2099 = vperm.xlu0 %2098, %v1275
    %v2100 = vpop.permute.xlu0 %2099
    %2103 = vset.pattern.permute.xlu0 0
    %2104 = vperm.xlu0 %2103, %v1276
    %v2105 = vpop.permute.xlu0 %2104
    %2108 = vset.pattern.permute.xlu0 0
    %2109 = vperm.xlu0 %2108, %v1277
    %v2110 = vpop.permute.xlu0 %2109
    %2113 = vset.pattern.permute.xlu0 0
    %2114 = vperm.xlu0 %2113, %v1278
    %v2115 = vpop.permute.xlu0 %2114
    %2118 = vset.pattern.permute.xlu0 0
    %2119 = vperm.xlu0 %2118, %v1279
    %v2120 = vpop.permute.xlu0 %2119
    %2123 = vset.pattern.permute.xlu0 0
    %2124 = vperm.xlu0 %2123, %v1280
    %v2125 = vpop.permute.xlu0 %2124
    %2128 = vset.pattern.permute.xlu0 0
    %2129 = vperm.xlu0 %2128, %v1281
    %v2130 = vpop.permute.xlu0 %2129
    %2133 = vset.pattern.permute.xlu0 0
    %2134 = vperm.xlu0 %2133, %v1282
    %v2135 = vpop.permute.xlu0 %2134
    %2138 = vset.pattern.permute.xlu0 0
    %2139 = vperm.xlu0 %2138, %v1283
    %v2140 = vpop.permute.xlu0 %2139
    %2143 = vset.pattern.permute.xlu0 0
    %2144 = vperm.xlu0 %2143, %v1284
    %v2145 = vpop.permute.xlu0 %2144
    %2148 = vset.pattern.permute.xlu0 0
    %2149 = vperm.xlu0 %2148, %v1285
    %v2150 = vpop.permute.xlu0 %2149
    %2153 = vset.pattern.permute.xlu0 0
    %2154 = vperm.xlu0 %2153, %v1286
    %v2155 = vpop.permute.xlu0 %2154
    %v2157 = vmul.f32 %v2080, %v678
    %v2158 = vmul.f32 %v2085, %v678
    %v2159 = vmul.f32 %v2090, %v678
    %v2160 = vmul.f32 %v2095, %v678
    %v2161 = vmul.f32 %v2100, %v678
    %v2162 = vmul.f32 %v2105, %v678
    %v2163 = vmul.f32 %v2110, %v678
    %v2164 = vmul.f32 %v2115, %v678
    %v2165 = vmul.f32 %v2120, %v678
    %v2166 = vmul.f32 %v2125, %v678
    %v2167 = vmul.f32 %v2130, %v678
    %v2168 = vmul.f32 %v2135, %v678
    %v2169 = vmul.f32 %v2140, %v678
    %v2170 = vmul.f32 %v2145, %v678
    %v2171 = vmul.f32 %v2150, %v678
    %v2172 = vmul.f32 %v2155, %v678
    %v2173 = vadd.f32 %v2061, %v2157
    %v2174 = vadd.f32 %v2062, %v2158
    %v2175 = vadd.f32 %v2063, %v2159
    %v2176 = vadd.f32 %v2064, %v2160
    %v2177 = vadd.f32 %v2065, %v2161
    %v2178 = vadd.f32 %v2066, %v2162
    %v2179 = vadd.f32 %v2067, %v2163
    %v2180 = vadd.f32 %v2068, %v2164
    %v2181 = vadd.f32 %v2069, %v2165
    %v2182 = vadd.f32 %v2070, %v2166
    %v2183 = vadd.f32 %v2071, %v2167
    %v2184 = vadd.f32 %v2072, %v2168
    %v2185 = vadd.f32 %v2073, %v2169
    %v2186 = vadd.f32 %v2074, %v2170
    %v2187 = vadd.f32 %v2075, %v2171
    %v2188 = vadd.f32 %v2076, %v2172
    %2190 = vset.pattern.permute.xlu0 0
    %2191 = vperm.xlu0 %2190, %v1789
    %v2192 = vpop.permute.xlu0 %2191
    %2195 = vset.pattern.permute.xlu0 0
    %2196 = vperm.xlu0 %2195, %v1790
    %v2197 = vpop.permute.xlu0 %2196
    %2200 = vset.pattern.permute.xlu0 0
    %2201 = vperm.xlu0 %2200, %v1791
    %v2202 = vpop.permute.xlu0 %2201
    %2205 = vset.pattern.permute.xlu0 0
    %2206 = vperm.xlu0 %2205, %v1792
    %v2207 = vpop.permute.xlu0 %2206
    %2210 = vset.pattern.permute.xlu0 0
    %2211 = vperm.xlu0 %2210, %v1793
    %v2212 = vpop.permute.xlu0 %2211
    %2215 = vset.pattern.permute.xlu0 0
    %2216 = vperm.xlu0 %2215, %v1794
    %v2217 = vpop.permute.xlu0 %2216
    %2220 = vset.pattern.permute.xlu0 0
    %2221 = vperm.xlu0 %2220, %v1795
    %v2222 = vpop.permute.xlu0 %2221
    %2225 = vset.pattern.permute.xlu0 0
    %2226 = vperm.xlu0 %2225, %v1796
    %v2227 = vpop.permute.xlu0 %2226
    %2230 = vset.pattern.permute.xlu0 0
    %2231 = vperm.xlu0 %2230, %v1797
    %v2232 = vpop.permute.xlu0 %2231
    %2235 = vset.pattern.permute.xlu0 0
    %2236 = vperm.xlu0 %2235, %v1798
    %v2237 = vpop.permute.xlu0 %2236
    %2240 = vset.pattern.permute.xlu0 0
    %2241 = vperm.xlu0 %2240, %v1799
    %v2242 = vpop.permute.xlu0 %2241
    %2245 = vset.pattern.permute.xlu0 0
    %2246 = vperm.xlu0 %2245, %v1800
    %v2247 = vpop.permute.xlu0 %2246
    %2250 = vset.pattern.permute.xlu0 0
    %2251 = vperm.xlu0 %2250, %v1801
    %v2252 = vpop.permute.xlu0 %2251
    %2255 = vset.pattern.permute.xlu0 0
    %2256 = vperm.xlu0 %2255, %v1802
    %v2257 = vpop.permute.xlu0 %2256
    %2260 = vset.pattern.permute.xlu0 0
    %2261 = vperm.xlu0 %2260, %v1803
    %v2262 = vpop.permute.xlu0 %2261
    %2265 = vset.pattern.permute.xlu0 0
    %2266 = vperm.xlu0 %2265, %v1804
    %v2267 = vpop.permute.xlu0 %2266
    %v2269 = vmul.f32 %v2192, %v793
    %v2270 = vmul.f32 %v2197, %v793
    %v2271 = vmul.f32 %v2202, %v793
    %v2272 = vmul.f32 %v2207, %v793
    %v2273 = vmul.f32 %v2212, %v793
    %v2274 = vmul.f32 %v2217, %v793
    %v2275 = vmul.f32 %v2222, %v793
    %v2276 = vmul.f32 %v2227, %v793
    %v2277 = vmul.f32 %v2232, %v793
    %v2278 = vmul.f32 %v2237, %v793
    %v2279 = vmul.f32 %v2242, %v793
    %v2280 = vmul.f32 %v2247, %v793
    %v2281 = vmul.f32 %v2252, %v793
    %v2282 = vmul.f32 %v2257, %v793
    %v2283 = vmul.f32 %v2262, %v793
    %v2284 = vmul.f32 %v2267, %v793
    %v2285 = vadd.f32 %v2173, %v2269
    %v2286 = vadd.f32 %v2174, %v2270
    %v2287 = vadd.f32 %v2175, %v2271
    %v2288 = vadd.f32 %v2176, %v2272
    %v2289 = vadd.f32 %v2177, %v2273
    %v2290 = vadd.f32 %v2178, %v2274
    %v2291 = vadd.f32 %v2179, %v2275
    %v2292 = vadd.f32 %v2180, %v2276
    %v2293 = vadd.f32 %v2181, %v2277
    %v2294 = vadd.f32 %v2182, %v2278
    %v2295 = vadd.f32 %v2183, %v2279
    %v2296 = vadd.f32 %v2184, %v2280
    %v2297 = vadd.f32 %v2185, %v2281
    %v2298 = vadd.f32 %v2186, %v2282
    %v2299 = vadd.f32 %v2187, %v2283
    %v2300 = vadd.f32 %v2188, %v2284
    %2302 = vset.pattern.permute.xlu0 0
    %2303 = vperm.xlu0 %2302, %v1965
    %v2304 = vpop.permute.xlu0 %2303
    %2307 = vset.pattern.permute.xlu0 0
    %2308 = vperm.xlu0 %2307, %v1966
    %v2309 = vpop.permute.xlu0 %2308
    %2312 = vset.pattern.permute.xlu0 0
    %2313 = vperm.xlu0 %2312, %v1967
    %v2314 = vpop.permute.xlu0 %2313
    %2317 = vset.pattern.permute.xlu0 0
    %2318 = vperm.xlu0 %2317, %v1968
    %v2319 = vpop.permute.xlu0 %2318
    %2322 = vset.pattern.permute.xlu0 0
    %2323 = vperm.xlu0 %2322, %v1969
    %v2324 = vpop.permute.xlu0 %2323
    %2327 = vset.pattern.permute.xlu0 0
    %2328 = vperm.xlu0 %2327, %v1970
    %v2329 = vpop.permute.xlu0 %2328
    %2332 = vset.pattern.permute.xlu0 0
    %2333 = vperm.xlu0 %2332, %v1971
    %v2334 = vpop.permute.xlu0 %2333
    %2337 = vset.pattern.permute.xlu0 0
    %2338 = vperm.xlu0 %2337, %v1972
    %v2339 = vpop.permute.xlu0 %2338
    %2342 = vset.pattern.permute.xlu0 0
    %2343 = vperm.xlu0 %2342, %v1973
    %v2344 = vpop.permute.xlu0 %2343
    %2347 = vset.pattern.permute.xlu0 0
    %2348 = vperm.xlu0 %2347, %v1974
    %v2349 = vpop.permute.xlu0 %2348
    %2352 = vset.pattern.permute.xlu0 0
    %2353 = vperm.xlu0 %2352, %v1975
    %v2354 = vpop.permute.xlu0 %2353
    %2357 = vset.pattern.permute.xlu0 0
    %2358 = vperm.xlu0 %2357, %v1976
    %v2359 = vpop.permute.xlu0 %2358
    %2362 = vset.pattern.permute.xlu0 0
    %2363 = vperm.xlu0 %2362, %v1977
    %v2364 = vpop.permute.xlu0 %2363
    %2367 = vset.pattern.permute.xlu0 0
    %2368 = vperm.xlu0 %2367, %v1978
    %v2369 = vpop.permute.xlu0 %2368
    %2372 = vset.pattern.permute.xlu0 0
    %2373 = vperm.xlu0 %2372, %v1979
    %v2374 = vpop.permute.xlu0 %2373
    %2377 = vset.pattern.permute.xlu0 0
    %2378 = vperm.xlu0 %2377, %v1980
    %v2379 = vpop.permute.xlu0 %2378
    %v2381 = vmul.f32 %v2304, %v1459
    %v2382 = vmul.f32 %v2309, %v1459
    %v2383 = vmul.f32 %v2314, %v1459
    %v2384 = vmul.f32 %v2319, %v1459
    %v2385 = vmul.f32 %v2324, %v1459
    %v2386 = vmul.f32 %v2329, %v1459
    %v2387 = vmul.f32 %v2334, %v1459
    %v2388 = vmul.f32 %v2339, %v1459
    %v2389 = vmul.f32 %v2344, %v1459
    %v2390 = vmul.f32 %v2349, %v1459
    %v2391 = vmul.f32 %v2354, %v1459
    %v2392 = vmul.f32 %v2359, %v1459
    %v2393 = vmul.f32 %v2364, %v1459
    %v2394 = vmul.f32 %v2369, %v1459
    %v2395 = vmul.f32 %v2374, %v1459
    %v2396 = vmul.f32 %v2379, %v1459
    %v2397 = vadd.f32 %v2285, %v2381
    %v2398 = vadd.f32 %v2286, %v2382
    %v2399 = vadd.f32 %v2287, %v2383
    %v2400 = vadd.f32 %v2288, %v2384
    %v2401 = vadd.f32 %v2289, %v2385
    %v2402 = vadd.f32 %v2290, %v2386
    %v2403 = vadd.f32 %v2291, %v2387
    %v2404 = vadd.f32 %v2292, %v2388
    %v2405 = vadd.f32 %v2293, %v2389
    %v2406 = vadd.f32 %v2294, %v2390
    %v2407 = vadd.f32 %v2295, %v2391
    %v2408 = vadd.f32 %v2296, %v2392
    %v2409 = vadd.f32 %v2297, %v2393
    %v2410 = vadd.f32 %v2298, %v2394
    %v2411 = vadd.f32 %v2299, %v2395
    %v2412 = vadd.f32 %v2300, %v2396
    %vm2413 = vcmp.eq.s32.totalorder %v100, 4
    %v2414 = vsel %vm2413, 1, 0
    %v2415 = vcvt.s32.f32 %v2414
    %v2416 = vmul.f32 %v1289, %v2415
    %v2417 = vmul.f32 %v1290, %v2415
    %v2418 = vmul.f32 %v1291, %v2415
    %v2419 = vmul.f32 %v1292, %v2415
    %v2420 = vmul.f32 %v1293, %v2415
    %v2421 = vmul.f32 %v1294, %v2415
    %v2422 = vmul.f32 %v1295, %v2415
    %v2423 = vmul.f32 %v1296, %v2415
    %v2424 = vmul.f32 %v1297, %v2415
    %v2425 = vmul.f32 %v1298, %v2415
    %v2426 = vmul.f32 %v1299, %v2415
    %v2427 = vmul.f32 %v1300, %v2415
    %v2428 = vmul.f32 %v1301, %v2415
    %v2429 = vmul.f32 %v1302, %v2415
    %v2430 = vmul.f32 %v1303, %v2415
    %v2431 = vmul.f32 %v1304, %v2415
    %v2432 = vadd.f32 %v2397, %v2416
    %v2433 = vadd.f32 %v2398, %v2417
    %v2434 = vadd.f32 %v2399, %v2418
    %v2435 = vadd.f32 %v2400, %v2419
    %v2436 = vadd.f32 %v2401, %v2420
    %v2437 = vadd.f32 %v2402, %v2421
    %v2438 = vadd.f32 %v2403, %v2422
    %v2439 = vadd.f32 %v2404, %v2423
    %v2440 = vadd.f32 %v2405, %v2424
    %v2441 = vadd.f32 %v2406, %v2425
    %v2442 = vadd.f32 %v2407, %v2426
    %v2443 = vadd.f32 %v2408, %v2427
    %v2444 = vadd.f32 %v2409, %v2428
    %v2445 = vadd.f32 %v2410, %v2429
    %v2446 = vadd.f32 %v2411, %v2430
    %v2447 = vadd.f32 %v2412, %v2431
    %vm2448 = vcmp.eq.s32.totalorder %v100, 5
    %v2449 = vsel %vm2448, 1, 0
    %v2450 = vcvt.s32.f32 %v2449
    %2452 = vset.pattern.permute.xlu0 0
    %2453 = vperm.xlu0 %2452, %v1011
    %v2454 = vpop.permute.xlu0 %2453
    %2457 = vset.pattern.permute.xlu0 0
    %2458 = vperm.xlu0 %2457, %v1012
    %v2459 = vpop.permute.xlu0 %2458
    %2462 = vset.pattern.permute.xlu0 0
    %2463 = vperm.xlu0 %2462, %v1013
    %v2464 = vpop.permute.xlu0 %2463
    %2467 = vset.pattern.permute.xlu0 0
    %2468 = vperm.xlu0 %2467, %v1014
    %v2469 = vpop.permute.xlu0 %2468
    %2472 = vset.pattern.permute.xlu0 0
    %2473 = vperm.xlu0 %2472, %v1015
    %v2474 = vpop.permute.xlu0 %2473
    %2477 = vset.pattern.permute.xlu0 0
    %2478 = vperm.xlu0 %2477, %v1016
    %v2479 = vpop.permute.xlu0 %2478
    %2482 = vset.pattern.permute.xlu0 0
    %2483 = vperm.xlu0 %2482, %v1017
    %v2484 = vpop.permute.xlu0 %2483
    %2487 = vset.pattern.permute.xlu0 0
    %2488 = vperm.xlu0 %2487, %v1018
    %v2489 = vpop.permute.xlu0 %2488
    %2492 = vset.pattern.permute.xlu0 0
    %2493 = vperm.xlu0 %2492, %v1019
    %v2494 = vpop.permute.xlu0 %2493
    %2497 = vset.pattern.permute.xlu0 0
    %2498 = vperm.xlu0 %2497, %v1020
    %v2499 = vpop.permute.xlu0 %2498
    %2502 = vset.pattern.permute.xlu0 0
    %2503 = vperm.xlu0 %2502, %v1021
    %v2504 = vpop.permute.xlu0 %2503
    %2507 = vset.pattern.permute.xlu0 0
    %2508 = vperm.xlu0 %2507, %v1022
    %v2509 = vpop.permute.xlu0 %2508
    %2512 = vset.pattern.permute.xlu0 0
    %2513 = vperm.xlu0 %2512, %v1023
    %v2514 = vpop.permute.xlu0 %2513
    %2517 = vset.pattern.permute.xlu0 0
    %2518 = vperm.xlu0 %2517, %v1024
    %v2519 = vpop.permute.xlu0 %2518
    %2522 = vset.pattern.permute.xlu0 0
    %2523 = vperm.xlu0 %2522, %v1025
    %v2524 = vpop.permute.xlu0 %2523
    %2527 = vset.pattern.permute.xlu0 0
    %2528 = vperm.xlu0 %2527, %v1026
    %v2529 = vpop.permute.xlu0 %2528
    %v2531 = vmul.f32 %v2454, %v2450
    %v2532 = vmul.f32 %v2459, %v2450
    %v2533 = vmul.f32 %v2464, %v2450
    %v2534 = vmul.f32 %v2469, %v2450
    %v2535 = vmul.f32 %v2474, %v2450
    %v2536 = vmul.f32 %v2479, %v2450
    %v2537 = vmul.f32 %v2484, %v2450
    %v2538 = vmul.f32 %v2489, %v2450
    %v2539 = vmul.f32 %v2494, %v2450
    %v2540 = vmul.f32 %v2499, %v2450
    %v2541 = vmul.f32 %v2504, %v2450
    %v2542 = vmul.f32 %v2509, %v2450
    %v2543 = vmul.f32 %v2514, %v2450
    %v2544 = vmul.f32 %v2519, %v2450
    %v2545 = vmul.f32 %v2524, %v2450
    %v2546 = vmul.f32 %v2529, %v2450
    %v2547 = vadd.f32 %v2432, %v2531
    %v2548 = vadd.f32 %v2433, %v2532
    %v2549 = vadd.f32 %v2434, %v2533
    %v2550 = vadd.f32 %v2435, %v2534
    %v2551 = vadd.f32 %v2436, %v2535
    %v2552 = vadd.f32 %v2437, %v2536
    %v2553 = vadd.f32 %v2438, %v2537
    %v2554 = vadd.f32 %v2439, %v2538
    %v2555 = vadd.f32 %v2440, %v2539
    %v2556 = vadd.f32 %v2441, %v2540
    %v2557 = vadd.f32 %v2442, %v2541
    %v2558 = vadd.f32 %v2443, %v2542
    %v2559 = vadd.f32 %v2444, %v2543
    %v2560 = vadd.f32 %v2445, %v2544
    %v2561 = vadd.f32 %v2446, %v2545
    %v2562 = vadd.f32 %v2447, %v2546
    %vm2563 = vcmp.eq.s32.totalorder %v100, 6
    %v2564 = vsel %vm2563, 1, 0
    %v2565 = vcvt.s32.f32 %v2564
    %2567 = vset.pattern.permute.xlu0 2
    %2568 = vperm.xlu0 %2567, %v1107
    %v2569 = vpop.permute.xlu0 %2568
    %2572 = vset.pattern.permute.xlu0 2
    %2573 = vperm.xlu0 %2572, %v1108
    %v2574 = vpop.permute.xlu0 %2573
    %2577 = vset.pattern.permute.xlu0 2
    %2578 = vperm.xlu0 %2577, %v1109
    %v2579 = vpop.permute.xlu0 %2578
    %2582 = vset.pattern.permute.xlu0 2
    %2583 = vperm.xlu0 %2582, %v1110
    %v2584 = vpop.permute.xlu0 %2583
    %2587 = vset.pattern.permute.xlu0 2
    %2588 = vperm.xlu0 %2587, %v1111
    %v2589 = vpop.permute.xlu0 %2588
    %2592 = vset.pattern.permute.xlu0 2
    %2593 = vperm.xlu0 %2592, %v1112
    %v2594 = vpop.permute.xlu0 %2593
    %2597 = vset.pattern.permute.xlu0 2
    %2598 = vperm.xlu0 %2597, %v1113
    %v2599 = vpop.permute.xlu0 %2598
    %2602 = vset.pattern.permute.xlu0 2
    %2603 = vperm.xlu0 %2602, %v1114
    %v2604 = vpop.permute.xlu0 %2603
    %2607 = vset.pattern.permute.xlu0 2
    %2608 = vperm.xlu0 %2607, %v1115
    %v2609 = vpop.permute.xlu0 %2608
    %2612 = vset.pattern.permute.xlu0 2
    %2613 = vperm.xlu0 %2612, %v1116
    %v2614 = vpop.permute.xlu0 %2613
    %2617 = vset.pattern.permute.xlu0 2
    %2618 = vperm.xlu0 %2617, %v1117
    %v2619 = vpop.permute.xlu0 %2618
    %2622 = vset.pattern.permute.xlu0 2
    %2623 = vperm.xlu0 %2622, %v1118
    %v2624 = vpop.permute.xlu0 %2623
    %2627 = vset.pattern.permute.xlu0 2
    %2628 = vperm.xlu0 %2627, %v1119
    %v2629 = vpop.permute.xlu0 %2628
    %2632 = vset.pattern.permute.xlu0 2
    %2633 = vperm.xlu0 %2632, %v1120
    %v2634 = vpop.permute.xlu0 %2633
    %2637 = vset.pattern.permute.xlu0 2
    %2638 = vperm.xlu0 %2637, %v1121
    %v2639 = vpop.permute.xlu0 %2638
    %2642 = vset.pattern.permute.xlu0 2
    %2643 = vperm.xlu0 %2642, %v1122
    %v2644 = vpop.permute.xlu0 %2643
    %v2646 = vmul.f32 %v2569, %v2565
    %v2647 = vmul.f32 %v2574, %v2565
    %v2648 = vmul.f32 %v2579, %v2565
    %v2649 = vmul.f32 %v2584, %v2565
    %v2650 = vmul.f32 %v2589, %v2565
    %v2651 = vmul.f32 %v2594, %v2565
    %v2652 = vmul.f32 %v2599, %v2565
    %v2653 = vmul.f32 %v2604, %v2565
    %v2654 = vmul.f32 %v2609, %v2565
    %v2655 = vmul.f32 %v2614, %v2565
    %v2656 = vmul.f32 %v2619, %v2565
    %v2657 = vmul.f32 %v2624, %v2565
    %v2658 = vmul.f32 %v2629, %v2565
    %v2659 = vmul.f32 %v2634, %v2565
    %v2660 = vmul.f32 %v2639, %v2565
    %v2661 = vmul.f32 %v2644, %v2565
    %v2662 = vadd.f32 %v2547, %v2646
    %v2663 = vadd.f32 %v2548, %v2647
    %v2664 = vadd.f32 %v2549, %v2648
    %v2665 = vadd.f32 %v2550, %v2649
    %v2666 = vadd.f32 %v2551, %v2650
    %v2667 = vadd.f32 %v2552, %v2651
    %v2668 = vadd.f32 %v2553, %v2652
    %v2669 = vadd.f32 %v2554, %v2653
    %v2670 = vadd.f32 %v2555, %v2654
    %v2671 = vadd.f32 %v2556, %v2655
    %v2672 = vadd.f32 %v2557, %v2656
    %v2673 = vadd.f32 %v2558, %v2657
    %v2674 = vadd.f32 %v2559, %v2658
    %v2675 = vadd.f32 %v2560, %v2659
    %v2676 = vadd.f32 %v2561, %v2660
    %v2677 = vadd.f32 %v2562, %v2661
    %2678 = vadd.xlane.f32.xlu0 %v81
    %v2679 = vpop.xlane.xlu0 %2678
    %v2680 = vmax.f32 %v2679, 1.0
    %v2681 = vrcp.pop %v2680
    %v2682 = vmul.f32 1.0, %v2681
    %2683 = vmatprep.subr.mxu0 0.0
    %2684 = vmatpush1.msra.mxu0 %v2662
    %2685 = vmatprep.subr.mxu0 0.0
    %2686 = vmatpush1.msra.mxu0 %v2663
    %2687 = vmatprep.subr.mxu0 0.0
    %2688 = vmatpush1.msra.mxu0 %v2664
    %2689 = vmatprep.subr.mxu0 0.0
    %2690 = vmatpush1.msra.mxu0 %v2665
    %2691 = vmatprep.subr.mxu0 0.0
    %2692 = vmatpush1.msra.mxu0 %v2666
    %2693 = vmatprep.subr.mxu0 0.0
    %2694 = vmatpush1.msra.mxu0 %v2667
    %2695 = vmatprep.subr.mxu0 0.0
    %2696 = vmatpush1.msra.mxu0 %v2668
    %2697 = vmatprep.subr.mxu0 0.0
    %2698 = vmatpush1.msra.mxu0 %v2669
    %2699 = vmatprep.subr.mxu0 0.0
    %2700 = vmatpush1.msra.mxu0 %v2670
    %2701 = vmatprep.subr.mxu0 0.0
    %2702 = vmatpush1.msra.mxu0 %v2671
    %2703 = vmatprep.subr.mxu0 0.0
    %2704 = vmatpush1.msra.mxu0 %v2672
    %2705 = vmatprep.subr.mxu0 0.0
    %2706 = vmatpush1.msra.mxu0 %v2673
    %2707 = vmatprep.subr.mxu0 0.0
    %2708 = vmatpush1.msra.mxu0 %v2674
    %2709 = vmatprep.subr.mxu0 0.0
    %2710 = vmatpush1.msra.mxu0 %v2675
    %2711 = vmatprep.subr.mxu0 0.0
    %2712 = vmatpush1.msra.mxu0 %v2676
    %2713 = vmatprep.subr.mxu0 0.0
    %2714 = vmatpush1.msra.mxu0 %v2677
    %2715 = vmatprep.subr.mxu0 0.0
    %2716 = vmatpush1.msra.mxu0 0.0
    %2717 = vmatprep.subr.mxu0 0.0
    %2718 = vmatpush1.msra.mxu0 0.0
    %2719 = vmatprep.subr.mxu0 0.0
    %2720 = vmatpush1.msra.mxu0 0.0
    %2721 = vmatprep.subr.mxu0 0.0
    %2722 = vmatpush1.msra.mxu0 0.0
    %2723 = vmatprep.subr.mxu0 0.0
    %2724 = vmatpush1.msra.mxu0 0.0
    %2725 = vmatprep.subr.mxu0 0.0
    %2726 = vmatpush1.msra.mxu0 0.0
    %2727 = vmatprep.subr.mxu0 0.0
    %2728 = vmatpush1.msra.mxu0 0.0
    %2729 = vmatprep.subr.mxu0 0.0
    %2730 = vmatpush1.msra.mxu0 0.0
    %2731 = vmatprep.subr.mxu0 0.0
    %2732 = vmatpush1.msra.mxu0 0.0
    %2733 = vmatprep.subr.mxu0 0.0
    %2734 = vmatpush1.msra.mxu0 0.0
    %2735 = vmatprep.subr.mxu0 0.0
    %2736 = vmatpush1.msra.mxu0 0.0
    %2737 = vmatprep.subr.mxu0 0.0
    %2738 = vmatpush1.msra.mxu0 0.0
    %2739 = vmatprep.subr.mxu0 0.0
    %2740 = vmatpush1.msra.mxu0 0.0
    %2741 = vmatprep.subr.mxu0 0.0
    %2742 = vmatpush1.msra.mxu0 0.0
    %2743 = vmatprep.subr.mxu0 0.0
    %2744 = vmatpush1.msra.mxu0 0.0
    %2745 = vmatprep.subr.mxu0 0.0
    %2746 = vmatpush1.msra.mxu0 0.0
    %2747 = vmatprep.mubr.f32.mxu0 0.0
    %2748 = vmatmul.mubr.f32.gmra.mrb[0].mxu0 %v81
    %v2749 = vpop.f32.mrb[0].mxu0
    %v2750 = vadd.f32 0.0, %v2749
    %v2751 = vpop.f32.mrb[0].mxu0
    %2752 = vdwg.mxu0
    %v2753 = vmul.f32 %v2750, %v2682
    %vm2754 = vcmp.eq.s32.totalorder %v100, 7
    %v2755 = vsel %vm2754, 1, 0
    %v2756 = vcvt.s32.f32 %v2755
    %v2757 = vmul.f32 %v2679, %v2756
    %v2758 = vadd.f32 %v2753, %v2757
    %2759 = vxpose.xlu0.b32.start [1/16] %v81, 128
    %2760 = vxpose.xlu0.b32.cont [2/16] 0.0, 128
    %2761 = vxpose.xlu0.b32.cont [3/16] 0.0, 128
    %2762 = vxpose.xlu0.b32.cont [4/16] 0.0, 128
    %2763 = vxpose.xlu0.b32.cont [5/16] 0.0, 128
    %2764 = vxpose.xlu0.b32.cont [6/16] 0.0, 128
    %2765 = vxpose.xlu0.b32.cont [7/16] 0.0, 128
    %2766 = vxpose.xlu0.b32.cont [8/16] 0.0, 128
    %2767 = vxpose.xlu0.b32.cont [9/16] 0.0, 128
    %2768 = vxpose.xlu0.b32.cont [10/16] 0.0, 128
    %2769 = vxpose.xlu0.b32.cont [11/16] 0.0, 128
    %2770 = vxpose.xlu0.b32.cont [12/16] 0.0, 128
    %2771 = vxpose.xlu0.b32.cont [13/16] 0.0, 128
    %2772 = vxpose.xlu0.b32.cont [14/16] 0.0, 128
    %2773 = vxpose.xlu0.b32.cont [15/16] 0.0, 128
    %2774 = vxpose.xlu0.b32.end [16/16] 0.0, 128
    %v2775 = vpop.trf.xlu0
    %v2776 = vpop.trf.xlu0
    %v2777 = vpop.trf.xlu0
    %v2778 = vpop.trf.xlu0
    %v2779 = vpop.trf.xlu0
    %v2780 = vpop.trf.xlu0
    %v2781 = vpop.trf.xlu0
    %v2782 = vpop.trf.xlu0
    %v2783 = vpop.trf.xlu0
    %v2784 = vpop.trf.xlu0
    %v2785 = vpop.trf.xlu0
    %v2786 = vpop.trf.xlu0
    %v2787 = vpop.trf.xlu0
    %v2788 = vpop.trf.xlu0
    %v2789 = vpop.trf.xlu0
    %v2790 = vpop.trf.xlu0
    %vm2791 = vcmask 64512
    %v2793 = vsel %vm2791, %v2775, 0
    %v2796 = vsel %vm2791, %v2776, 0
    %v2799 = vsel %vm2791, %v2777, 0
    %v2802 = vsel %vm2791, %v2778, 0
    %v2805 = vsel %vm2791, %v2779, 0
    %v2808 = vsel %vm2791, %v2780, 0
    %v2811 = vsel %vm2791, %v2781, 0
    %v2814 = vsel %vm2791, %v2782, 0
    %v2817 = vsel %vm2791, %v2783, 0
    %v2820 = vsel %vm2791, %v2784, 0
    %v2823 = vsel %vm2791, %v2785, 0
    %v2826 = vsel %vm2791, %v2786, 0
    %v2829 = vsel %vm2791, %v2787, 0
    %v2832 = vsel %vm2791, %v2788, 0
    %v2835 = vsel %vm2791, %v2789, 0
    %v2838 = vsel %vm2791, %v2790, 0
    %2840 = vmatprep.subr.mxu0 0.0
    %2841 = vmatpush1.msra.mxu0 %v2758
    %2842 = vmatprep.subr.mxu0 0.0
    %2843 = vmatpush1.msra.mxu0 0.0
    %2844 = vmatprep.subr.mxu0 0.0
    %2845 = vmatpush1.msra.mxu0 0.0
    %2846 = vmatprep.subr.mxu0 0.0
    %2847 = vmatpush1.msra.mxu0 0.0
    %2848 = vmatprep.subr.mxu0 0.0
    %2849 = vmatpush1.msra.mxu0 0.0
    %2850 = vmatprep.subr.mxu0 0.0
    %2851 = vmatpush1.msra.mxu0 0.0
    %2852 = vmatprep.subr.mxu0 0.0
    %2853 = vmatpush1.msra.mxu0 0.0
    %2854 = vmatprep.subr.mxu0 0.0
    %2855 = vmatpush1.msra.mxu0 0.0
    %2856 = vmatprep.subr.mxu0 0.0
    %2857 = vmatpush1.msra.mxu0 0.0
    %2858 = vmatprep.subr.mxu0 0.0
    %2859 = vmatpush1.msra.mxu0 0.0
    %2860 = vmatprep.subr.mxu0 0.0
    %2861 = vmatpush1.msra.mxu0 0.0
    %2862 = vmatprep.subr.mxu0 0.0
    %2863 = vmatpush1.msra.mxu0 0.0
    %2864 = vmatprep.subr.mxu0 0.0
    %2865 = vmatpush1.msra.mxu0 0.0
    %2866 = vmatprep.subr.mxu0 0.0
    %2867 = vmatpush1.msra.mxu0 0.0
    %2868 = vmatprep.subr.mxu0 0.0
    %2869 = vmatpush1.msra.mxu0 0.0
    %2870 = vmatprep.subr.mxu0 0.0
    %2871 = vmatpush1.msra.mxu0 0.0
    %2872 = vmatprep.subr.mxu0 0.0
    %2873 = vmatpush1.msra.mxu0 0.0
    %2874 = vmatprep.subr.mxu0 0.0
    %2875 = vmatpush1.msra.mxu0 0.0
    %2876 = vmatprep.subr.mxu0 0.0
    %2877 = vmatpush1.msra.mxu0 0.0
    %2878 = vmatprep.subr.mxu0 0.0
    %2879 = vmatpush1.msra.mxu0 0.0
    %2880 = vmatprep.subr.mxu0 0.0
    %2881 = vmatpush1.msra.mxu0 0.0
    %2882 = vmatprep.subr.mxu0 0.0
    %2883 = vmatpush1.msra.mxu0 0.0
    %2884 = vmatprep.subr.mxu0 0.0
    %2885 = vmatpush1.msra.mxu0 0.0
    %2886 = vmatprep.subr.mxu0 0.0
    %2887 = vmatpush1.msra.mxu0 0.0
    %2888 = vmatprep.subr.mxu0 0.0
    %2889 = vmatpush1.msra.mxu0 0.0
    %2890 = vmatprep.subr.mxu0 0.0
    %2891 = vmatpush1.msra.mxu0 0.0
    %2892 = vmatprep.subr.mxu0 0.0
    %2893 = vmatpush1.msra.mxu0 0.0
    %2894 = vmatprep.subr.mxu0 0.0
    %2895 = vmatpush1.msra.mxu0 0.0
    %2896 = vmatprep.subr.mxu0 0.0
    %2897 = vmatpush1.msra.mxu0 0.0
    %2898 = vmatprep.subr.mxu0 0.0
    %2899 = vmatpush1.msra.mxu0 0.0
    %2900 = vmatprep.subr.mxu0 0.0
    %2901 = vmatpush1.msra.mxu0 0.0
    %2902 = vmatprep.subr.mxu0 0.0
    %2903 = vmatpush1.msra.mxu0 0.0
    %2904 = vmatprep.mubr.f32.mxu0 0.0
    %2905 = vmatmul.mubr.f32.gmra.mrb[0].mxu0 %v2793
    %v2906 = vpop.f32.mrb[0].mxu0
    %v2907 = vadd.f32 0.0, %v2906
    %v2908 = vpop.f32.mrb[0].mxu0
    %2909 = vmatprep.mubr.f32.mxu0 0.0
    %2910 = vmatmul.mubr.f32.gmra.mrb[0].mxu0 %v2796
    %v2911 = vpop.f32.mrb[0].mxu0
    %v2912 = vadd.f32 0.0, %v2911
    %v2913 = vpop.f32.mrb[0].mxu0
    %2914 = vmatprep.mubr.f32.mxu0 0.0
    %2915 = vmatmul.mubr.f32.gmra.mrb[0].mxu0 %v2799
    %v2916 = vpop.f32.mrb[0].mxu0
    %v2917 = vadd.f32 0.0, %v2916
    %v2918 = vpop.f32.mrb[0].mxu0
    %2919 = vmatprep.mubr.f32.mxu0 0.0
    %2920 = vmatmul.mubr.f32.gmra.mrb[0].mxu0 %v2802
    %v2921 = vpop.f32.mrb[0].mxu0
    %v2922 = vadd.f32 0.0, %v2921
    %v2923 = vpop.f32.mrb[0].mxu0
    %2924 = vmatprep.mubr.f32.mxu0 0.0
    %2925 = vmatmul.mubr.f32.gmra.mrb[0].mxu0 %v2805
    %v2926 = vpop.f32.mrb[0].mxu0
    %v2927 = vadd.f32 0.0, %v2926
    %v2928 = vpop.f32.mrb[0].mxu0
    %2929 = vmatprep.mubr.f32.mxu0 0.0
    %2930 = vmatmul.mubr.f32.gmra.mrb[0].mxu0 %v2808
    %v2931 = vpop.f32.mrb[0].mxu0
    %v2932 = vadd.f32 0.0, %v2931
    %v2933 = vpop.f32.mrb[0].mxu0
    %2934 = vmatprep.mubr.f32.mxu0 0.0
    %2935 = vmatmul.mubr.f32.gmra.mrb[0].mxu0 %v2811
    %v2936 = vpop.f32.mrb[0].mxu0
    %v2937 = vadd.f32 0.0, %v2936
    %v2938 = vpop.f32.mrb[0].mxu0
    %2939 = vmatprep.mubr.f32.mxu0 0.0
    %2940 = vmatmul.mubr.f32.gmra.mrb[0].mxu0 %v2814
    %v2941 = vpop.f32.mrb[0].mxu0
    %v2942 = vadd.f32 0.0, %v2941
    %v2943 = vpop.f32.mrb[0].mxu0
    %2944 = vmatprep.mubr.f32.mxu0 0.0
    %2945 = vmatmul.mubr.f32.gmra.mrb[0].mxu0 %v2817
    %v2946 = vpop.f32.mrb[0].mxu0
    %v2947 = vadd.f32 0.0, %v2946
    %v2948 = vpop.f32.mrb[0].mxu0
    %2949 = vmatprep.mubr.f32.mxu0 0.0
    %2950 = vmatmul.mubr.f32.gmra.mrb[0].mxu0 %v2820
    %v2951 = vpop.f32.mrb[0].mxu0
    %v2952 = vadd.f32 0.0, %v2951
    %v2953 = vpop.f32.mrb[0].mxu0
    %2954 = vmatprep.mubr.f32.mxu0 0.0
    %2955 = vmatmul.mubr.f32.gmra.mrb[0].mxu0 %v2823
    %v2956 = vpop.f32.mrb[0].mxu0
    %v2957 = vadd.f32 0.0, %v2956
    %v2958 = vpop.f32.mrb[0].mxu0
    %2959 = vmatprep.mubr.f32.mxu0 0.0
    %2960 = vmatmul.mubr.f32.gmra.mrb[0].mxu0 %v2826
    %v2961 = vpop.f32.mrb[0].mxu0
    %v2962 = vadd.f32 0.0, %v2961
    %v2963 = vpop.f32.mrb[0].mxu0
    %2964 = vmatprep.mubr.f32.mxu0 0.0
    %2965 = vmatmul.mubr.f32.gmra.mrb[0].mxu0 %v2829
    %v2966 = vpop.f32.mrb[0].mxu0
    %v2967 = vadd.f32 0.0, %v2966
    %v2968 = vpop.f32.mrb[0].mxu0
    %2969 = vmatprep.mubr.f32.mxu0 0.0
    %2970 = vmatmul.mubr.f32.gmra.mrb[0].mxu0 %v2832
    %v2971 = vpop.f32.mrb[0].mxu0
    %v2972 = vadd.f32 0.0, %v2971
    %v2973 = vpop.f32.mrb[0].mxu0
    %2974 = vmatprep.mubr.f32.mxu0 0.0
    %2975 = vmatmul.mubr.f32.gmra.mrb[0].mxu0 %v2835
    %v2976 = vpop.f32.mrb[0].mxu0
    %v2977 = vadd.f32 0.0, %v2976
    %v2978 = vpop.f32.mrb[0].mxu0
    %2979 = vmatprep.mubr.f32.mxu0 0.0
    %2980 = vmatmul.mubr.f32.gmra.mrb[0].mxu0 %v2838
    %v2981 = vpop.f32.mrb[0].mxu0
    %v2982 = vadd.f32 0.0, %v2981
    %v2983 = vpop.f32.mrb[0].mxu0
    %2984 = vdwg.mxu0
    %v2985 = vsub.f32 %v2662, %v2907
    %v2986 = vsub.f32 %v2663, %v2912
    %v2987 = vsub.f32 %v2664, %v2917
    %v2988 = vsub.f32 %v2665, %v2922
    %v2989 = vsub.f32 %v2666, %v2927
    %v2990 = vsub.f32 %v2667, %v2932
    %v2991 = vsub.f32 %v2668, %v2937
    %v2992 = vsub.f32 %v2669, %v2942
    %v2993 = vsub.f32 %v2670, %v2947
    %v2994 = vsub.f32 %v2671, %v2952
    %v2995 = vsub.f32 %v2672, %v2957
    %v2996 = vsub.f32 %v2673, %v2962
    %v2997 = vsub.f32 %v2674, %v2967
    %v2998 = vsub.f32 %v2675, %v2972
    %v2999 = vsub.f32 %v2676, %v2977
    %v3000 = vsub.f32 %v2677, %v2982
    %v3001 = vmul.f32 %v2985, %v2985
    %v3002 = vmul.f32 %v2986, %v2986
    %v3003 = vmul.f32 %v2987, %v2987
    %v3004 = vmul.f32 %v2988, %v2988
    %v3005 = vmul.f32 %v2989, %v2989
    %v3006 = vmul.f32 %v2990, %v2990
    %v3007 = vmul.f32 %v2991, %v2991
    %v3008 = vmul.f32 %v2992, %v2992
    %v3009 = vmul.f32 %v2993, %v2993
    %v3010 = vmul.f32 %v2994, %v2994
    %v3011 = vmul.f32 %v2995, %v2995
    %v3012 = vmul.f32 %v2996, %v2996
    %v3013 = vmul.f32 %v2997, %v2997
    %v3014 = vmul.f32 %v2998, %v2998
    %v3015 = vmul.f32 %v2999, %v2999
    %v3016 = vmul.f32 %v3000, %v3000
    %v3018 = vlaneseq
    %v3019 = vshrl.u32 %v3018, 7
    %v3020 = vsub.s32 0, %v3019
    %v3021 = vrot.slane %v82, %v3020
    %3024 = vset.pattern.permute.xlu0 0
    %3025 = vperm.xlu0 %3024, %v83
    %v3026 = vpop.permute.xlu0 %3025
    %3029 = vset.pattern.permute.xlu0 0
    %3030 = vperm.xlu0 %3029, %v84
    %v3031 = vpop.permute.xlu0 %3030
    %3034 = vset.pattern.permute.xlu0 0
    %3035 = vperm.xlu0 %3034, %v85
    %v3036 = vpop.permute.xlu0 %3035
    %3039 = vset.pattern.permute.xlu0 0
    %3040 = vperm.xlu0 %3039, %v86
    %v3041 = vpop.permute.xlu0 %3040
    %3044 = vset.pattern.permute.xlu0 0
    %3045 = vperm.xlu0 %3044, %v87
    %v3046 = vpop.permute.xlu0 %3045
    %3049 = vset.pattern.permute.xlu0 0
    %3050 = vperm.xlu0 %3049, %v88
    %v3051 = vpop.permute.xlu0 %3050
    %3054 = vset.pattern.permute.xlu0 0
    %3055 = vperm.xlu0 %3054, %v89
    %v3056 = vpop.permute.xlu0 %3055
    %3059 = vset.pattern.permute.xlu0 0
    %3060 = vperm.xlu0 %3059, %v90
    %v3061 = vpop.permute.xlu0 %3060
    %3064 = vset.pattern.permute.xlu0 0
    %3065 = vperm.xlu0 %3064, %v91
    %v3066 = vpop.permute.xlu0 %3065
    %3069 = vset.pattern.permute.xlu0 0
    %3070 = vperm.xlu0 %3069, %v92
    %v3071 = vpop.permute.xlu0 %3070
    %3074 = vset.pattern.permute.xlu0 0
    %3075 = vperm.xlu0 %3074, %v93
    %v3076 = vpop.permute.xlu0 %3075
    %3079 = vset.pattern.permute.xlu0 0
    %3080 = vperm.xlu0 %3079, %v94
    %v3081 = vpop.permute.xlu0 %3080
    %3084 = vset.pattern.permute.xlu0 0
    %3085 = vperm.xlu0 %3084, %v95
    %v3086 = vpop.permute.xlu0 %3085
    %3089 = vset.pattern.permute.xlu0 0
    %3090 = vperm.xlu0 %3089, %v96
    %v3091 = vpop.permute.xlu0 %3090
    %3094 = vset.pattern.permute.xlu0 0
    %3095 = vperm.xlu0 %3094, %v97
    %v3096 = vpop.permute.xlu0 %3095
    %3099 = vset.pattern.permute.xlu0 0
    %3100 = vperm.xlu0 %3099, %v98
    %v3101 = vpop.permute.xlu0 %3100
    %vm3103 = vcmp.eq.f32.partialorder %v3021, %v3026
    %vm3104 = vcmp.eq.f32.partialorder %v3021, %v3031
    %vm3105 = vcmp.eq.f32.partialorder %v3021, %v3036
    %vm3106 = vcmp.eq.f32.partialorder %v3021, %v3041
    %vm3107 = vcmp.eq.f32.partialorder %v3021, %v3046
    %vm3108 = vcmp.eq.f32.partialorder %v3021, %v3051
    %vm3109 = vcmp.eq.f32.partialorder %v3021, %v3056
    %vm3110 = vcmp.eq.f32.partialorder %v3021, %v3061
    %vm3111 = vcmp.eq.f32.partialorder %v3021, %v3066
    %vm3112 = vcmp.eq.f32.partialorder %v3021, %v3071
    %vm3113 = vcmp.eq.f32.partialorder %v3021, %v3076
    %vm3114 = vcmp.eq.f32.partialorder %v3021, %v3081
    %vm3115 = vcmp.eq.f32.partialorder %v3021, %v3086
    %vm3116 = vcmp.eq.f32.partialorder %v3021, %v3091
    %vm3117 = vcmp.eq.f32.partialorder %v3021, %v3096
    %vm3118 = vcmp.eq.f32.partialorder %v3021, %v3101
    %vm3119 = vcmp.lt.s32.totalorder %v100, %v235
    %vm3120 = vcmp.lt.s32.totalorder %v100, %v236
    %vm3121 = vcmp.lt.s32.totalorder %v100, %v237
    %vm3122 = vcmp.lt.s32.totalorder %v100, %v238
    %vm3123 = vcmp.lt.s32.totalorder %v100, %v239
    %vm3124 = vcmp.lt.s32.totalorder %v100, %v240
    %vm3125 = vcmp.lt.s32.totalorder %v100, %v241
    %vm3126 = vcmp.lt.s32.totalorder %v100, %v242
    %vm3127 = vcmp.lt.s32.totalorder %v100, %v243
    %vm3128 = vcmp.lt.s32.totalorder %v100, %v244
    %vm3129 = vcmp.lt.s32.totalorder %v100, %v245
    %vm3130 = vcmp.lt.s32.totalorder %v100, %v246
    %vm3131 = vcmp.lt.s32.totalorder %v100, %v247
    %vm3132 = vcmp.lt.s32.totalorder %v100, %v248
    %vm3133 = vcmp.lt.s32.totalorder %v100, %v249
    %vm3134 = vcmp.lt.s32.totalorder %v100, %v250
    %vm3135 = vmand %vm3103, %vm3119
    %vm3136 = vmand %vm3104, %vm3120
    %vm3137 = vmand %vm3105, %vm3121
    %vm3138 = vmand %vm3106, %vm3122
    %vm3139 = vmand %vm3107, %vm3123
    %vm3140 = vmand %vm3108, %vm3124
    %vm3141 = vmand %vm3109, %vm3125
    %vm3142 = vmand %vm3110, %vm3126
    %vm3143 = vmand %vm3111, %vm3127
    %vm3144 = vmand %vm3112, %vm3128
    %vm3145 = vmand %vm3113, %vm3129
    %vm3146 = vmand %vm3114, %vm3130
    %vm3147 = vmand %vm3115, %vm3131
    %vm3148 = vmand %vm3116, %vm3132
    %vm3149 = vmand %vm3117, %vm3133
    %vm3150 = vmand %vm3118, %vm3134
    %v3151 = vsub.f32 %v2907, 1.0
    %v3152 = vsub.f32 %v2912, 1.0
    %v3153 = vsub.f32 %v2917, 1.0
    %v3154 = vsub.f32 %v2922, 1.0
    %v3155 = vsub.f32 %v2927, 1.0
    %v3156 = vsub.f32 %v2932, 1.0
    %v3157 = vsub.f32 %v2937, 1.0
    %v3158 = vsub.f32 %v2942, 1.0
    %v3159 = vsub.f32 %v2947, 1.0
    %v3160 = vsub.f32 %v2952, 1.0
    %v3161 = vsub.f32 %v2957, 1.0
    %v3162 = vsub.f32 %v2962, 1.0
    %v3163 = vsub.f32 %v2967, 1.0
    %v3164 = vsub.f32 %v2972, 1.0
    %v3165 = vsub.f32 %v2977, 1.0
    %v3166 = vsub.f32 %v2982, 1.0
    %v3167 = vmul.f32 %v3151, 0.5
    %v3168 = vmul.f32 %v3152, 0.5
    %v3169 = vmul.f32 %v3153, 0.5
    %v3170 = vmul.f32 %v3154, 0.5
    %v3171 = vmul.f32 %v3155, 0.5
    %v3172 = vmul.f32 %v3156, 0.5
    %v3173 = vmul.f32 %v3157, 0.5
    %v3174 = vmul.f32 %v3158, 0.5
    %v3175 = vmul.f32 %v3159, 0.5
    %v3176 = vmul.f32 %v3160, 0.5
    %v3177 = vmul.f32 %v3161, 0.5
    %v3178 = vmul.f32 %v3162, 0.5
    %v3179 = vmul.f32 %v3163, 0.5
    %v3180 = vmul.f32 %v3164, 0.5
    %v3181 = vmul.f32 %v3165, 0.5
    %v3182 = vmul.f32 %v3166, 0.5
    %v3183 = vfloor.f32 %v3167
    %v3184 = vfloor.f32 %v3168
    %v3185 = vfloor.f32 %v3169
    %v3186 = vfloor.f32 %v3170
    %v3187 = vfloor.f32 %v3171
    %v3188 = vfloor.f32 %v3172
    %v3189 = vfloor.f32 %v3173
    %v3190 = vfloor.f32 %v3174
    %v3191 = vfloor.f32 %v3175
    %v3192 = vfloor.f32 %v3176
    %v3193 = vfloor.f32 %v3177
    %v3194 = vfloor.f32 %v3178
    %v3195 = vfloor.f32 %v3179
    %v3196 = vfloor.f32 %v3180
    %v3197 = vfloor.f32 %v3181
    %v3198 = vfloor.f32 %v3182
    %3199 = vxpose.xlu0.b32.start [1/16] %v2662, 128
    %3200 = vxpose.xlu0.b32.cont [2/16] %v2663, 128
    %3201 = vxpose.xlu0.b32.cont [3/16] %v2664, 128
    %3202 = vxpose.xlu0.b32.cont [4/16] %v2665, 128
    %3203 = vxpose.xlu0.b32.cont [5/16] %v2666, 128
    %3204 = vxpose.xlu0.b32.cont [6/16] %v2667, 128
    %3205 = vxpose.xlu0.b32.cont [7/16] %v2668, 128
    %3206 = vxpose.xlu0.b32.cont [8/16] %v2669, 128
    %3207 = vxpose.xlu0.b32.cont [9/16] %v2670, 128
    %3208 = vxpose.xlu0.b32.cont [10/16] %v2671, 128
    %3209 = vxpose.xlu0.b32.cont [11/16] %v2672, 128
    %3210 = vxpose.xlu0.b32.cont [12/16] %v2673, 128
    %3211 = vxpose.xlu0.b32.cont [13/16] %v2674, 128
    %3212 = vxpose.xlu0.b32.cont [14/16] %v2675, 128
    %3213 = vxpose.xlu0.b32.cont [15/16] %v2676, 128
    %3214 = vxpose.xlu0.b32.end [16/16] %v2677, 128
    %v3215 = vpop.trf.xlu0
    %v3216 = vpop.trf.xlu0
    %v3217 = vpop.trf.xlu0
    %v3218 = vpop.trf.xlu0
    %v3219 = vpop.trf.xlu0
    %v3220 = vpop.trf.xlu0
    %v3221 = vpop.trf.xlu0
    %v3222 = vpop.trf.xlu0
    %v3223 = vpop.trf.xlu0
    %v3224 = vpop.trf.xlu0
    %v3225 = vpop.trf.xlu0
    %v3226 = vpop.trf.xlu0
    %v3227 = vpop.trf.xlu0
    %v3228 = vpop.trf.xlu0
    %v3229 = vpop.trf.xlu0
    %v3230 = vpop.trf.xlu0
    %v3231 = vlaneseq
    %v3232 = vshrl.u32 %v3231, 7
    %v3233 = vsub.s32 0, %v3232
    %v3234 = vrot.slane %v3215, %v3233
    %vm3235 = vcmp.lt.f32.partialorder %v3234, %v1983
    %vm3236 = vcmp.lt.f32.partialorder %v3234, %v1987
    %vm3237 = vcmp.lt.f32.partialorder %v3234, %v1991
    %vm3238 = vcmp.lt.f32.partialorder %v3234, %v1995
    %vm3239 = vcmp.lt.f32.partialorder %v3234, %v1999
    %vm3240 = vcmp.lt.f32.partialorder %v3234, %v2003
    %vm3241 = vcmp.lt.f32.partialorder %v3234, %v2007
    %vm3242 = vcmp.lt.f32.partialorder %v3234, %v2011
    %vm3243 = vcmp.lt.f32.partialorder %v3234, %v2015
    %vm3244 = vcmp.lt.f32.partialorder %v3234, %v2019
    %vm3245 = vcmp.lt.f32.partialorder %v3234, %v2023
    %vm3246 = vcmp.lt.f32.partialorder %v3234, %v2027
    %vm3247 = vcmp.lt.f32.partialorder %v3234, %v2031
    %vm3248 = vcmp.lt.f32.partialorder %v3234, %v2035
    %vm3249 = vcmp.lt.f32.partialorder %v3234, %v2039
    %vm3250 = vcmp.lt.f32.partialorder %v3234, %v2043
    %vm3251 = vmand %vm3103, %vm3235
    %vm3252 = vmand %vm3104, %vm3236
    %vm3253 = vmand %vm3105, %vm3237
    %vm3254 = vmand %vm3106, %vm3238
    %vm3255 = vmand %vm3107, %vm3239
    %vm3256 = vmand %vm3108, %vm3240
    %vm3257 = vmand %vm3109, %vm3241
    %vm3258 = vmand %vm3110, %vm3242
    %vm3259 = vmand %vm3111, %vm3243
    %vm3260 = vmand %vm3112, %vm3244
    %vm3261 = vmand %vm3113, %vm3245
    %vm3262 = vmand %vm3114, %vm3246
    %vm3263 = vmand %vm3115, %vm3247
    %vm3264 = vmand %vm3116, %vm3248
    %vm3265 = vmand %vm3117, %vm3249
    %vm3266 = vmand %vm3118, %vm3250
    %vm3267 = vcmp.eq.f32.partialorder %v3234, %v1983
    %vm3268 = vcmp.eq.f32.partialorder %v3234, %v1987
    %vm3269 = vcmp.eq.f32.partialorder %v3234, %v1991
    %vm3270 = vcmp.eq.f32.partialorder %v3234, %v1995
    %vm3271 = vcmp.eq.f32.partialorder %v3234, %v1999
    %vm3272 = vcmp.eq.f32.partialorder %v3234, %v2003
    %vm3273 = vcmp.eq.f32.partialorder %v3234, %v2007
    %vm3274 = vcmp.eq.f32.partialorder %v3234, %v2011
    %vm3275 = vcmp.eq.f32.partialorder %v3234, %v2015
    %vm3276 = vcmp.eq.f32.partialorder %v3234, %v2019
    %vm3277 = vcmp.eq.f32.partialorder %v3234, %v2023
    %vm3278 = vcmp.eq.f32.partialorder %v3234, %v2027
    %vm3279 = vcmp.eq.f32.partialorder %v3234, %v2031
    %vm3280 = vcmp.eq.f32.partialorder %v3234, %v2035
    %vm3281 = vcmp.eq.f32.partialorder %v3234, %v2039
    %vm3282 = vcmp.eq.f32.partialorder %v3234, %v2043
    %vm3283 = vmand %vm3135, %vm3267
    %vm3284 = vmand %vm3136, %vm3268
    %vm3285 = vmand %vm3137, %vm3269
    %vm3286 = vmand %vm3138, %vm3270
    %vm3287 = vmand %vm3139, %vm3271
    %vm3288 = vmand %vm3140, %vm3272
    %vm3289 = vmand %vm3141, %vm3273
    %vm3290 = vmand %vm3142, %vm3274
    %vm3291 = vmand %vm3143, %vm3275
    %vm3292 = vmand %vm3144, %vm3276
    %vm3293 = vmand %vm3145, %vm3277
    %vm3294 = vmand %vm3146, %vm3278
    %vm3295 = vmand %vm3147, %vm3279
    %vm3296 = vmand %vm3148, %vm3280
    %vm3297 = vmand %vm3149, %vm3281
    %vm3298 = vmand %vm3150, %vm3282
    %vm3299 = vmor %vm3251, %vm3283
    %vm3300 = vmor %vm3252, %vm3284
    %vm3301 = vmor %vm3253, %vm3285
    %vm3302 = vmor %vm3254, %vm3286
    %vm3303 = vmor %vm3255, %vm3287
    %vm3304 = vmor %vm3256, %vm3288
    %vm3305 = vmor %vm3257, %vm3289
    %vm3306 = vmor %vm3258, %vm3290
    %vm3307 = vmor %vm3259, %vm3291
    %vm3308 = vmor %vm3260, %vm3292
    %vm3309 = vmor %vm3261, %vm3293
    %vm3310 = vmor %vm3262, %vm3294
    %vm3311 = vmor %vm3263, %vm3295
    %vm3312 = vmor %vm3264, %vm3296
    %vm3313 = vmor %vm3265, %vm3297
    %vm3314 = vmor %vm3266, %vm3298
    %v3315 = vsel %vm3299, 1, 0
    %v3316 = vsel %vm3300, 1, 0
    %v3317 = vsel %vm3301, 1, 0
    %v3318 = vsel %vm3302, 1, 0
    %v3319 = vsel %vm3303, 1, 0
    %v3320 = vsel %vm3304, 1, 0
    %v3321 = vsel %vm3305, 1, 0
    %v3322 = vsel %vm3306, 1, 0
    %v3323 = vsel %vm3307, 1, 0
    %v3324 = vsel %vm3308, 1, 0
    %v3325 = vsel %vm3309, 1, 0
    %v3326 = vsel %vm3310, 1, 0
    %v3327 = vsel %vm3311, 1, 0
    %v3328 = vsel %vm3312, 1, 0
    %v3329 = vsel %vm3313, 1, 0
    %v3330 = vsel %vm3314, 1, 0
    %v3331 = vcvt.s32.f32 %v3315
    %v3332 = vcvt.s32.f32 %v3316
    %v3333 = vcvt.s32.f32 %v3317
    %v3334 = vcvt.s32.f32 %v3318
    %v3335 = vcvt.s32.f32 %v3319
    %v3336 = vcvt.s32.f32 %v3320
    %v3337 = vcvt.s32.f32 %v3321
    %v3338 = vcvt.s32.f32 %v3322
    %v3339 = vcvt.s32.f32 %v3323
    %v3340 = vcvt.s32.f32 %v3324
    %v3341 = vcvt.s32.f32 %v3325
    %v3342 = vcvt.s32.f32 %v3326
    %v3343 = vcvt.s32.f32 %v3327
    %v3344 = vcvt.s32.f32 %v3328
    %v3345 = vcvt.s32.f32 %v3329
    %v3346 = vcvt.s32.f32 %v3330
    %3347 = vadd.xlane.f32.xlu0 %v3331
    %v3348 = vpop.xlane.xlu0 %3347
    %3349 = vadd.xlane.f32.xlu0 %v3332
    %v3350 = vpop.xlane.xlu0 %3349
    %3351 = vadd.xlane.f32.xlu0 %v3333
    %v3352 = vpop.xlane.xlu0 %3351
    %3353 = vadd.xlane.f32.xlu0 %v3334
    %v3354 = vpop.xlane.xlu0 %3353
    %3355 = vadd.xlane.f32.xlu0 %v3335
    %v3356 = vpop.xlane.xlu0 %3355
    %3357 = vadd.xlane.f32.xlu0 %v3336
    %v3358 = vpop.xlane.xlu0 %3357
    %3359 = vadd.xlane.f32.xlu0 %v3337
    %v3360 = vpop.xlane.xlu0 %3359
    %3361 = vadd.xlane.f32.xlu0 %v3338
    %v3362 = vpop.xlane.xlu0 %3361
    %3363 = vadd.xlane.f32.xlu0 %v3339
    %v3364 = vpop.xlane.xlu0 %3363
    %3365 = vadd.xlane.f32.xlu0 %v3340
    %v3366 = vpop.xlane.xlu0 %3365
    %3367 = vadd.xlane.f32.xlu0 %v3341
    %v3368 = vpop.xlane.xlu0 %3367
    %3369 = vadd.xlane.f32.xlu0 %v3342
    %v3370 = vpop.xlane.xlu0 %3369
    %3371 = vadd.xlane.f32.xlu0 %v3343
    %v3372 = vpop.xlane.xlu0 %3371
    %3373 = vadd.xlane.f32.xlu0 %v3344
    %v3374 = vpop.xlane.xlu0 %3373
    %3375 = vadd.xlane.f32.xlu0 %v3345
    %v3376 = vpop.xlane.xlu0 %3375
    %3377 = vadd.xlane.f32.xlu0 %v3346
    %v3378 = vpop.xlane.xlu0 %3377
    %vm3379 = vcmp.eq.f32.partialorder %v3348, %v3183
    %vm3380 = vcmp.eq.f32.partialorder %v3350, %v3184
    %vm3381 = vcmp.eq.f32.partialorder %v3352, %v3185
    %vm3382 = vcmp.eq.f32.partialorder %v3354, %v3186
    %vm3383 = vcmp.eq.f32.partialorder %v3356, %v3187
    %vm3384 = vcmp.eq.f32.partialorder %v3358, %v3188
    %vm3385 = vcmp.eq.f32.partialorder %v3360, %v3189
    %vm3386 = vcmp.eq.f32.partialorder %v3362, %v3190
    %vm3387 = vcmp.eq.f32.partialorder %v3364, %v3191
    %vm3388 = vcmp.eq.f32.partialorder %v3366, %v3192
    %vm3389 = vcmp.eq.f32.partialorder %v3368, %v3193
    %vm3390 = vcmp.eq.f32.partialorder %v3370, %v3194
    %vm3391 = vcmp.eq.f32.partialorder %v3372, %v3195
    %vm3392 = vcmp.eq.f32.partialorder %v3374, %v3196
    %vm3393 = vcmp.eq.f32.partialorder %v3376, %v3197
    %vm3394 = vcmp.eq.f32.partialorder %v3378, %v3198
    %v3395 = vsel %vm3379, 1, 0
    %v3396 = vsel %vm3380, 1, 0
    %v3397 = vsel %vm3381, 1, 0
    %v3398 = vsel %vm3382, 1, 0
    %v3399 = vsel %vm3383, 1, 0
    %v3400 = vsel %vm3384, 1, 0
    %v3401 = vsel %vm3385, 1, 0
    %v3402 = vsel %vm3386, 1, 0
    %v3403 = vsel %vm3387, 1, 0
    %v3404 = vsel %vm3388, 1, 0
    %v3405 = vsel %vm3389, 1, 0
    %v3406 = vsel %vm3390, 1, 0
    %v3407 = vsel %vm3391, 1, 0
    %v3408 = vsel %vm3392, 1, 0
    %v3409 = vsel %vm3393, 1, 0
    %v3410 = vsel %vm3394, 1, 0
    %v3411 = vcvt.s32.f32 %v3395
    %v3412 = vcvt.s32.f32 %v3396
    %v3413 = vcvt.s32.f32 %v3397
    %v3414 = vcvt.s32.f32 %v3398
    %v3415 = vcvt.s32.f32 %v3399
    %v3416 = vcvt.s32.f32 %v3400
    %v3417 = vcvt.s32.f32 %v3401
    %v3418 = vcvt.s32.f32 %v3402
    %v3419 = vcvt.s32.f32 %v3403
    %v3420 = vcvt.s32.f32 %v3404
    %v3421 = vcvt.s32.f32 %v3405
    %v3422 = vcvt.s32.f32 %v3406
    %v3423 = vcvt.s32.f32 %v3407
    %v3424 = vcvt.s32.f32 %v3408
    %v3425 = vcvt.s32.f32 %v3409
    %v3426 = vcvt.s32.f32 %v3410
    %3443 = vrot.lane.b32.xlu0 %v3411, 121
    %v3444 = vpop.permute.xlu0 %3443
    %3445 = vrot.lane.b32.xlu0 %v3412, 121
    %v3446 = vpop.permute.xlu0 %3445
    %3447 = vrot.lane.b32.xlu0 %v3413, 121
    %v3448 = vpop.permute.xlu0 %3447
    %3449 = vrot.lane.b32.xlu0 %v3414, 121
    %v3450 = vpop.permute.xlu0 %3449
    %3451 = vrot.lane.b32.xlu0 %v3415, 121
    %v3452 = vpop.permute.xlu0 %3451
    %3453 = vrot.lane.b32.xlu0 %v3416, 121
    %v3454 = vpop.permute.xlu0 %3453
    %3455 = vrot.lane.b32.xlu0 %v3417, 121
    %v3456 = vpop.permute.xlu0 %3455
    %3457 = vrot.lane.b32.xlu0 %v3418, 121
    %v3458 = vpop.permute.xlu0 %3457
    %3459 = vrot.lane.b32.xlu0 %v3419, 121
    %v3460 = vpop.permute.xlu0 %3459
    %3461 = vrot.lane.b32.xlu0 %v3420, 121
    %v3462 = vpop.permute.xlu0 %3461
    %3463 = vrot.lane.b32.xlu0 %v3421, 121
    %v3464 = vpop.permute.xlu0 %3463
    %3465 = vrot.lane.b32.xlu0 %v3422, 121
    %v3466 = vpop.permute.xlu0 %3465
    %3467 = vrot.lane.b32.xlu0 %v3423, 121
    %v3468 = vpop.permute.xlu0 %3467
    %3469 = vrot.lane.b32.xlu0 %v3424, 121
    %v3470 = vpop.permute.xlu0 %3469
    %3471 = vrot.lane.b32.xlu0 %v3425, 121
    %v3472 = vpop.permute.xlu0 %3471
    %3473 = vrot.lane.b32.xlu0 %v3426, 121
    %v3474 = vpop.permute.xlu0 %3473
    %v3491 = vmul.f32 %v140, %v3444
    %v3492 = vmul.f32 %v143, %v3446
    %v3493 = vmul.f32 %v148, %v3448
    %v3494 = vmul.f32 %v151, %v3450
    %v3495 = vmul.f32 %v156, %v3452
    %v3496 = vmul.f32 %v159, %v3454
    %v3497 = vmul.f32 %v164, %v3456
    %v3498 = vmul.f32 %v167, %v3458
    %v3499 = vmul.f32 %v172, %v3460
    %v3500 = vmul.f32 %v175, %v3462
    %v3501 = vmul.f32 %v180, %v3464
    %v3502 = vmul.f32 %v183, %v3466
    %v3503 = vmul.f32 %v188, %v3468
    %v3504 = vmul.f32 %v191, %v3470
    %v3505 = vmul.f32 %v196, %v3472
    %v3506 = vmul.f32 %v199, %v3474
    %3508 = vset.pattern.permute.xlu0 0
    %3509 = vperm.xlu0 %3508, %v3491
    %v3510 = vpop.permute.xlu0 %3509
    %3513 = vset.pattern.permute.xlu0 0
    %3514 = vperm.xlu0 %3513, %v3492
    %v3515 = vpop.permute.xlu0 %3514
    %3518 = vset.pattern.permute.xlu0 0
    %3519 = vperm.xlu0 %3518, %v3493
    %v3520 = vpop.permute.xlu0 %3519
    %3523 = vset.pattern.permute.xlu0 0
    %3524 = vperm.xlu0 %3523, %v3494
    %v3525 = vpop.permute.xlu0 %3524
    %3528 = vset.pattern.permute.xlu0 0
    %3529 = vperm.xlu0 %3528, %v3495
    %v3530 = vpop.permute.xlu0 %3529
    %3533 = vset.pattern.permute.xlu0 0
    %3534 = vperm.xlu0 %3533, %v3496
    %v3535 = vpop.permute.xlu0 %3534
    %3538 = vset.pattern.permute.xlu0 0
    %3539 = vperm.xlu0 %3538, %v3497
    %v3540 = vpop.permute.xlu0 %3539
    %3543 = vset.pattern.permute.xlu0 0
    %3544 = vperm.xlu0 %3543, %v3498
    %v3545 = vpop.permute.xlu0 %3544
    %3548 = vset.pattern.permute.xlu0 0
    %3549 = vperm.xlu0 %3548, %v3499
    %v3550 = vpop.permute.xlu0 %3549
    %3553 = vset.pattern.permute.xlu0 0
    %3554 = vperm.xlu0 %3553, %v3500
    %v3555 = vpop.permute.xlu0 %3554
    %3558 = vset.pattern.permute.xlu0 0
    %3559 = vperm.xlu0 %3558, %v3501
    %v3560 = vpop.permute.xlu0 %3559
    %3563 = vset.pattern.permute.xlu0 0
    %3564 = vperm.xlu0 %3563, %v3502
    %v3565 = vpop.permute.xlu0 %3564
    %3568 = vset.pattern.permute.xlu0 0
    %3569 = vperm.xlu0 %3568, %v3503
    %v3570 = vpop.permute.xlu0 %3569
    %3573 = vset.pattern.permute.xlu0 0
    %3574 = vperm.xlu0 %3573, %v3504
    %v3575 = vpop.permute.xlu0 %3574
    %3578 = vset.pattern.permute.xlu0 0
    %3579 = vperm.xlu0 %3578, %v3505
    %v3580 = vpop.permute.xlu0 %3579
    %3583 = vset.pattern.permute.xlu0 0
    %3584 = vperm.xlu0 %3583, %v3506
    %v3585 = vpop.permute.xlu0 %3584
    %v3587 = vmul.f32 %v3510, %v103
    %v3588 = vmul.f32 %v3515, %v103
    %v3589 = vmul.f32 %v3520, %v103
    %v3590 = vmul.f32 %v3525, %v103
    %v3591 = vmul.f32 %v3530, %v103
    %v3592 = vmul.f32 %v3535, %v103
    %v3593 = vmul.f32 %v3540, %v103
    %v3594 = vmul.f32 %v3545, %v103
    %v3595 = vmul.f32 %v3550, %v103
    %v3596 = vmul.f32 %v3555, %v103
    %v3597 = vmul.f32 %v3560, %v103
    %v3598 = vmul.f32 %v3565, %v103
    %v3599 = vmul.f32 %v3570, %v103
    %v3600 = vmul.f32 %v3575, %v103
    %v3601 = vmul.f32 %v3580, %v103
    %v3602 = vmul.f32 %v3585, %v103
    %v3603 = vadd.f32 %v3587, 0.0
    %v3604 = vadd.f32 %v3588, 0.0
    %v3605 = vadd.f32 %v3589, 0.0
    %v3606 = vadd.f32 %v3590, 0.0
    %v3607 = vadd.f32 %v3591, 0.0
    %v3608 = vadd.f32 %v3592, 0.0
    %v3609 = vadd.f32 %v3593, 0.0
    %v3610 = vadd.f32 %v3594, 0.0
    %v3611 = vadd.f32 %v3595, 0.0
    %v3612 = vadd.f32 %v3596, 0.0
    %v3613 = vadd.f32 %v3597, 0.0
    %v3614 = vadd.f32 %v3598, 0.0
    %v3615 = vadd.f32 %v3599, 0.0
    %v3616 = vadd.f32 %v3600, 0.0
    %v3617 = vadd.f32 %v3601, 0.0
    %v3618 = vadd.f32 %v3602, 0.0
    %v3619 = vlaneseq
    %v3620 = vshrl.u32 %v3619, 7
    %v3621 = vsub.s32 1, %v3620
    %v3622 = vrot.slane %v3215, %v3621
    %vm3623 = vcmp.lt.f32.partialorder %v3622, %v2080
    %vm3624 = vcmp.lt.f32.partialorder %v3622, %v2085
    %vm3625 = vcmp.lt.f32.partialorder %v3622, %v2090
    %vm3626 = vcmp.lt.f32.partialorder %v3622, %v2095
    %vm3627 = vcmp.lt.f32.partialorder %v3622, %v2100
    %vm3628 = vcmp.lt.f32.partialorder %v3622, %v2105
    %vm3629 = vcmp.lt.f32.partialorder %v3622, %v2110
    %vm3630 = vcmp.lt.f32.partialorder %v3622, %v2115
    %vm3631 = vcmp.lt.f32.partialorder %v3622, %v2120
    %vm3632 = vcmp.lt.f32.partialorder %v3622, %v2125
    %vm3633 = vcmp.lt.f32.partialorder %v3622, %v2130
    %vm3634 = vcmp.lt.f32.partialorder %v3622, %v2135
    %vm3635 = vcmp.lt.f32.partialorder %v3622, %v2140
    %vm3636 = vcmp.lt.f32.partialorder %v3622, %v2145
    %vm3637 = vcmp.lt.f32.partialorder %v3622, %v2150
    %vm3638 = vcmp.lt.f32.partialorder %v3622, %v2155
    %vm3639 = vmand %vm3103, %vm3623
    %vm3640 = vmand %vm3104, %vm3624
    %vm3641 = vmand %vm3105, %vm3625
    %vm3642 = vmand %vm3106, %vm3626
    %vm3643 = vmand %vm3107, %vm3627
    %vm3644 = vmand %vm3108, %vm3628
    %vm3645 = vmand %vm3109, %vm3629
    %vm3646 = vmand %vm3110, %vm3630
    %vm3647 = vmand %vm3111, %vm3631
    %vm3648 = vmand %vm3112, %vm3632
    %vm3649 = vmand %vm3113, %vm3633
    %vm3650 = vmand %vm3114, %vm3634
    %vm3651 = vmand %vm3115, %vm3635
    %vm3652 = vmand %vm3116, %vm3636
    %vm3653 = vmand %vm3117, %vm3637
    %vm3654 = vmand %vm3118, %vm3638
    %vm3655 = vcmp.eq.f32.partialorder %v3622, %v2080
    %vm3656 = vcmp.eq.f32.partialorder %v3622, %v2085
    %vm3657 = vcmp.eq.f32.partialorder %v3622, %v2090
    %vm3658 = vcmp.eq.f32.partialorder %v3622, %v2095
    %vm3659 = vcmp.eq.f32.partialorder %v3622, %v2100
    %vm3660 = vcmp.eq.f32.partialorder %v3622, %v2105
    %vm3661 = vcmp.eq.f32.partialorder %v3622, %v2110
    %vm3662 = vcmp.eq.f32.partialorder %v3622, %v2115
    %vm3663 = vcmp.eq.f32.partialorder %v3622, %v2120
    %vm3664 = vcmp.eq.f32.partialorder %v3622, %v2125
    %vm3665 = vcmp.eq.f32.partialorder %v3622, %v2130
    %vm3666 = vcmp.eq.f32.partialorder %v3622, %v2135
    %vm3667 = vcmp.eq.f32.partialorder %v3622, %v2140
    %vm3668 = vcmp.eq.f32.partialorder %v3622, %v2145
    %vm3669 = vcmp.eq.f32.partialorder %v3622, %v2150
    %vm3670 = vcmp.eq.f32.partialorder %v3622, %v2155
    %vm3671 = vmand %vm3135, %vm3655
    %vm3672 = vmand %vm3136, %vm3656
    %vm3673 = vmand %vm3137, %vm3657
    %vm3674 = vmand %vm3138, %vm3658
    %vm3675 = vmand %vm3139, %vm3659
    %vm3676 = vmand %vm3140, %vm3660
    %vm3677 = vmand %vm3141, %vm3661
    %vm3678 = vmand %vm3142, %vm3662
    %vm3679 = vmand %vm3143, %vm3663
    %vm3680 = vmand %vm3144, %vm3664
    %vm3681 = vmand %vm3145, %vm3665
    %vm3682 = vmand %vm3146, %vm3666
    %vm3683 = vmand %vm3147, %vm3667
    %vm3684 = vmand %vm3148, %vm3668
    %vm3685 = vmand %vm3149, %vm3669
    %vm3686 = vmand %vm3150, %vm3670
    %vm3687 = vmor %vm3639, %vm3671
    %vm3688 = vmor %vm3640, %vm3672
    %vm3689 = vmor %vm3641, %vm3673
    %vm3690 = vmor %vm3642, %vm3674
    %vm3691 = vmor %vm3643, %vm3675
    %vm3692 = vmor %vm3644, %vm3676
    %vm3693 = vmor %vm3645, %vm3677
    %vm3694 = vmor %vm3646, %vm3678
    %vm3695 = vmor %vm3647, %vm3679
    %vm3696 = vmor %vm3648, %vm3680
    %vm3697 = vmor %vm3649, %vm3681
    %vm3698 = vmor %vm3650, %vm3682
    %vm3699 = vmor %vm3651, %vm3683
    %vm3700 = vmor %vm3652, %vm3684
    %vm3701 = vmor %vm3653, %vm3685
    %vm3702 = vmor %vm3654, %vm3686
    %v3703 = vsel %vm3687, 1, 0
    %v3704 = vsel %vm3688, 1, 0
    %v3705 = vsel %vm3689, 1, 0
    %v3706 = vsel %vm3690, 1, 0
    %v3707 = vsel %vm3691, 1, 0
    %v3708 = vsel %vm3692, 1, 0
    %v3709 = vsel %vm3693, 1, 0
    %v3710 = vsel %vm3694, 1, 0
    %v3711 = vsel %vm3695, 1, 0
    %v3712 = vsel %vm3696, 1, 0
    %v3713 = vsel %vm3697, 1, 0
    %v3714 = vsel %vm3698, 1, 0
    %v3715 = vsel %vm3699, 1, 0
    %v3716 = vsel %vm3700, 1, 0
    %v3717 = vsel %vm3701, 1, 0
    %v3718 = vsel %vm3702, 1, 0
    %v3719 = vcvt.s32.f32 %v3703
    %v3720 = vcvt.s32.f32 %v3704
    %v3721 = vcvt.s32.f32 %v3705
    %v3722 = vcvt.s32.f32 %v3706
    %v3723 = vcvt.s32.f32 %v3707
    %v3724 = vcvt.s32.f32 %v3708
    %v3725 = vcvt.s32.f32 %v3709
    %v3726 = vcvt.s32.f32 %v3710
    %v3727 = vcvt.s32.f32 %v3711
    %v3728 = vcvt.s32.f32 %v3712
    %v3729 = vcvt.s32.f32 %v3713
    %v3730 = vcvt.s32.f32 %v3714
    %v3731 = vcvt.s32.f32 %v3715
    %v3732 = vcvt.s32.f32 %v3716
    %v3733 = vcvt.s32.f32 %v3717
    %v3734 = vcvt.s32.f32 %v3718
    %3735 = vadd.xlane.f32.xlu0 %v3719
    %v3736 = vpop.xlane.xlu0 %3735
    %3737 = vadd.xlane.f32.xlu0 %v3720
    %v3738 = vpop.xlane.xlu0 %3737
    %3739 = vadd.xlane.f32.xlu0 %v3721
    %v3740 = vpop.xlane.xlu0 %3739
    %3741 = vadd.xlane.f32.xlu0 %v3722
    %v3742 = vpop.xlane.xlu0 %3741
    %3743 = vadd.xlane.f32.xlu0 %v3723
    %v3744 = vpop.xlane.xlu0 %3743
    %3745 = vadd.xlane.f32.xlu0 %v3724
    %v3746 = vpop.xlane.xlu0 %3745
    %3747 = vadd.xlane.f32.xlu0 %v3725
    %v3748 = vpop.xlane.xlu0 %3747
    %3749 = vadd.xlane.f32.xlu0 %v3726
    %v3750 = vpop.xlane.xlu0 %3749
    %3751 = vadd.xlane.f32.xlu0 %v3727
    %v3752 = vpop.xlane.xlu0 %3751
    %3753 = vadd.xlane.f32.xlu0 %v3728
    %v3754 = vpop.xlane.xlu0 %3753
    %3755 = vadd.xlane.f32.xlu0 %v3729
    %v3756 = vpop.xlane.xlu0 %3755
    %3757 = vadd.xlane.f32.xlu0 %v3730
    %v3758 = vpop.xlane.xlu0 %3757
    %3759 = vadd.xlane.f32.xlu0 %v3731
    %v3760 = vpop.xlane.xlu0 %3759
    %3761 = vadd.xlane.f32.xlu0 %v3732
    %v3762 = vpop.xlane.xlu0 %3761
    %3763 = vadd.xlane.f32.xlu0 %v3733
    %v3764 = vpop.xlane.xlu0 %3763
    %3765 = vadd.xlane.f32.xlu0 %v3734
    %v3766 = vpop.xlane.xlu0 %3765
    %vm3767 = vcmp.eq.f32.partialorder %v3736, %v3183
    %vm3768 = vcmp.eq.f32.partialorder %v3738, %v3184
    %vm3769 = vcmp.eq.f32.partialorder %v3740, %v3185
    %vm3770 = vcmp.eq.f32.partialorder %v3742, %v3186
    %vm3771 = vcmp.eq.f32.partialorder %v3744, %v3187
    %vm3772 = vcmp.eq.f32.partialorder %v3746, %v3188
    %vm3773 = vcmp.eq.f32.partialorder %v3748, %v3189
    %vm3774 = vcmp.eq.f32.partialorder %v3750, %v3190
    %vm3775 = vcmp.eq.f32.partialorder %v3752, %v3191
    %vm3776 = vcmp.eq.f32.partialorder %v3754, %v3192
    %vm3777 = vcmp.eq.f32.partialorder %v3756, %v3193
    %vm3778 = vcmp.eq.f32.partialorder %v3758, %v3194
    %vm3779 = vcmp.eq.f32.partialorder %v3760, %v3195
    %vm3780 = vcmp.eq.f32.partialorder %v3762, %v3196
    %vm3781 = vcmp.eq.f32.partialorder %v3764, %v3197
    %vm3782 = vcmp.eq.f32.partialorder %v3766, %v3198
    %v3783 = vsel %vm3767, 1, 0
    %v3784 = vsel %vm3768, 1, 0
    %v3785 = vsel %vm3769, 1, 0
    %v3786 = vsel %vm3770, 1, 0
    %v3787 = vsel %vm3771, 1, 0
    %v3788 = vsel %vm3772, 1, 0
    %v3789 = vsel %vm3773, 1, 0
    %v3790 = vsel %vm3774, 1, 0
    %v3791 = vsel %vm3775, 1, 0
    %v3792 = vsel %vm3776, 1, 0
    %v3793 = vsel %vm3777, 1, 0
    %v3794 = vsel %vm3778, 1, 0
    %v3795 = vsel %vm3779, 1, 0
    %v3796 = vsel %vm3780, 1, 0
    %v3797 = vsel %vm3781, 1, 0
    %v3798 = vsel %vm3782, 1, 0
    %v3799 = vcvt.s32.f32 %v3783
    %v3800 = vcvt.s32.f32 %v3784
    %v3801 = vcvt.s32.f32 %v3785
    %v3802 = vcvt.s32.f32 %v3786
    %v3803 = vcvt.s32.f32 %v3787
    %v3804 = vcvt.s32.f32 %v3788
    %v3805 = vcvt.s32.f32 %v3789
    %v3806 = vcvt.s32.f32 %v3790
    %v3807 = vcvt.s32.f32 %v3791
    %v3808 = vcvt.s32.f32 %v3792
    %v3809 = vcvt.s32.f32 %v3793
    %v3810 = vcvt.s32.f32 %v3794
    %v3811 = vcvt.s32.f32 %v3795
    %v3812 = vcvt.s32.f32 %v3796
    %v3813 = vcvt.s32.f32 %v3797
    %v3814 = vcvt.s32.f32 %v3798
    %3831 = vrot.lane.b32.xlu0 %v3799, 121
    %v3832 = vpop.permute.xlu0 %3831
    %3833 = vrot.lane.b32.xlu0 %v3800, 121
    %v3834 = vpop.permute.xlu0 %3833
    %3835 = vrot.lane.b32.xlu0 %v3801, 121
    %v3836 = vpop.permute.xlu0 %3835
    %3837 = vrot.lane.b32.xlu0 %v3802, 121
    %v3838 = vpop.permute.xlu0 %3837
    %3839 = vrot.lane.b32.xlu0 %v3803, 121
    %v3840 = vpop.permute.xlu0 %3839
    %3841 = vrot.lane.b32.xlu0 %v3804, 121
    %v3842 = vpop.permute.xlu0 %3841
    %3843 = vrot.lane.b32.xlu0 %v3805, 121
    %v3844 = vpop.permute.xlu0 %3843
    %3845 = vrot.lane.b32.xlu0 %v3806, 121
    %v3846 = vpop.permute.xlu0 %3845
    %3847 = vrot.lane.b32.xlu0 %v3807, 121
    %v3848 = vpop.permute.xlu0 %3847
    %3849 = vrot.lane.b32.xlu0 %v3808, 121
    %v3850 = vpop.permute.xlu0 %3849
    %3851 = vrot.lane.b32.xlu0 %v3809, 121
    %v3852 = vpop.permute.xlu0 %3851
    %3853 = vrot.lane.b32.xlu0 %v3810, 121
    %v3854 = vpop.permute.xlu0 %3853
    %3855 = vrot.lane.b32.xlu0 %v3811, 121
    %v3856 = vpop.permute.xlu0 %3855
    %3857 = vrot.lane.b32.xlu0 %v3812, 121
    %v3858 = vpop.permute.xlu0 %3857
    %3859 = vrot.lane.b32.xlu0 %v3813, 121
    %v3860 = vpop.permute.xlu0 %3859
    %3861 = vrot.lane.b32.xlu0 %v3814, 121
    %v3862 = vpop.permute.xlu0 %3861
    %v3879 = vmul.f32 %v1271, %v3832
    %v3880 = vmul.f32 %v1272, %v3834
    %v3881 = vmul.f32 %v1273, %v3836
    %v3882 = vmul.f32 %v1274, %v3838
    %v3883 = vmul.f32 %v1275, %v3840
    %v3884 = vmul.f32 %v1276, %v3842
    %v3885 = vmul.f32 %v1277, %v3844
    %v3886 = vmul.f32 %v1278, %v3846
    %v3887 = vmul.f32 %v1279, %v3848
    %v3888 = vmul.f32 %v1280, %v3850
    %v3889 = vmul.f32 %v1281, %v3852
    %v3890 = vmul.f32 %v1282, %v3854
    %v3891 = vmul.f32 %v1283, %v3856
    %v3892 = vmul.f32 %v1284, %v3858
    %v3893 = vmul.f32 %v1285, %v3860
    %v3894 = vmul.f32 %v1286, %v3862
    %3896 = vset.pattern.permute.xlu0 0
    %3897 = vperm.xlu0 %3896, %v3879
    %v3898 = vpop.permute.xlu0 %3897
    %3901 = vset.pattern.permute.xlu0 0
    %3902 = vperm.xlu0 %3901, %v3880
    %v3903 = vpop.permute.xlu0 %3902
    %3906 = vset.pattern.permute.xlu0 0
    %3907 = vperm.xlu0 %3906, %v3881
    %v3908 = vpop.permute.xlu0 %3907
    %3911 = vset.pattern.permute.xlu0 0
    %3912 = vperm.xlu0 %3911, %v3882
    %v3913 = vpop.permute.xlu0 %3912
    %3916 = vset.pattern.permute.xlu0 0
    %3917 = vperm.xlu0 %3916, %v3883
    %v3918 = vpop.permute.xlu0 %3917
    %3921 = vset.pattern.permute.xlu0 0
    %3922 = vperm.xlu0 %3921, %v3884
    %v3923 = vpop.permute.xlu0 %3922
    %3926 = vset.pattern.permute.xlu0 0
    %3927 = vperm.xlu0 %3926, %v3885
    %v3928 = vpop.permute.xlu0 %3927
    %3931 = vset.pattern.permute.xlu0 0
    %3932 = vperm.xlu0 %3931, %v3886
    %v3933 = vpop.permute.xlu0 %3932
    %3936 = vset.pattern.permute.xlu0 0
    %3937 = vperm.xlu0 %3936, %v3887
    %v3938 = vpop.permute.xlu0 %3937
    %3941 = vset.pattern.permute.xlu0 0
    %3942 = vperm.xlu0 %3941, %v3888
    %v3943 = vpop.permute.xlu0 %3942
    %3946 = vset.pattern.permute.xlu0 0
    %3947 = vperm.xlu0 %3946, %v3889
    %v3948 = vpop.permute.xlu0 %3947
    %3951 = vset.pattern.permute.xlu0 0
    %3952 = vperm.xlu0 %3951, %v3890
    %v3953 = vpop.permute.xlu0 %3952
    %3956 = vset.pattern.permute.xlu0 0
    %3957 = vperm.xlu0 %3956, %v3891
    %v3958 = vpop.permute.xlu0 %3957
    %3961 = vset.pattern.permute.xlu0 0
    %3962 = vperm.xlu0 %3961, %v3892
    %v3963 = vpop.permute.xlu0 %3962
    %3966 = vset.pattern.permute.xlu0 0
    %3967 = vperm.xlu0 %3966, %v3893
    %v3968 = vpop.permute.xlu0 %3967
    %3971 = vset.pattern.permute.xlu0 0
    %3972 = vperm.xlu0 %3971, %v3894
    %v3973 = vpop.permute.xlu0 %3972
    %v3975 = vmul.f32 %v3898, %v678
    %v3976 = vmul.f32 %v3903, %v678
    %v3977 = vmul.f32 %v3908, %v678
    %v3978 = vmul.f32 %v3913, %v678
    %v3979 = vmul.f32 %v3918, %v678
    %v3980 = vmul.f32 %v3923, %v678
    %v3981 = vmul.f32 %v3928, %v678
    %v3982 = vmul.f32 %v3933, %v678
    %v3983 = vmul.f32 %v3938, %v678
    %v3984 = vmul.f32 %v3943, %v678
    %v3985 = vmul.f32 %v3948, %v678
    %v3986 = vmul.f32 %v3953, %v678
    %v3987 = vmul.f32 %v3958, %v678
    %v3988 = vmul.f32 %v3963, %v678
    %v3989 = vmul.f32 %v3968, %v678
    %v3990 = vmul.f32 %v3973, %v678
    %v3991 = vadd.f32 %v3603, %v3975
    %v3992 = vadd.f32 %v3604, %v3976
    %v3993 = vadd.f32 %v3605, %v3977
    %v3994 = vadd.f32 %v3606, %v3978
    %v3995 = vadd.f32 %v3607, %v3979
    %v3996 = vadd.f32 %v3608, %v3980
    %v3997 = vadd.f32 %v3609, %v3981
    %v3998 = vadd.f32 %v3610, %v3982
    %v3999 = vadd.f32 %v3611, %v3983
    %v4000 = vadd.f32 %v3612, %v3984
    %v4001 = vadd.f32 %v3613, %v3985
    %v4002 = vadd.f32 %v3614, %v3986
    %v4003 = vadd.f32 %v3615, %v3987
    %v4004 = vadd.f32 %v3616, %v3988
    %v4005 = vadd.f32 %v3617, %v3989
    %v4006 = vadd.f32 %v3618, %v3990
    %v4007 = vlaneseq
    %v4008 = vshrl.u32 %v4007, 7
    %v4009 = vsub.s32 2, %v4008
    %v4010 = vrot.slane %v3215, %v4009
    %vm4011 = vcmp.lt.f32.partialorder %v4010, %v2192
    %vm4012 = vcmp.lt.f32.partialorder %v4010, %v2197
    %vm4013 = vcmp.lt.f32.partialorder %v4010, %v2202
    %vm4014 = vcmp.lt.f32.partialorder %v4010, %v2207
    %vm4015 = vcmp.lt.f32.partialorder %v4010, %v2212
    %vm4016 = vcmp.lt.f32.partialorder %v4010, %v2217
    %vm4017 = vcmp.lt.f32.partialorder %v4010, %v2222
    %vm4018 = vcmp.lt.f32.partialorder %v4010, %v2227
    %vm4019 = vcmp.lt.f32.partialorder %v4010, %v2232
    %vm4020 = vcmp.lt.f32.partialorder %v4010, %v2237
    %vm4021 = vcmp.lt.f32.partialorder %v4010, %v2242
    %vm4022 = vcmp.lt.f32.partialorder %v4010, %v2247
    %vm4023 = vcmp.lt.f32.partialorder %v4010, %v2252
    %vm4024 = vcmp.lt.f32.partialorder %v4010, %v2257
    %vm4025 = vcmp.lt.f32.partialorder %v4010, %v2262
    %vm4026 = vcmp.lt.f32.partialorder %v4010, %v2267
    %vm4027 = vmand %vm3103, %vm4011
    %vm4028 = vmand %vm3104, %vm4012
    %vm4029 = vmand %vm3105, %vm4013
    %vm4030 = vmand %vm3106, %vm4014
    %vm4031 = vmand %vm3107, %vm4015
    %vm4032 = vmand %vm3108, %vm4016
    %vm4033 = vmand %vm3109, %vm4017
    %vm4034 = vmand %vm3110, %vm4018
    %vm4035 = vmand %vm3111, %vm4019
    %vm4036 = vmand %vm3112, %vm4020
    %vm4037 = vmand %vm3113, %vm4021
    %vm4038 = vmand %vm3114, %vm4022
    %vm4039 = vmand %vm3115, %vm4023
    %vm4040 = vmand %vm3116, %vm4024
    %vm4041 = vmand %vm3117, %vm4025
    %vm4042 = vmand %vm3118, %vm4026
    %vm4043 = vcmp.eq.f32.partialorder %v4010, %v2192
    %vm4044 = vcmp.eq.f32.partialorder %v4010, %v2197
    %vm4045 = vcmp.eq.f32.partialorder %v4010, %v2202
    %vm4046 = vcmp.eq.f32.partialorder %v4010, %v2207
    %vm4047 = vcmp.eq.f32.partialorder %v4010, %v2212
    %vm4048 = vcmp.eq.f32.partialorder %v4010, %v2217
    %vm4049 = vcmp.eq.f32.partialorder %v4010, %v2222
    %vm4050 = vcmp.eq.f32.partialorder %v4010, %v2227
    %vm4051 = vcmp.eq.f32.partialorder %v4010, %v2232
    %vm4052 = vcmp.eq.f32.partialorder %v4010, %v2237
    %vm4053 = vcmp.eq.f32.partialorder %v4010, %v2242
    %vm4054 = vcmp.eq.f32.partialorder %v4010, %v2247
    %vm4055 = vcmp.eq.f32.partialorder %v4010, %v2252
    %vm4056 = vcmp.eq.f32.partialorder %v4010, %v2257
    %vm4057 = vcmp.eq.f32.partialorder %v4010, %v2262
    %vm4058 = vcmp.eq.f32.partialorder %v4010, %v2267
    %vm4059 = vmand %vm3135, %vm4043
    %vm4060 = vmand %vm3136, %vm4044
    %vm4061 = vmand %vm3137, %vm4045
    %vm4062 = vmand %vm3138, %vm4046
    %vm4063 = vmand %vm3139, %vm4047
    %vm4064 = vmand %vm3140, %vm4048
    %vm4065 = vmand %vm3141, %vm4049
    %vm4066 = vmand %vm3142, %vm4050
    %vm4067 = vmand %vm3143, %vm4051
    %vm4068 = vmand %vm3144, %vm4052
    %vm4069 = vmand %vm3145, %vm4053
    %vm4070 = vmand %vm3146, %vm4054
    %vm4071 = vmand %vm3147, %vm4055
    %vm4072 = vmand %vm3148, %vm4056
    %vm4073 = vmand %vm3149, %vm4057
    %vm4074 = vmand %vm3150, %vm4058
    %vm4075 = vmor %vm4027, %vm4059
    %vm4076 = vmor %vm4028, %vm4060
    %vm4077 = vmor %vm4029, %vm4061
    %vm4078 = vmor %vm4030, %vm4062
    %vm4079 = vmor %vm4031, %vm4063
    %vm4080 = vmor %vm4032, %vm4064
    %vm4081 = vmor %vm4033, %vm4065
    %vm4082 = vmor %vm4034, %vm4066
    %vm4083 = vmor %vm4035, %vm4067
    %vm4084 = vmor %vm4036, %vm4068
    %vm4085 = vmor %vm4037, %vm4069
    %vm4086 = vmor %vm4038, %vm4070
    %vm4087 = vmor %vm4039, %vm4071
    %vm4088 = vmor %vm4040, %vm4072
    %vm4089 = vmor %vm4041, %vm4073
    %vm4090 = vmor %vm4042, %vm4074
    %v4091 = vsel %vm4075, 1, 0
    %v4092 = vsel %vm4076, 1, 0
    %v4093 = vsel %vm4077, 1, 0
    %v4094 = vsel %vm4078, 1, 0
    %v4095 = vsel %vm4079, 1, 0
    %v4096 = vsel %vm4080, 1, 0
    %v4097 = vsel %vm4081, 1, 0
    %v4098 = vsel %vm4082, 1, 0
    %v4099 = vsel %vm4083, 1, 0
    %v4100 = vsel %vm4084, 1, 0
    %v4101 = vsel %vm4085, 1, 0
    %v4102 = vsel %vm4086, 1, 0
    %v4103 = vsel %vm4087, 1, 0
    %v4104 = vsel %vm4088, 1, 0
    %v4105 = vsel %vm4089, 1, 0
    %v4106 = vsel %vm4090, 1, 0
    %v4107 = vcvt.s32.f32 %v4091
    %v4108 = vcvt.s32.f32 %v4092
    %v4109 = vcvt.s32.f32 %v4093
    %v4110 = vcvt.s32.f32 %v4094
    %v4111 = vcvt.s32.f32 %v4095
    %v4112 = vcvt.s32.f32 %v4096
    %v4113 = vcvt.s32.f32 %v4097
    %v4114 = vcvt.s32.f32 %v4098
    %v4115 = vcvt.s32.f32 %v4099
    %v4116 = vcvt.s32.f32 %v4100
    %v4117 = vcvt.s32.f32 %v4101
    %v4118 = vcvt.s32.f32 %v4102
    %v4119 = vcvt.s32.f32 %v4103
    %v4120 = vcvt.s32.f32 %v4104
    %v4121 = vcvt.s32.f32 %v4105
    %v4122 = vcvt.s32.f32 %v4106
    %4123 = vadd.xlane.f32.xlu0 %v4107
    %v4124 = vpop.xlane.xlu0 %4123
    %4125 = vadd.xlane.f32.xlu0 %v4108
    %v4126 = vpop.xlane.xlu0 %4125
    %4127 = vadd.xlane.f32.xlu0 %v4109
    %v4128 = vpop.xlane.xlu0 %4127
    %4129 = vadd.xlane.f32.xlu0 %v4110
    %v4130 = vpop.xlane.xlu0 %4129
    %4131 = vadd.xlane.f32.xlu0 %v4111
    %v4132 = vpop.xlane.xlu0 %4131
    %4133 = vadd.xlane.f32.xlu0 %v4112
    %v4134 = vpop.xlane.xlu0 %4133
    %4135 = vadd.xlane.f32.xlu0 %v4113
    %v4136 = vpop.xlane.xlu0 %4135
    %4137 = vadd.xlane.f32.xlu0 %v4114
    %v4138 = vpop.xlane.xlu0 %4137
    %4139 = vadd.xlane.f32.xlu0 %v4115
    %v4140 = vpop.xlane.xlu0 %4139
    %4141 = vadd.xlane.f32.xlu0 %v4116
    %v4142 = vpop.xlane.xlu0 %4141
    %4143 = vadd.xlane.f32.xlu0 %v4117
    %v4144 = vpop.xlane.xlu0 %4143
    %4145 = vadd.xlane.f32.xlu0 %v4118
    %v4146 = vpop.xlane.xlu0 %4145
    %4147 = vadd.xlane.f32.xlu0 %v4119
    %v4148 = vpop.xlane.xlu0 %4147
    %4149 = vadd.xlane.f32.xlu0 %v4120
    %v4150 = vpop.xlane.xlu0 %4149
    %4151 = vadd.xlane.f32.xlu0 %v4121
    %v4152 = vpop.xlane.xlu0 %4151
    %4153 = vadd.xlane.f32.xlu0 %v4122
    %v4154 = vpop.xlane.xlu0 %4153
    %vm4155 = vcmp.eq.f32.partialorder %v4124, %v3183
    %vm4156 = vcmp.eq.f32.partialorder %v4126, %v3184
    %vm4157 = vcmp.eq.f32.partialorder %v4128, %v3185
    %vm4158 = vcmp.eq.f32.partialorder %v4130, %v3186
    %vm4159 = vcmp.eq.f32.partialorder %v4132, %v3187
    %vm4160 = vcmp.eq.f32.partialorder %v4134, %v3188
    %vm4161 = vcmp.eq.f32.partialorder %v4136, %v3189
    %vm4162 = vcmp.eq.f32.partialorder %v4138, %v3190
    %vm4163 = vcmp.eq.f32.partialorder %v4140, %v3191
    %vm4164 = vcmp.eq.f32.partialorder %v4142, %v3192
    %vm4165 = vcmp.eq.f32.partialorder %v4144, %v3193
    %vm4166 = vcmp.eq.f32.partialorder %v4146, %v3194
    %vm4167 = vcmp.eq.f32.partialorder %v4148, %v3195
    %vm4168 = vcmp.eq.f32.partialorder %v4150, %v3196
    %vm4169 = vcmp.eq.f32.partialorder %v4152, %v3197
    %vm4170 = vcmp.eq.f32.partialorder %v4154, %v3198
    %v4171 = vsel %vm4155, 1, 0
    %v4172 = vsel %vm4156, 1, 0
    %v4173 = vsel %vm4157, 1, 0
    %v4174 = vsel %vm4158, 1, 0
    %v4175 = vsel %vm4159, 1, 0
    %v4176 = vsel %vm4160, 1, 0
    %v4177 = vsel %vm4161, 1, 0
    %v4178 = vsel %vm4162, 1, 0
    %v4179 = vsel %vm4163, 1, 0
    %v4180 = vsel %vm4164, 1, 0
    %v4181 = vsel %vm4165, 1, 0
    %v4182 = vsel %vm4166, 1, 0
    %v4183 = vsel %vm4167, 1, 0
    %v4184 = vsel %vm4168, 1, 0
    %v4185 = vsel %vm4169, 1, 0
    %v4186 = vsel %vm4170, 1, 0
    %v4187 = vcvt.s32.f32 %v4171
    %v4188 = vcvt.s32.f32 %v4172
    %v4189 = vcvt.s32.f32 %v4173
    %v4190 = vcvt.s32.f32 %v4174
    %v4191 = vcvt.s32.f32 %v4175
    %v4192 = vcvt.s32.f32 %v4176
    %v4193 = vcvt.s32.f32 %v4177
    %v4194 = vcvt.s32.f32 %v4178
    %v4195 = vcvt.s32.f32 %v4179
    %v4196 = vcvt.s32.f32 %v4180
    %v4197 = vcvt.s32.f32 %v4181
    %v4198 = vcvt.s32.f32 %v4182
    %v4199 = vcvt.s32.f32 %v4183
    %v4200 = vcvt.s32.f32 %v4184
    %v4201 = vcvt.s32.f32 %v4185
    %v4202 = vcvt.s32.f32 %v4186
    %4219 = vrot.lane.b32.xlu0 %v4187, 121
    %v4220 = vpop.permute.xlu0 %4219
    %4221 = vrot.lane.b32.xlu0 %v4188, 121
    %v4222 = vpop.permute.xlu0 %4221
    %4223 = vrot.lane.b32.xlu0 %v4189, 121
    %v4224 = vpop.permute.xlu0 %4223
    %4225 = vrot.lane.b32.xlu0 %v4190, 121
    %v4226 = vpop.permute.xlu0 %4225
    %4227 = vrot.lane.b32.xlu0 %v4191, 121
    %v4228 = vpop.permute.xlu0 %4227
    %4229 = vrot.lane.b32.xlu0 %v4192, 121
    %v4230 = vpop.permute.xlu0 %4229
    %4231 = vrot.lane.b32.xlu0 %v4193, 121
    %v4232 = vpop.permute.xlu0 %4231
    %4233 = vrot.lane.b32.xlu0 %v4194, 121
    %v4234 = vpop.permute.xlu0 %4233
    %4235 = vrot.lane.b32.xlu0 %v4195, 121
    %v4236 = vpop.permute.xlu0 %4235
    %4237 = vrot.lane.b32.xlu0 %v4196, 121
    %v4238 = vpop.permute.xlu0 %4237
    %4239 = vrot.lane.b32.xlu0 %v4197, 121
    %v4240 = vpop.permute.xlu0 %4239
    %4241 = vrot.lane.b32.xlu0 %v4198, 121
    %v4242 = vpop.permute.xlu0 %4241
    %4243 = vrot.lane.b32.xlu0 %v4199, 121
    %v4244 = vpop.permute.xlu0 %4243
    %4245 = vrot.lane.b32.xlu0 %v4200, 121
    %v4246 = vpop.permute.xlu0 %4245
    %4247 = vrot.lane.b32.xlu0 %v4201, 121
    %v4248 = vpop.permute.xlu0 %4247
    %4249 = vrot.lane.b32.xlu0 %v4202, 121
    %v4250 = vpop.permute.xlu0 %4249
    %v4267 = vmul.f32 %v1789, %v4220
    %v4268 = vmul.f32 %v1790, %v4222
    %v4269 = vmul.f32 %v1791, %v4224
    %v4270 = vmul.f32 %v1792, %v4226
    %v4271 = vmul.f32 %v1793, %v4228
    %v4272 = vmul.f32 %v1794, %v4230
    %v4273 = vmul.f32 %v1795, %v4232
    %v4274 = vmul.f32 %v1796, %v4234
    %v4275 = vmul.f32 %v1797, %v4236
    %v4276 = vmul.f32 %v1798, %v4238
    %v4277 = vmul.f32 %v1799, %v4240
    %v4278 = vmul.f32 %v1800, %v4242
    %v4279 = vmul.f32 %v1801, %v4244
    %v4280 = vmul.f32 %v1802, %v4246
    %v4281 = vmul.f32 %v1803, %v4248
    %v4282 = vmul.f32 %v1804, %v4250
    %4284 = vset.pattern.permute.xlu0 0
    %4285 = vperm.xlu0 %4284, %v4267
    %v4286 = vpop.permute.xlu0 %4285
    %4289 = vset.pattern.permute.xlu0 0
    %4290 = vperm.xlu0 %4289, %v4268
    %v4291 = vpop.permute.xlu0 %4290
    %4294 = vset.pattern.permute.xlu0 0
    %4295 = vperm.xlu0 %4294, %v4269
    %v4296 = vpop.permute.xlu0 %4295
    %4299 = vset.pattern.permute.xlu0 0
    %4300 = vperm.xlu0 %4299, %v4270
    %v4301 = vpop.permute.xlu0 %4300
    %4304 = vset.pattern.permute.xlu0 0
    %4305 = vperm.xlu0 %4304, %v4271
    %v4306 = vpop.permute.xlu0 %4305
    %4309 = vset.pattern.permute.xlu0 0
    %4310 = vperm.xlu0 %4309, %v4272
    %v4311 = vpop.permute.xlu0 %4310
    %4314 = vset.pattern.permute.xlu0 0
    %4315 = vperm.xlu0 %4314, %v4273
    %v4316 = vpop.permute.xlu0 %4315
    %4319 = vset.pattern.permute.xlu0 0
    %4320 = vperm.xlu0 %4319, %v4274
    %v4321 = vpop.permute.xlu0 %4320
    %4324 = vset.pattern.permute.xlu0 0
    %4325 = vperm.xlu0 %4324, %v4275
    %v4326 = vpop.permute.xlu0 %4325
    %4329 = vset.pattern.permute.xlu0 0
    %4330 = vperm.xlu0 %4329, %v4276
    %v4331 = vpop.permute.xlu0 %4330
    %4334 = vset.pattern.permute.xlu0 0
    %4335 = vperm.xlu0 %4334, %v4277
    %v4336 = vpop.permute.xlu0 %4335
    %4339 = vset.pattern.permute.xlu0 0
    %4340 = vperm.xlu0 %4339, %v4278
    %v4341 = vpop.permute.xlu0 %4340
    %4344 = vset.pattern.permute.xlu0 0
    %4345 = vperm.xlu0 %4344, %v4279
    %v4346 = vpop.permute.xlu0 %4345
    %4349 = vset.pattern.permute.xlu0 0
    %4350 = vperm.xlu0 %4349, %v4280
    %v4351 = vpop.permute.xlu0 %4350
    %4354 = vset.pattern.permute.xlu0 0
    %4355 = vperm.xlu0 %4354, %v4281
    %v4356 = vpop.permute.xlu0 %4355
    %4359 = vset.pattern.permute.xlu0 0
    %4360 = vperm.xlu0 %4359, %v4282
    %v4361 = vpop.permute.xlu0 %4360
    %v4363 = vmul.f32 %v4286, %v793
    %v4364 = vmul.f32 %v4291, %v793
    %v4365 = vmul.f32 %v4296, %v793
    %v4366 = vmul.f32 %v4301, %v793
    %v4367 = vmul.f32 %v4306, %v793
    %v4368 = vmul.f32 %v4311, %v793
    %v4369 = vmul.f32 %v4316, %v793
    %v4370 = vmul.f32 %v4321, %v793
    %v4371 = vmul.f32 %v4326, %v793
    %v4372 = vmul.f32 %v4331, %v793
    %v4373 = vmul.f32 %v4336, %v793
    %v4374 = vmul.f32 %v4341, %v793
    %v4375 = vmul.f32 %v4346, %v793
    %v4376 = vmul.f32 %v4351, %v793
    %v4377 = vmul.f32 %v4356, %v793
    %v4378 = vmul.f32 %v4361, %v793
    %v4379 = vadd.f32 %v3991, %v4363
    %v4380 = vadd.f32 %v3992, %v4364
    %v4381 = vadd.f32 %v3993, %v4365
    %v4382 = vadd.f32 %v3994, %v4366
    %v4383 = vadd.f32 %v3995, %v4367
    %v4384 = vadd.f32 %v3996, %v4368
    %v4385 = vadd.f32 %v3997, %v4369
    %v4386 = vadd.f32 %v3998, %v4370
    %v4387 = vadd.f32 %v3999, %v4371
    %v4388 = vadd.f32 %v4000, %v4372
    %v4389 = vadd.f32 %v4001, %v4373
    %v4390 = vadd.f32 %v4002, %v4374
    %v4391 = vadd.f32 %v4003, %v4375
    %v4392 = vadd.f32 %v4004, %v4376
    %v4393 = vadd.f32 %v4005, %v4377
    %v4394 = vadd.f32 %v4006, %v4378
    %v4395 = vlaneseq
    %v4396 = vshrl.u32 %v4395, 7
    %v4397 = vsub.s32 3, %v4396
    %v4398 = vrot.slane %v3215, %v4397
    %vm4399 = vcmp.lt.f32.partialorder %v4398, %v2304
    %vm4400 = vcmp.lt.f32.partialorder %v4398, %v2309
    %vm4401 = vcmp.lt.f32.partialorder %v4398, %v2314
    %vm4402 = vcmp.lt.f32.partialorder %v4398, %v2319
    %vm4403 = vcmp.lt.f32.partialorder %v4398, %v2324
    %vm4404 = vcmp.lt.f32.partialorder %v4398, %v2329
    %vm4405 = vcmp.lt.f32.partialorder %v4398, %v2334
    %vm4406 = vcmp.lt.f32.partialorder %v4398, %v2339
    %vm4407 = vcmp.lt.f32.partialorder %v4398, %v2344
    %vm4408 = vcmp.lt.f32.partialorder %v4398, %v2349
    %vm4409 = vcmp.lt.f32.partialorder %v4398, %v2354
    %vm4410 = vcmp.lt.f32.partialorder %v4398, %v2359
    %vm4411 = vcmp.lt.f32.partialorder %v4398, %v2364
    %vm4412 = vcmp.lt.f32.partialorder %v4398, %v2369
    %vm4413 = vcmp.lt.f32.partialorder %v4398, %v2374
    %vm4414 = vcmp.lt.f32.partialorder %v4398, %v2379
    %vm4415 = vmand %vm3103, %vm4399
    %vm4416 = vmand %vm3104, %vm4400
    %vm4417 = vmand %vm3105, %vm4401
    %vm4418 = vmand %vm3106, %vm4402
    %vm4419 = vmand %vm3107, %vm4403
    %vm4420 = vmand %vm3108, %vm4404
    %vm4421 = vmand %vm3109, %vm4405
    %vm4422 = vmand %vm3110, %vm4406
    %vm4423 = vmand %vm3111, %vm4407
    %vm4424 = vmand %vm3112, %vm4408
    %vm4425 = vmand %vm3113, %vm4409
    %vm4426 = vmand %vm3114, %vm4410
    %vm4427 = vmand %vm3115, %vm4411
    %vm4428 = vmand %vm3116, %vm4412
    %vm4429 = vmand %vm3117, %vm4413
    %vm4430 = vmand %vm3118, %vm4414
    %vm4431 = vcmp.eq.f32.partialorder %v4398, %v2304
    %vm4432 = vcmp.eq.f32.partialorder %v4398, %v2309
    %vm4433 = vcmp.eq.f32.partialorder %v4398, %v2314
    %vm4434 = vcmp.eq.f32.partialorder %v4398, %v2319
    %vm4435 = vcmp.eq.f32.partialorder %v4398, %v2324
    %vm4436 = vcmp.eq.f32.partialorder %v4398, %v2329
    %vm4437 = vcmp.eq.f32.partialorder %v4398, %v2334
    %vm4438 = vcmp.eq.f32.partialorder %v4398, %v2339
    %vm4439 = vcmp.eq.f32.partialorder %v4398, %v2344
    %vm4440 = vcmp.eq.f32.partialorder %v4398, %v2349
    %vm4441 = vcmp.eq.f32.partialorder %v4398, %v2354
    %vm4442 = vcmp.eq.f32.partialorder %v4398, %v2359
    %vm4443 = vcmp.eq.f32.partialorder %v4398, %v2364
    %vm4444 = vcmp.eq.f32.partialorder %v4398, %v2369
    %vm4445 = vcmp.eq.f32.partialorder %v4398, %v2374
    %vm4446 = vcmp.eq.f32.partialorder %v4398, %v2379
    %vm4447 = vmand %vm3135, %vm4431
    %vm4448 = vmand %vm3136, %vm4432
    %vm4449 = vmand %vm3137, %vm4433
    %vm4450 = vmand %vm3138, %vm4434
    %vm4451 = vmand %vm3139, %vm4435
    %vm4452 = vmand %vm3140, %vm4436
    %vm4453 = vmand %vm3141, %vm4437
    %vm4454 = vmand %vm3142, %vm4438
    %vm4455 = vmand %vm3143, %vm4439
    %vm4456 = vmand %vm3144, %vm4440
    %vm4457 = vmand %vm3145, %vm4441
    %vm4458 = vmand %vm3146, %vm4442
    %vm4459 = vmand %vm3147, %vm4443
    %vm4460 = vmand %vm3148, %vm4444
    %vm4461 = vmand %vm3149, %vm4445
    %vm4462 = vmand %vm3150, %vm4446
    %vm4463 = vmor %vm4415, %vm4447
    %vm4464 = vmor %vm4416, %vm4448
    %vm4465 = vmor %vm4417, %vm4449
    %vm4466 = vmor %vm4418, %vm4450
    %vm4467 = vmor %vm4419, %vm4451
    %vm4468 = vmor %vm4420, %vm4452
    %vm4469 = vmor %vm4421, %vm4453
    %vm4470 = vmor %vm4422, %vm4454
    %vm4471 = vmor %vm4423, %vm4455
    %vm4472 = vmor %vm4424, %vm4456
    %vm4473 = vmor %vm4425, %vm4457
    %vm4474 = vmor %vm4426, %vm4458
    %vm4475 = vmor %vm4427, %vm4459
    %vm4476 = vmor %vm4428, %vm4460
    %vm4477 = vmor %vm4429, %vm4461
    %vm4478 = vmor %vm4430, %vm4462
    %v4479 = vsel %vm4463, 1, 0
    %v4480 = vsel %vm4464, 1, 0
    %v4481 = vsel %vm4465, 1, 0
    %v4482 = vsel %vm4466, 1, 0
    %v4483 = vsel %vm4467, 1, 0
    %v4484 = vsel %vm4468, 1, 0
    %v4485 = vsel %vm4469, 1, 0
    %v4486 = vsel %vm4470, 1, 0
    %v4487 = vsel %vm4471, 1, 0
    %v4488 = vsel %vm4472, 1, 0
    %v4489 = vsel %vm4473, 1, 0
    %v4490 = vsel %vm4474, 1, 0
    %v4491 = vsel %vm4475, 1, 0
    %v4492 = vsel %vm4476, 1, 0
    %v4493 = vsel %vm4477, 1, 0
    %v4494 = vsel %vm4478, 1, 0
    %v4495 = vcvt.s32.f32 %v4479
    %v4496 = vcvt.s32.f32 %v4480
    %v4497 = vcvt.s32.f32 %v4481
    %v4498 = vcvt.s32.f32 %v4482
    %v4499 = vcvt.s32.f32 %v4483
    %v4500 = vcvt.s32.f32 %v4484
    %v4501 = vcvt.s32.f32 %v4485
    %v4502 = vcvt.s32.f32 %v4486
    %v4503 = vcvt.s32.f32 %v4487
    %v4504 = vcvt.s32.f32 %v4488
    %v4505 = vcvt.s32.f32 %v4489
    %v4506 = vcvt.s32.f32 %v4490
    %v4507 = vcvt.s32.f32 %v4491
    %v4508 = vcvt.s32.f32 %v4492
    %v4509 = vcvt.s32.f32 %v4493
    %v4510 = vcvt.s32.f32 %v4494
    %4511 = vadd.xlane.f32.xlu0 %v4495
    %v4512 = vpop.xlane.xlu0 %4511
    %4513 = vadd.xlane.f32.xlu0 %v4496
    %v4514 = vpop.xlane.xlu0 %4513
    %4515 = vadd.xlane.f32.xlu0 %v4497
    %v4516 = vpop.xlane.xlu0 %4515
    %4517 = vadd.xlane.f32.xlu0 %v4498
    %v4518 = vpop.xlane.xlu0 %4517
    %4519 = vadd.xlane.f32.xlu0 %v4499
    %v4520 = vpop.xlane.xlu0 %4519
    %4521 = vadd.xlane.f32.xlu0 %v4500
    %v4522 = vpop.xlane.xlu0 %4521
    %4523 = vadd.xlane.f32.xlu0 %v4501
    %v4524 = vpop.xlane.xlu0 %4523
    %4525 = vadd.xlane.f32.xlu0 %v4502
    %v4526 = vpop.xlane.xlu0 %4525
    %4527 = vadd.xlane.f32.xlu0 %v4503
    %v4528 = vpop.xlane.xlu0 %4527
    %4529 = vadd.xlane.f32.xlu0 %v4504
    %v4530 = vpop.xlane.xlu0 %4529
    %4531 = vadd.xlane.f32.xlu0 %v4505
    %v4532 = vpop.xlane.xlu0 %4531
    %4533 = vadd.xlane.f32.xlu0 %v4506
    %v4534 = vpop.xlane.xlu0 %4533
    %4535 = vadd.xlane.f32.xlu0 %v4507
    %v4536 = vpop.xlane.xlu0 %4535
    %4537 = vadd.xlane.f32.xlu0 %v4508
    %v4538 = vpop.xlane.xlu0 %4537
    %4539 = vadd.xlane.f32.xlu0 %v4509
    %v4540 = vpop.xlane.xlu0 %4539
    %4541 = vadd.xlane.f32.xlu0 %v4510
    %v4542 = vpop.xlane.xlu0 %4541
    %vm4543 = vcmp.eq.f32.partialorder %v4512, %v3183
    %vm4544 = vcmp.eq.f32.partialorder %v4514, %v3184
    %vm4545 = vcmp.eq.f32.partialorder %v4516, %v3185
    %vm4546 = vcmp.eq.f32.partialorder %v4518, %v3186
    %vm4547 = vcmp.eq.f32.partialorder %v4520, %v3187
    %vm4548 = vcmp.eq.f32.partialorder %v4522, %v3188
    %vm4549 = vcmp.eq.f32.partialorder %v4524, %v3189
    %vm4550 = vcmp.eq.f32.partialorder %v4526, %v3190
    %vm4551 = vcmp.eq.f32.partialorder %v4528, %v3191
    %vm4552 = vcmp.eq.f32.partialorder %v4530, %v3192
    %vm4553 = vcmp.eq.f32.partialorder %v4532, %v3193
    %vm4554 = vcmp.eq.f32.partialorder %v4534, %v3194
    %vm4555 = vcmp.eq.f32.partialorder %v4536, %v3195
    %vm4556 = vcmp.eq.f32.partialorder %v4538, %v3196
    %vm4557 = vcmp.eq.f32.partialorder %v4540, %v3197
    %vm4558 = vcmp.eq.f32.partialorder %v4542, %v3198
    %v4559 = vsel %vm4543, 1, 0
    %v4560 = vsel %vm4544, 1, 0
    %v4561 = vsel %vm4545, 1, 0
    %v4562 = vsel %vm4546, 1, 0
    %v4563 = vsel %vm4547, 1, 0
    %v4564 = vsel %vm4548, 1, 0
    %v4565 = vsel %vm4549, 1, 0
    %v4566 = vsel %vm4550, 1, 0
    %v4567 = vsel %vm4551, 1, 0
    %v4568 = vsel %vm4552, 1, 0
    %v4569 = vsel %vm4553, 1, 0
    %v4570 = vsel %vm4554, 1, 0
    %v4571 = vsel %vm4555, 1, 0
    %v4572 = vsel %vm4556, 1, 0
    %v4573 = vsel %vm4557, 1, 0
    %v4574 = vsel %vm4558, 1, 0
    %v4575 = vcvt.s32.f32 %v4559
    %v4576 = vcvt.s32.f32 %v4560
    %v4577 = vcvt.s32.f32 %v4561
    %v4578 = vcvt.s32.f32 %v4562
    %v4579 = vcvt.s32.f32 %v4563
    %v4580 = vcvt.s32.f32 %v4564
    %v4581 = vcvt.s32.f32 %v4565
    %v4582 = vcvt.s32.f32 %v4566
    %v4583 = vcvt.s32.f32 %v4567
    %v4584 = vcvt.s32.f32 %v4568
    %v4585 = vcvt.s32.f32 %v4569
    %v4586 = vcvt.s32.f32 %v4570
    %v4587 = vcvt.s32.f32 %v4571
    %v4588 = vcvt.s32.f32 %v4572
    %v4589 = vcvt.s32.f32 %v4573
    %v4590 = vcvt.s32.f32 %v4574
    %4607 = vrot.lane.b32.xlu0 %v4575, 121
    %v4608 = vpop.permute.xlu0 %4607
    %4609 = vrot.lane.b32.xlu0 %v4576, 121
    %v4610 = vpop.permute.xlu0 %4609
    %4611 = vrot.lane.b32.xlu0 %v4577, 121
    %v4612 = vpop.permute.xlu0 %4611
    %4613 = vrot.lane.b32.xlu0 %v4578, 121
    %v4614 = vpop.permute.xlu0 %4613
    %4615 = vrot.lane.b32.xlu0 %v4579, 121
    %v4616 = vpop.permute.xlu0 %4615
    %4617 = vrot.lane.b32.xlu0 %v4580, 121
    %v4618 = vpop.permute.xlu0 %4617
    %4619 = vrot.lane.b32.xlu0 %v4581, 121
    %v4620 = vpop.permute.xlu0 %4619
    %4621 = vrot.lane.b32.xlu0 %v4582, 121
    %v4622 = vpop.permute.xlu0 %4621
    %4623 = vrot.lane.b32.xlu0 %v4583, 121
    %v4624 = vpop.permute.xlu0 %4623
    %4625 = vrot.lane.b32.xlu0 %v4584, 121
    %v4626 = vpop.permute.xlu0 %4625
    %4627 = vrot.lane.b32.xlu0 %v4585, 121
    %v4628 = vpop.permute.xlu0 %4627
    %4629 = vrot.lane.b32.xlu0 %v4586, 121
    %v4630 = vpop.permute.xlu0 %4629
    %4631 = vrot.lane.b32.xlu0 %v4587, 121
    %v4632 = vpop.permute.xlu0 %4631
    %4633 = vrot.lane.b32.xlu0 %v4588, 121
    %v4634 = vpop.permute.xlu0 %4633
    %4635 = vrot.lane.b32.xlu0 %v4589, 121
    %v4636 = vpop.permute.xlu0 %4635
    %4637 = vrot.lane.b32.xlu0 %v4590, 121
    %v4638 = vpop.permute.xlu0 %4637
    %v4655 = vmul.f32 %v1965, %v4608
    %v4656 = vmul.f32 %v1966, %v4610
    %v4657 = vmul.f32 %v1967, %v4612
    %v4658 = vmul.f32 %v1968, %v4614
    %v4659 = vmul.f32 %v1969, %v4616
    %v4660 = vmul.f32 %v1970, %v4618
    %v4661 = vmul.f32 %v1971, %v4620
    %v4662 = vmul.f32 %v1972, %v4622
    %v4663 = vmul.f32 %v1973, %v4624
    %v4664 = vmul.f32 %v1974, %v4626
    %v4665 = vmul.f32 %v1975, %v4628
    %v4666 = vmul.f32 %v1976, %v4630
    %v4667 = vmul.f32 %v1977, %v4632
    %v4668 = vmul.f32 %v1978, %v4634
    %v4669 = vmul.f32 %v1979, %v4636
    %v4670 = vmul.f32 %v1980, %v4638
    %4672 = vset.pattern.permute.xlu0 0
    %4673 = vperm.xlu0 %4672, %v4655
    %v4674 = vpop.permute.xlu0 %4673
    %4677 = vset.pattern.permute.xlu0 0
    %4678 = vperm.xlu0 %4677, %v4656
    %v4679 = vpop.permute.xlu0 %4678
    %4682 = vset.pattern.permute.xlu0 0
    %4683 = vperm.xlu0 %4682, %v4657
    %v4684 = vpop.permute.xlu0 %4683
    %4687 = vset.pattern.permute.xlu0 0
    %4688 = vperm.xlu0 %4687, %v4658
    %v4689 = vpop.permute.xlu0 %4688
    %4692 = vset.pattern.permute.xlu0 0
    %4693 = vperm.xlu0 %4692, %v4659
    %v4694 = vpop.permute.xlu0 %4693
    %4697 = vset.pattern.permute.xlu0 0
    %4698 = vperm.xlu0 %4697, %v4660
    %v4699 = vpop.permute.xlu0 %4698
    %4702 = vset.pattern.permute.xlu0 0
    %4703 = vperm.xlu0 %4702, %v4661
    %v4704 = vpop.permute.xlu0 %4703
    %4707 = vset.pattern.permute.xlu0 0
    %4708 = vperm.xlu0 %4707, %v4662
    %v4709 = vpop.permute.xlu0 %4708
    %4712 = vset.pattern.permute.xlu0 0
    %4713 = vperm.xlu0 %4712, %v4663
    %v4714 = vpop.permute.xlu0 %4713
    %4717 = vset.pattern.permute.xlu0 0
    %4718 = vperm.xlu0 %4717, %v4664
    %v4719 = vpop.permute.xlu0 %4718
    %4722 = vset.pattern.permute.xlu0 0
    %4723 = vperm.xlu0 %4722, %v4665
    %v4724 = vpop.permute.xlu0 %4723
    %4727 = vset.pattern.permute.xlu0 0
    %4728 = vperm.xlu0 %4727, %v4666
    %v4729 = vpop.permute.xlu0 %4728
    %4732 = vset.pattern.permute.xlu0 0
    %4733 = vperm.xlu0 %4732, %v4667
    %v4734 = vpop.permute.xlu0 %4733
    %4737 = vset.pattern.permute.xlu0 0
    %4738 = vperm.xlu0 %4737, %v4668
    %v4739 = vpop.permute.xlu0 %4738
    %4742 = vset.pattern.permute.xlu0 0
    %4743 = vperm.xlu0 %4742, %v4669
    %v4744 = vpop.permute.xlu0 %4743
    %4747 = vset.pattern.permute.xlu0 0
    %4748 = vperm.xlu0 %4747, %v4670
    %v4749 = vpop.permute.xlu0 %4748
    %v4751 = vmul.f32 %v4674, %v1459
    %v4752 = vmul.f32 %v4679, %v1459
    %v4753 = vmul.f32 %v4684, %v1459
    %v4754 = vmul.f32 %v4689, %v1459
    %v4755 = vmul.f32 %v4694, %v1459
    %v4756 = vmul.f32 %v4699, %v1459
    %v4757 = vmul.f32 %v4704, %v1459
    %v4758 = vmul.f32 %v4709, %v1459
    %v4759 = vmul.f32 %v4714, %v1459
    %v4760 = vmul.f32 %v4719, %v1459
    %v4761 = vmul.f32 %v4724, %v1459
    %v4762 = vmul.f32 %v4729, %v1459
    %v4763 = vmul.f32 %v4734, %v1459
    %v4764 = vmul.f32 %v4739, %v1459
    %v4765 = vmul.f32 %v4744, %v1459
    %v4766 = vmul.f32 %v4749, %v1459
    %v4767 = vadd.f32 %v4379, %v4751
    %v4768 = vadd.f32 %v4380, %v4752
    %v4769 = vadd.f32 %v4381, %v4753
    %v4770 = vadd.f32 %v4382, %v4754
    %v4771 = vadd.f32 %v4383, %v4755
    %v4772 = vadd.f32 %v4384, %v4756
    %v4773 = vadd.f32 %v4385, %v4757
    %v4774 = vadd.f32 %v4386, %v4758
    %v4775 = vadd.f32 %v4387, %v4759
    %v4776 = vadd.f32 %v4388, %v4760
    %v4777 = vadd.f32 %v4389, %v4761
    %v4778 = vadd.f32 %v4390, %v4762
    %v4779 = vadd.f32 %v4391, %v4763
    %v4780 = vadd.f32 %v4392, %v4764
    %v4781 = vadd.f32 %v4393, %v4765
    %v4782 = vadd.f32 %v4394, %v4766
    %v4783 = vlaneseq
    %v4784 = vshrl.u32 %v4783, 7
    %v4785 = vsub.s32 4, %v4784
    %v4786 = vrot.slane %v3215, %v4785
    %vm4787 = vcmp.lt.f32.partialorder %v4786, %v1289
    %vm4788 = vcmp.lt.f32.partialorder %v4786, %v1290
    %vm4789 = vcmp.lt.f32.partialorder %v4786, %v1291
    %vm4790 = vcmp.lt.f32.partialorder %v4786, %v1292
    %vm4791 = vcmp.lt.f32.partialorder %v4786, %v1293
    %vm4792 = vcmp.lt.f32.partialorder %v4786, %v1294
    %vm4793 = vcmp.lt.f32.partialorder %v4786, %v1295
    %vm4794 = vcmp.lt.f32.partialorder %v4786, %v1296
    %vm4795 = vcmp.lt.f32.partialorder %v4786, %v1297
    %vm4796 = vcmp.lt.f32.partialorder %v4786, %v1298
    %vm4797 = vcmp.lt.f32.partialorder %v4786, %v1299
    %vm4798 = vcmp.lt.f32.partialorder %v4786, %v1300
    %vm4799 = vcmp.lt.f32.partialorder %v4786, %v1301
    %vm4800 = vcmp.lt.f32.partialorder %v4786, %v1302
    %vm4801 = vcmp.lt.f32.partialorder %v4786, %v1303
    %vm4802 = vcmp.lt.f32.partialorder %v4786, %v1304
    %vm4803 = vmand %vm3103, %vm4787
    %vm4804 = vmand %vm3104, %vm4788
    %vm4805 = vmand %vm3105, %vm4789
    %vm4806 = vmand %vm3106, %vm4790
    %vm4807 = vmand %vm3107, %vm4791
    %vm4808 = vmand %vm3108, %vm4792
    %vm4809 = vmand %vm3109, %vm4793
    %vm4810 = vmand %vm3110, %vm4794
    %vm4811 = vmand %vm3111, %vm4795
    %vm4812 = vmand %vm3112, %vm4796
    %vm4813 = vmand %vm3113, %vm4797
    %vm4814 = vmand %vm3114, %vm4798
    %vm4815 = vmand %vm3115, %vm4799
    %vm4816 = vmand %vm3116, %vm4800
    %vm4817 = vmand %vm3117, %vm4801
    %vm4818 = vmand %vm3118, %vm4802
    %vm4819 = vcmp.eq.f32.partialorder %v4786, %v1289
    %vm4820 = vcmp.eq.f32.partialorder %v4786, %v1290
    %vm4821 = vcmp.eq.f32.partialorder %v4786, %v1291
    %vm4822 = vcmp.eq.f32.partialorder %v4786, %v1292
    %vm4823 = vcmp.eq.f32.partialorder %v4786, %v1293
    %vm4824 = vcmp.eq.f32.partialorder %v4786, %v1294
    %vm4825 = vcmp.eq.f32.partialorder %v4786, %v1295
    %vm4826 = vcmp.eq.f32.partialorder %v4786, %v1296
    %vm4827 = vcmp.eq.f32.partialorder %v4786, %v1297
    %vm4828 = vcmp.eq.f32.partialorder %v4786, %v1298
    %vm4829 = vcmp.eq.f32.partialorder %v4786, %v1299
    %vm4830 = vcmp.eq.f32.partialorder %v4786, %v1300
    %vm4831 = vcmp.eq.f32.partialorder %v4786, %v1301
    %vm4832 = vcmp.eq.f32.partialorder %v4786, %v1302
    %vm4833 = vcmp.eq.f32.partialorder %v4786, %v1303
    %vm4834 = vcmp.eq.f32.partialorder %v4786, %v1304
    %vm4835 = vmand %vm3135, %vm4819
    %vm4836 = vmand %vm3136, %vm4820
    %vm4837 = vmand %vm3137, %vm4821
    %vm4838 = vmand %vm3138, %vm4822
    %vm4839 = vmand %vm3139, %vm4823
    %vm4840 = vmand %vm3140, %vm4824
    %vm4841 = vmand %vm3141, %vm4825
    %vm4842 = vmand %vm3142, %vm4826
    %vm4843 = vmand %vm3143, %vm4827
    %vm4844 = vmand %vm3144, %vm4828
    %vm4845 = vmand %vm3145, %vm4829
    %vm4846 = vmand %vm3146, %vm4830
    %vm4847 = vmand %vm3147, %vm4831
    %vm4848 = vmand %vm3148, %vm4832
    %vm4849 = vmand %vm3149, %vm4833
    %vm4850 = vmand %vm3150, %vm4834
    %vm4851 = vmor %vm4803, %vm4835
    %vm4852 = vmor %vm4804, %vm4836
    %vm4853 = vmor %vm4805, %vm4837
    %vm4854 = vmor %vm4806, %vm4838
    %vm4855 = vmor %vm4807, %vm4839
    %vm4856 = vmor %vm4808, %vm4840
    %vm4857 = vmor %vm4809, %vm4841
    %vm4858 = vmor %vm4810, %vm4842
    %vm4859 = vmor %vm4811, %vm4843
    %vm4860 = vmor %vm4812, %vm4844
    %vm4861 = vmor %vm4813, %vm4845
    %vm4862 = vmor %vm4814, %vm4846
    %vm4863 = vmor %vm4815, %vm4847
    %vm4864 = vmor %vm4816, %vm4848
    %vm4865 = vmor %vm4817, %vm4849
    %vm4866 = vmor %vm4818, %vm4850
    %v4867 = vsel %vm4851, 1, 0
    %v4868 = vsel %vm4852, 1, 0
    %v4869 = vsel %vm4853, 1, 0
    %v4870 = vsel %vm4854, 1, 0
    %v4871 = vsel %vm4855, 1, 0
    %v4872 = vsel %vm4856, 1, 0
    %v4873 = vsel %vm4857, 1, 0
    %v4874 = vsel %vm4858, 1, 0
    %v4875 = vsel %vm4859, 1, 0
    %v4876 = vsel %vm4860, 1, 0
    %v4877 = vsel %vm4861, 1, 0
    %v4878 = vsel %vm4862, 1, 0
    %v4879 = vsel %vm4863, 1, 0
    %v4880 = vsel %vm4864, 1, 0
    %v4881 = vsel %vm4865, 1, 0
    %v4882 = vsel %vm4866, 1, 0
    %v4883 = vcvt.s32.f32 %v4867
    %v4884 = vcvt.s32.f32 %v4868
    %v4885 = vcvt.s32.f32 %v4869
    %v4886 = vcvt.s32.f32 %v4870
    %v4887 = vcvt.s32.f32 %v4871
    %v4888 = vcvt.s32.f32 %v4872
    %v4889 = vcvt.s32.f32 %v4873
    %v4890 = vcvt.s32.f32 %v4874
    %v4891 = vcvt.s32.f32 %v4875
    %v4892 = vcvt.s32.f32 %v4876
    %v4893 = vcvt.s32.f32 %v4877
    %v4894 = vcvt.s32.f32 %v4878
    %v4895 = vcvt.s32.f32 %v4879
    %v4896 = vcvt.s32.f32 %v4880
    %v4897 = vcvt.s32.f32 %v4881
    %v4898 = vcvt.s32.f32 %v4882
    %4899 = vadd.xlane.f32.xlu0 %v4883
    %v4900 = vpop.xlane.xlu0 %4899
    %4901 = vadd.xlane.f32.xlu0 %v4884
    %v4902 = vpop.xlane.xlu0 %4901
    %4903 = vadd.xlane.f32.xlu0 %v4885
    %v4904 = vpop.xlane.xlu0 %4903
    %4905 = vadd.xlane.f32.xlu0 %v4886
    %v4906 = vpop.xlane.xlu0 %4905
    %4907 = vadd.xlane.f32.xlu0 %v4887
    %v4908 = vpop.xlane.xlu0 %4907
    %4909 = vadd.xlane.f32.xlu0 %v4888
    %v4910 = vpop.xlane.xlu0 %4909
    %4911 = vadd.xlane.f32.xlu0 %v4889
    %v4912 = vpop.xlane.xlu0 %4911
    %4913 = vadd.xlane.f32.xlu0 %v4890
    %v4914 = vpop.xlane.xlu0 %4913
    %4915 = vadd.xlane.f32.xlu0 %v4891
    %v4916 = vpop.xlane.xlu0 %4915
    %4917 = vadd.xlane.f32.xlu0 %v4892
    %v4918 = vpop.xlane.xlu0 %4917
    %4919 = vadd.xlane.f32.xlu0 %v4893
    %v4920 = vpop.xlane.xlu0 %4919
    %4921 = vadd.xlane.f32.xlu0 %v4894
    %v4922 = vpop.xlane.xlu0 %4921
    %4923 = vadd.xlane.f32.xlu0 %v4895
    %v4924 = vpop.xlane.xlu0 %4923
    %4925 = vadd.xlane.f32.xlu0 %v4896
    %v4926 = vpop.xlane.xlu0 %4925
    %4927 = vadd.xlane.f32.xlu0 %v4897
    %v4928 = vpop.xlane.xlu0 %4927
    %4929 = vadd.xlane.f32.xlu0 %v4898
    %v4930 = vpop.xlane.xlu0 %4929
    %vm4931 = vcmp.eq.f32.partialorder %v4900, %v3183
    %vm4932 = vcmp.eq.f32.partialorder %v4902, %v3184
    %vm4933 = vcmp.eq.f32.partialorder %v4904, %v3185
    %vm4934 = vcmp.eq.f32.partialorder %v4906, %v3186
    %vm4935 = vcmp.eq.f32.partialorder %v4908, %v3187
    %vm4936 = vcmp.eq.f32.partialorder %v4910, %v3188
    %vm4937 = vcmp.eq.f32.partialorder %v4912, %v3189
    %vm4938 = vcmp.eq.f32.partialorder %v4914, %v3190
    %vm4939 = vcmp.eq.f32.partialorder %v4916, %v3191
    %vm4940 = vcmp.eq.f32.partialorder %v4918, %v3192
    %vm4941 = vcmp.eq.f32.partialorder %v4920, %v3193
    %vm4942 = vcmp.eq.f32.partialorder %v4922, %v3194
    %vm4943 = vcmp.eq.f32.partialorder %v4924, %v3195
    %vm4944 = vcmp.eq.f32.partialorder %v4926, %v3196
    %vm4945 = vcmp.eq.f32.partialorder %v4928, %v3197
    %vm4946 = vcmp.eq.f32.partialorder %v4930, %v3198
    %v4947 = vsel %vm4931, 1, 0
    %v4948 = vsel %vm4932, 1, 0
    %v4949 = vsel %vm4933, 1, 0
    %v4950 = vsel %vm4934, 1, 0
    %v4951 = vsel %vm4935, 1, 0
    %v4952 = vsel %vm4936, 1, 0
    %v4953 = vsel %vm4937, 1, 0
    %v4954 = vsel %vm4938, 1, 0
    %v4955 = vsel %vm4939, 1, 0
    %v4956 = vsel %vm4940, 1, 0
    %v4957 = vsel %vm4941, 1, 0
    %v4958 = vsel %vm4942, 1, 0
    %v4959 = vsel %vm4943, 1, 0
    %v4960 = vsel %vm4944, 1, 0
    %v4961 = vsel %vm4945, 1, 0
    %v4962 = vsel %vm4946, 1, 0
    %v4963 = vcvt.s32.f32 %v4947
    %v4964 = vcvt.s32.f32 %v4948
    %v4965 = vcvt.s32.f32 %v4949
    %v4966 = vcvt.s32.f32 %v4950
    %v4967 = vcvt.s32.f32 %v4951
    %v4968 = vcvt.s32.f32 %v4952
    %v4969 = vcvt.s32.f32 %v4953
    %v4970 = vcvt.s32.f32 %v4954
    %v4971 = vcvt.s32.f32 %v4955
    %v4972 = vcvt.s32.f32 %v4956
    %v4973 = vcvt.s32.f32 %v4957
    %v4974 = vcvt.s32.f32 %v4958
    %v4975 = vcvt.s32.f32 %v4959
    %v4976 = vcvt.s32.f32 %v4960
    %v4977 = vcvt.s32.f32 %v4961
    %v4978 = vcvt.s32.f32 %v4962
    %v4979 = vmul.f32 %v1289, %v4963
    %v4980 = vmul.f32 %v1290, %v4964
    %v4981 = vmul.f32 %v1291, %v4965
    %v4982 = vmul.f32 %v1292, %v4966
    %v4983 = vmul.f32 %v1293, %v4967
    %v4984 = vmul.f32 %v1294, %v4968
    %v4985 = vmul.f32 %v1295, %v4969
    %v4986 = vmul.f32 %v1296, %v4970
    %v4987 = vmul.f32 %v1297, %v4971
    %v4988 = vmul.f32 %v1298, %v4972
    %v4989 = vmul.f32 %v1299, %v4973
    %v4990 = vmul.f32 %v1300, %v4974
    %v4991 = vmul.f32 %v1301, %v4975
    %v4992 = vmul.f32 %v1302, %v4976
    %v4993 = vmul.f32 %v1303, %v4977
    %v4994 = vmul.f32 %v1304, %v4978
    %4996 = vset.pattern.permute.xlu0 7
    %4997 = vperm.xlu0 %4996, %v4979
    %v4998 = vpop.permute.xlu0 %4997
    %5001 = vset.pattern.permute.xlu0 7
    %5002 = vperm.xlu0 %5001, %v4980
    %v5003 = vpop.permute.xlu0 %5002
    %5006 = vset.pattern.permute.xlu0 7
    %5007 = vperm.xlu0 %5006, %v4981
    %v5008 = vpop.permute.xlu0 %5007
    %5011 = vset.pattern.permute.xlu0 7
    %5012 = vperm.xlu0 %5011, %v4982
    %v5013 = vpop.permute.xlu0 %5012
    %5016 = vset.pattern.permute.xlu0 7
    %5017 = vperm.xlu0 %5016, %v4983
    %v5018 = vpop.permute.xlu0 %5017
    %5021 = vset.pattern.permute.xlu0 7
    %5022 = vperm.xlu0 %5021, %v4984
    %v5023 = vpop.permute.xlu0 %5022
    %5026 = vset.pattern.permute.xlu0 7
    %5027 = vperm.xlu0 %5026, %v4985
    %v5028 = vpop.permute.xlu0 %5027
    %5031 = vset.pattern.permute.xlu0 7
    %5032 = vperm.xlu0 %5031, %v4986
    %v5033 = vpop.permute.xlu0 %5032
    %5036 = vset.pattern.permute.xlu0 7
    %5037 = vperm.xlu0 %5036, %v4987
    %v5038 = vpop.permute.xlu0 %5037
    %5041 = vset.pattern.permute.xlu0 7
    %5042 = vperm.xlu0 %5041, %v4988
    %v5043 = vpop.permute.xlu0 %5042
    %5046 = vset.pattern.permute.xlu0 7
    %5047 = vperm.xlu0 %5046, %v4989
    %v5048 = vpop.permute.xlu0 %5047
    %5051 = vset.pattern.permute.xlu0 7
    %5052 = vperm.xlu0 %5051, %v4990
    %v5053 = vpop.permute.xlu0 %5052
    %5056 = vset.pattern.permute.xlu0 7
    %5057 = vperm.xlu0 %5056, %v4991
    %v5058 = vpop.permute.xlu0 %5057
    %5061 = vset.pattern.permute.xlu0 7
    %5062 = vperm.xlu0 %5061, %v4992
    %v5063 = vpop.permute.xlu0 %5062
    %5066 = vset.pattern.permute.xlu0 7
    %5067 = vperm.xlu0 %5066, %v4993
    %v5068 = vpop.permute.xlu0 %5067
    %5071 = vset.pattern.permute.xlu0 7
    %5072 = vperm.xlu0 %5071, %v4994
    %v5073 = vpop.permute.xlu0 %5072
    %v5075 = vmul.f32 %v4998, %v2415
    %v5076 = vmul.f32 %v5003, %v2415
    %v5077 = vmul.f32 %v5008, %v2415
    %v5078 = vmul.f32 %v5013, %v2415
    %v5079 = vmul.f32 %v5018, %v2415
    %v5080 = vmul.f32 %v5023, %v2415
    %v5081 = vmul.f32 %v5028, %v2415
    %v5082 = vmul.f32 %v5033, %v2415
    %v5083 = vmul.f32 %v5038, %v2415
    %v5084 = vmul.f32 %v5043, %v2415
    %v5085 = vmul.f32 %v5048, %v2415
    %v5086 = vmul.f32 %v5053, %v2415
    %v5087 = vmul.f32 %v5058, %v2415
    %v5088 = vmul.f32 %v5063, %v2415
    %v5089 = vmul.f32 %v5068, %v2415
    %v5090 = vmul.f32 %v5073, %v2415
    %v5091 = vadd.f32 %v4767, %v5075
    %v5092 = vadd.f32 %v4768, %v5076
    %v5093 = vadd.f32 %v4769, %v5077
    %v5094 = vadd.f32 %v4770, %v5078
    %v5095 = vadd.f32 %v4771, %v5079
    %v5096 = vadd.f32 %v4772, %v5080
    %v5097 = vadd.f32 %v4773, %v5081
    %v5098 = vadd.f32 %v4774, %v5082
    %v5099 = vadd.f32 %v4775, %v5083
    %v5100 = vadd.f32 %v4776, %v5084
    %v5101 = vadd.f32 %v4777, %v5085
    %v5102 = vadd.f32 %v4778, %v5086
    %v5103 = vadd.f32 %v4779, %v5087
    %v5104 = vadd.f32 %v4780, %v5088
    %v5105 = vadd.f32 %v4781, %v5089
    %v5106 = vadd.f32 %v4782, %v5090
    %v5107 = vlaneseq
    %v5108 = vshrl.u32 %v5107, 7
    %v5109 = vsub.s32 5, %v5108
    %v5110 = vrot.slane %v3215, %v5109
    %vm5111 = vcmp.lt.f32.partialorder %v5110, %v2454
    %vm5112 = vcmp.lt.f32.partialorder %v5110, %v2459
    %vm5113 = vcmp.lt.f32.partialorder %v5110, %v2464
    %vm5114 = vcmp.lt.f32.partialorder %v5110, %v2469
    %vm5115 = vcmp.lt.f32.partialorder %v5110, %v2474
    %vm5116 = vcmp.lt.f32.partialorder %v5110, %v2479
    %vm5117 = vcmp.lt.f32.partialorder %v5110, %v2484
    %vm5118 = vcmp.lt.f32.partialorder %v5110, %v2489
    %vm5119 = vcmp.lt.f32.partialorder %v5110, %v2494
    %vm5120 = vcmp.lt.f32.partialorder %v5110, %v2499
    %vm5121 = vcmp.lt.f32.partialorder %v5110, %v2504
    %vm5122 = vcmp.lt.f32.partialorder %v5110, %v2509
    %vm5123 = vcmp.lt.f32.partialorder %v5110, %v2514
    %vm5124 = vcmp.lt.f32.partialorder %v5110, %v2519
    %vm5125 = vcmp.lt.f32.partialorder %v5110, %v2524
    %vm5126 = vcmp.lt.f32.partialorder %v5110, %v2529
    %vm5127 = vmand %vm3103, %vm5111
    %vm5128 = vmand %vm3104, %vm5112
    %vm5129 = vmand %vm3105, %vm5113
    %vm5130 = vmand %vm3106, %vm5114
    %vm5131 = vmand %vm3107, %vm5115
    %vm5132 = vmand %vm3108, %vm5116
    %vm5133 = vmand %vm3109, %vm5117
    %vm5134 = vmand %vm3110, %vm5118
    %vm5135 = vmand %vm3111, %vm5119
    %vm5136 = vmand %vm3112, %vm5120
    %vm5137 = vmand %vm3113, %vm5121
    %vm5138 = vmand %vm3114, %vm5122
    %vm5139 = vmand %vm3115, %vm5123
    %vm5140 = vmand %vm3116, %vm5124
    %vm5141 = vmand %vm3117, %vm5125
    %vm5142 = vmand %vm3118, %vm5126
    %vm5143 = vcmp.eq.f32.partialorder %v5110, %v2454
    %vm5144 = vcmp.eq.f32.partialorder %v5110, %v2459
    %vm5145 = vcmp.eq.f32.partialorder %v5110, %v2464
    %vm5146 = vcmp.eq.f32.partialorder %v5110, %v2469
    %vm5147 = vcmp.eq.f32.partialorder %v5110, %v2474
    %vm5148 = vcmp.eq.f32.partialorder %v5110, %v2479
    %vm5149 = vcmp.eq.f32.partialorder %v5110, %v2484
    %vm5150 = vcmp.eq.f32.partialorder %v5110, %v2489
    %vm5151 = vcmp.eq.f32.partialorder %v5110, %v2494
    %vm5152 = vcmp.eq.f32.partialorder %v5110, %v2499
    %vm5153 = vcmp.eq.f32.partialorder %v5110, %v2504
    %vm5154 = vcmp.eq.f32.partialorder %v5110, %v2509
    %vm5155 = vcmp.eq.f32.partialorder %v5110, %v2514
    %vm5156 = vcmp.eq.f32.partialorder %v5110, %v2519
    %vm5157 = vcmp.eq.f32.partialorder %v5110, %v2524
    %vm5158 = vcmp.eq.f32.partialorder %v5110, %v2529
    %vm5159 = vmand %vm3135, %vm5143
    %vm5160 = vmand %vm3136, %vm5144
    %vm5161 = vmand %vm3137, %vm5145
    %vm5162 = vmand %vm3138, %vm5146
    %vm5163 = vmand %vm3139, %vm5147
    %vm5164 = vmand %vm3140, %vm5148
    %vm5165 = vmand %vm3141, %vm5149
    %vm5166 = vmand %vm3142, %vm5150
    %vm5167 = vmand %vm3143, %vm5151
    %vm5168 = vmand %vm3144, %vm5152
    %vm5169 = vmand %vm3145, %vm5153
    %vm5170 = vmand %vm3146, %vm5154
    %vm5171 = vmand %vm3147, %vm5155
    %vm5172 = vmand %vm3148, %vm5156
    %vm5173 = vmand %vm3149, %vm5157
    %vm5174 = vmand %vm3150, %vm5158
    %vm5175 = vmor %vm5127, %vm5159
    %vm5176 = vmor %vm5128, %vm5160
    %vm5177 = vmor %vm5129, %vm5161
    %vm5178 = vmor %vm5130, %vm5162
    %vm5179 = vmor %vm5131, %vm5163
    %vm5180 = vmor %vm5132, %vm5164
    %vm5181 = vmor %vm5133, %vm5165
    %vm5182 = vmor %vm5134, %vm5166
    %vm5183 = vmor %vm5135, %vm5167
    %vm5184 = vmor %vm5136, %vm5168
    %vm5185 = vmor %vm5137, %vm5169
    %vm5186 = vmor %vm5138, %vm5170
    %vm5187 = vmor %vm5139, %vm5171
    %vm5188 = vmor %vm5140, %vm5172
    %vm5189 = vmor %vm5141, %vm5173
    %vm5190 = vmor %vm5142, %vm5174
    %v5191 = vsel %vm5175, 1, 0
    %v5192 = vsel %vm5176, 1, 0
    %v5193 = vsel %vm5177, 1, 0
    %v5194 = vsel %vm5178, 1, 0
    %v5195 = vsel %vm5179, 1, 0
    %v5196 = vsel %vm5180, 1, 0
    %v5197 = vsel %vm5181, 1, 0
    %v5198 = vsel %vm5182, 1, 0
    %v5199 = vsel %vm5183, 1, 0
    %v5200 = vsel %vm5184, 1, 0
    %v5201 = vsel %vm5185, 1, 0
    %v5202 = vsel %vm5186, 1, 0
    %v5203 = vsel %vm5187, 1, 0
    %v5204 = vsel %vm5188, 1, 0
    %v5205 = vsel %vm5189, 1, 0
    %v5206 = vsel %vm5190, 1, 0
    %v5207 = vcvt.s32.f32 %v5191
    %v5208 = vcvt.s32.f32 %v5192
    %v5209 = vcvt.s32.f32 %v5193
    %v5210 = vcvt.s32.f32 %v5194
    %v5211 = vcvt.s32.f32 %v5195
    %v5212 = vcvt.s32.f32 %v5196
    %v5213 = vcvt.s32.f32 %v5197
    %v5214 = vcvt.s32.f32 %v5198
    %v5215 = vcvt.s32.f32 %v5199
    %v5216 = vcvt.s32.f32 %v5200
    %v5217 = vcvt.s32.f32 %v5201
    %v5218 = vcvt.s32.f32 %v5202
    %v5219 = vcvt.s32.f32 %v5203
    %v5220 = vcvt.s32.f32 %v5204
    %v5221 = vcvt.s32.f32 %v5205
    %v5222 = vcvt.s32.f32 %v5206
    %5223 = vadd.xlane.f32.xlu0 %v5207
    %v5224 = vpop.xlane.xlu0 %5223
    %5225 = vadd.xlane.f32.xlu0 %v5208
    %v5226 = vpop.xlane.xlu0 %5225
    %5227 = vadd.xlane.f32.xlu0 %v5209
    %v5228 = vpop.xlane.xlu0 %5227
    %5229 = vadd.xlane.f32.xlu0 %v5210
    %v5230 = vpop.xlane.xlu0 %5229
    %5231 = vadd.xlane.f32.xlu0 %v5211
    %v5232 = vpop.xlane.xlu0 %5231
    %5233 = vadd.xlane.f32.xlu0 %v5212
    %v5234 = vpop.xlane.xlu0 %5233
    %5235 = vadd.xlane.f32.xlu0 %v5213
    %v5236 = vpop.xlane.xlu0 %5235
    %5237 = vadd.xlane.f32.xlu0 %v5214
    %v5238 = vpop.xlane.xlu0 %5237
    %5239 = vadd.xlane.f32.xlu0 %v5215
    %v5240 = vpop.xlane.xlu0 %5239
    %5241 = vadd.xlane.f32.xlu0 %v5216
    %v5242 = vpop.xlane.xlu0 %5241
    %5243 = vadd.xlane.f32.xlu0 %v5217
    %v5244 = vpop.xlane.xlu0 %5243
    %5245 = vadd.xlane.f32.xlu0 %v5218
    %v5246 = vpop.xlane.xlu0 %5245
    %5247 = vadd.xlane.f32.xlu0 %v5219
    %v5248 = vpop.xlane.xlu0 %5247
    %5249 = vadd.xlane.f32.xlu0 %v5220
    %v5250 = vpop.xlane.xlu0 %5249
    %5251 = vadd.xlane.f32.xlu0 %v5221
    %v5252 = vpop.xlane.xlu0 %5251
    %5253 = vadd.xlane.f32.xlu0 %v5222
    %v5254 = vpop.xlane.xlu0 %5253
    %vm5255 = vcmp.eq.f32.partialorder %v5224, %v3183
    %vm5256 = vcmp.eq.f32.partialorder %v5226, %v3184
    %vm5257 = vcmp.eq.f32.partialorder %v5228, %v3185
    %vm5258 = vcmp.eq.f32.partialorder %v5230, %v3186
    %vm5259 = vcmp.eq.f32.partialorder %v5232, %v3187
    %vm5260 = vcmp.eq.f32.partialorder %v5234, %v3188
    %vm5261 = vcmp.eq.f32.partialorder %v5236, %v3189
    %vm5262 = vcmp.eq.f32.partialorder %v5238, %v3190
    %vm5263 = vcmp.eq.f32.partialorder %v5240, %v3191
    %vm5264 = vcmp.eq.f32.partialorder %v5242, %v3192
    %vm5265 = vcmp.eq.f32.partialorder %v5244, %v3193
    %vm5266 = vcmp.eq.f32.partialorder %v5246, %v3194
    %vm5267 = vcmp.eq.f32.partialorder %v5248, %v3195
    %vm5268 = vcmp.eq.f32.partialorder %v5250, %v3196
    %vm5269 = vcmp.eq.f32.partialorder %v5252, %v3197
    %vm5270 = vcmp.eq.f32.partialorder %v5254, %v3198
    %v5271 = vsel %vm5255, 1, 0
    %v5272 = vsel %vm5256, 1, 0
    %v5273 = vsel %vm5257, 1, 0
    %v5274 = vsel %vm5258, 1, 0
    %v5275 = vsel %vm5259, 1, 0
    %v5276 = vsel %vm5260, 1, 0
    %v5277 = vsel %vm5261, 1, 0
    %v5278 = vsel %vm5262, 1, 0
    %v5279 = vsel %vm5263, 1, 0
    %v5280 = vsel %vm5264, 1, 0
    %v5281 = vsel %vm5265, 1, 0
    %v5282 = vsel %vm5266, 1, 0
    %v5283 = vsel %vm5267, 1, 0
    %v5284 = vsel %vm5268, 1, 0
    %v5285 = vsel %vm5269, 1, 0
    %v5286 = vsel %vm5270, 1, 0
    %v5287 = vcvt.s32.f32 %v5271
    %v5288 = vcvt.s32.f32 %v5272
    %v5289 = vcvt.s32.f32 %v5273
    %v5290 = vcvt.s32.f32 %v5274
    %v5291 = vcvt.s32.f32 %v5275
    %v5292 = vcvt.s32.f32 %v5276
    %v5293 = vcvt.s32.f32 %v5277
    %v5294 = vcvt.s32.f32 %v5278
    %v5295 = vcvt.s32.f32 %v5279
    %v5296 = vcvt.s32.f32 %v5280
    %v5297 = vcvt.s32.f32 %v5281
    %v5298 = vcvt.s32.f32 %v5282
    %v5299 = vcvt.s32.f32 %v5283
    %v5300 = vcvt.s32.f32 %v5284
    %v5301 = vcvt.s32.f32 %v5285
    %v5302 = vcvt.s32.f32 %v5286
    %5319 = vrot.lane.b32.xlu0 %v5287, 121
    %v5320 = vpop.permute.xlu0 %5319
    %5321 = vrot.lane.b32.xlu0 %v5288, 121
    %v5322 = vpop.permute.xlu0 %5321
    %5323 = vrot.lane.b32.xlu0 %v5289, 121
    %v5324 = vpop.permute.xlu0 %5323
    %5325 = vrot.lane.b32.xlu0 %v5290, 121
    %v5326 = vpop.permute.xlu0 %5325
    %5327 = vrot.lane.b32.xlu0 %v5291, 121
    %v5328 = vpop.permute.xlu0 %5327
    %5329 = vrot.lane.b32.xlu0 %v5292, 121
    %v5330 = vpop.permute.xlu0 %5329
    %5331 = vrot.lane.b32.xlu0 %v5293, 121
    %v5332 = vpop.permute.xlu0 %5331
    %5333 = vrot.lane.b32.xlu0 %v5294, 121
    %v5334 = vpop.permute.xlu0 %5333
    %5335 = vrot.lane.b32.xlu0 %v5295, 121
    %v5336 = vpop.permute.xlu0 %5335
    %5337 = vrot.lane.b32.xlu0 %v5296, 121
    %v5338 = vpop.permute.xlu0 %5337
    %5339 = vrot.lane.b32.xlu0 %v5297, 121
    %v5340 = vpop.permute.xlu0 %5339
    %5341 = vrot.lane.b32.xlu0 %v5298, 121
    %v5342 = vpop.permute.xlu0 %5341
    %5343 = vrot.lane.b32.xlu0 %v5299, 121
    %v5344 = vpop.permute.xlu0 %5343
    %5345 = vrot.lane.b32.xlu0 %v5300, 121
    %v5346 = vpop.permute.xlu0 %5345
    %5347 = vrot.lane.b32.xlu0 %v5301, 121
    %v5348 = vpop.permute.xlu0 %5347
    %5349 = vrot.lane.b32.xlu0 %v5302, 121
    %v5350 = vpop.permute.xlu0 %5349
    %v5367 = vmul.f32 %v1011, %v5320
    %v5368 = vmul.f32 %v1012, %v5322
    %v5369 = vmul.f32 %v1013, %v5324
    %v5370 = vmul.f32 %v1014, %v5326
    %v5371 = vmul.f32 %v1015, %v5328
    %v5372 = vmul.f32 %v1016, %v5330
    %v5373 = vmul.f32 %v1017, %v5332
    %v5374 = vmul.f32 %v1018, %v5334
    %v5375 = vmul.f32 %v1019, %v5336
    %v5376 = vmul.f32 %v1020, %v5338
    %v5377 = vmul.f32 %v1021, %v5340
    %v5378 = vmul.f32 %v1022, %v5342
    %v5379 = vmul.f32 %v1023, %v5344
    %v5380 = vmul.f32 %v1024, %v5346
    %v5381 = vmul.f32 %v1025, %v5348
    %v5382 = vmul.f32 %v1026, %v5350
    %5384 = vset.pattern.permute.xlu0 0
    %5385 = vperm.xlu0 %5384, %v5367
    %v5386 = vpop.permute.xlu0 %5385
    %5389 = vset.pattern.permute.xlu0 0
    %5390 = vperm.xlu0 %5389, %v5368
    %v5391 = vpop.permute.xlu0 %5390
    %5394 = vset.pattern.permute.xlu0 0
    %5395 = vperm.xlu0 %5394, %v5369
    %v5396 = vpop.permute.xlu0 %5395
    %5399 = vset.pattern.permute.xlu0 0
    %5400 = vperm.xlu0 %5399, %v5370
    %v5401 = vpop.permute.xlu0 %5400
    %5404 = vset.pattern.permute.xlu0 0
    %5405 = vperm.xlu0 %5404, %v5371
    %v5406 = vpop.permute.xlu0 %5405
    %5409 = vset.pattern.permute.xlu0 0
    %5410 = vperm.xlu0 %5409, %v5372
    %v5411 = vpop.permute.xlu0 %5410
    %5414 = vset.pattern.permute.xlu0 0
    %5415 = vperm.xlu0 %5414, %v5373
    %v5416 = vpop.permute.xlu0 %5415
    %5419 = vset.pattern.permute.xlu0 0
    %5420 = vperm.xlu0 %5419, %v5374
    %v5421 = vpop.permute.xlu0 %5420
    %5424 = vset.pattern.permute.xlu0 0
    %5425 = vperm.xlu0 %5424, %v5375
    %v5426 = vpop.permute.xlu0 %5425
    %5429 = vset.pattern.permute.xlu0 0
    %5430 = vperm.xlu0 %5429, %v5376
    %v5431 = vpop.permute.xlu0 %5430
    %5434 = vset.pattern.permute.xlu0 0
    %5435 = vperm.xlu0 %5434, %v5377
    %v5436 = vpop.permute.xlu0 %5435
    %5439 = vset.pattern.permute.xlu0 0
    %5440 = vperm.xlu0 %5439, %v5378
    %v5441 = vpop.permute.xlu0 %5440
    %5444 = vset.pattern.permute.xlu0 0
    %5445 = vperm.xlu0 %5444, %v5379
    %v5446 = vpop.permute.xlu0 %5445
    %5449 = vset.pattern.permute.xlu0 0
    %5450 = vperm.xlu0 %5449, %v5380
    %v5451 = vpop.permute.xlu0 %5450
    %5454 = vset.pattern.permute.xlu0 0
    %5455 = vperm.xlu0 %5454, %v5381
    %v5456 = vpop.permute.xlu0 %5455
    %5459 = vset.pattern.permute.xlu0 0
    %5460 = vperm.xlu0 %5459, %v5382
    %v5461 = vpop.permute.xlu0 %5460
    %v5463 = vmul.f32 %v5386, %v2450
    %v5464 = vmul.f32 %v5391, %v2450
    %v5465 = vmul.f32 %v5396, %v2450
    %v5466 = vmul.f32 %v5401, %v2450
    %v5467 = vmul.f32 %v5406, %v2450
    %v5468 = vmul.f32 %v5411, %v2450
    %v5469 = vmul.f32 %v5416, %v2450
    %v5470 = vmul.f32 %v5421, %v2450
    %v5471 = vmul.f32 %v5426, %v2450
    %v5472 = vmul.f32 %v5431, %v2450
    %v5473 = vmul.f32 %v5436, %v2450
    %v5474 = vmul.f32 %v5441, %v2450
    %v5475 = vmul.f32 %v5446, %v2450
    %v5476 = vmul.f32 %v5451, %v2450
    %v5477 = vmul.f32 %v5456, %v2450
    %v5478 = vmul.f32 %v5461, %v2450
    %v5479 = vadd.f32 %v5091, %v5463
    %v5480 = vadd.f32 %v5092, %v5464
    %v5481 = vadd.f32 %v5093, %v5465
    %v5482 = vadd.f32 %v5094, %v5466
    %v5483 = vadd.f32 %v5095, %v5467
    %v5484 = vadd.f32 %v5096, %v5468
    %v5485 = vadd.f32 %v5097, %v5469
    %v5486 = vadd.f32 %v5098, %v5470
    %v5487 = vadd.f32 %v5099, %v5471
    %v5488 = vadd.f32 %v5100, %v5472
    %v5489 = vadd.f32 %v5101, %v5473
    %v5490 = vadd.f32 %v5102, %v5474
    %v5491 = vadd.f32 %v5103, %v5475
    %v5492 = vadd.f32 %v5104, %v5476
    %v5493 = vadd.f32 %v5105, %v5477
    %v5494 = vadd.f32 %v5106, %v5478
    %v5495 = vlaneseq
    %v5496 = vshrl.u32 %v5495, 7
    %v5497 = vsub.s32 6, %v5496
    %v5498 = vrot.slane %v3215, %v5497
    %vm5499 = vcmp.lt.f32.partialorder %v5498, %v2569
    %vm5500 = vcmp.lt.f32.partialorder %v5498, %v2574
    %vm5501 = vcmp.lt.f32.partialorder %v5498, %v2579
    %vm5502 = vcmp.lt.f32.partialorder %v5498, %v2584
    %vm5503 = vcmp.lt.f32.partialorder %v5498, %v2589
    %vm5504 = vcmp.lt.f32.partialorder %v5498, %v2594
    %vm5505 = vcmp.lt.f32.partialorder %v5498, %v2599
    %vm5506 = vcmp.lt.f32.partialorder %v5498, %v2604
    %vm5507 = vcmp.lt.f32.partialorder %v5498, %v2609
    %vm5508 = vcmp.lt.f32.partialorder %v5498, %v2614
    %vm5509 = vcmp.lt.f32.partialorder %v5498, %v2619
    %vm5510 = vcmp.lt.f32.partialorder %v5498, %v2624
    %vm5511 = vcmp.lt.f32.partialorder %v5498, %v2629
    %vm5512 = vcmp.lt.f32.partialorder %v5498, %v2634
    %vm5513 = vcmp.lt.f32.partialorder %v5498, %v2639
    %vm5514 = vcmp.lt.f32.partialorder %v5498, %v2644
    %vm5515 = vmand %vm3103, %vm5499
    %vm5516 = vmand %vm3104, %vm5500
    %vm5517 = vmand %vm3105, %vm5501
    %vm5518 = vmand %vm3106, %vm5502
    %vm5519 = vmand %vm3107, %vm5503
    %vm5520 = vmand %vm3108, %vm5504
    %vm5521 = vmand %vm3109, %vm5505
    %vm5522 = vmand %vm3110, %vm5506
    %vm5523 = vmand %vm3111, %vm5507
    %vm5524 = vmand %vm3112, %vm5508
    %vm5525 = vmand %vm3113, %vm5509
    %vm5526 = vmand %vm3114, %vm5510
    %vm5527 = vmand %vm3115, %vm5511
    %vm5528 = vmand %vm3116, %vm5512
    %vm5529 = vmand %vm3117, %vm5513
    %vm5530 = vmand %vm3118, %vm5514
    %vm5531 = vcmp.eq.f32.partialorder %v5498, %v2569
    %vm5532 = vcmp.eq.f32.partialorder %v5498, %v2574
    %vm5533 = vcmp.eq.f32.partialorder %v5498, %v2579
    %vm5534 = vcmp.eq.f32.partialorder %v5498, %v2584
    %vm5535 = vcmp.eq.f32.partialorder %v5498, %v2589
    %vm5536 = vcmp.eq.f32.partialorder %v5498, %v2594
    %vm5537 = vcmp.eq.f32.partialorder %v5498, %v2599
    %vm5538 = vcmp.eq.f32.partialorder %v5498, %v2604
    %vm5539 = vcmp.eq.f32.partialorder %v5498, %v2609
    %vm5540 = vcmp.eq.f32.partialorder %v5498, %v2614
    %vm5541 = vcmp.eq.f32.partialorder %v5498, %v2619
    %vm5542 = vcmp.eq.f32.partialorder %v5498, %v2624
    %vm5543 = vcmp.eq.f32.partialorder %v5498, %v2629
    %vm5544 = vcmp.eq.f32.partialorder %v5498, %v2634
    %vm5545 = vcmp.eq.f32.partialorder %v5498, %v2639
    %vm5546 = vcmp.eq.f32.partialorder %v5498, %v2644
    %vm5547 = vmand %vm3135, %vm5531
    %vm5548 = vmand %vm3136, %vm5532
    %vm5549 = vmand %vm3137, %vm5533
    %vm5550 = vmand %vm3138, %vm5534
    %vm5551 = vmand %vm3139, %vm5535
    %vm5552 = vmand %vm3140, %vm5536
    %vm5553 = vmand %vm3141, %vm5537
    %vm5554 = vmand %vm3142, %vm5538
    %vm5555 = vmand %vm3143, %vm5539
    %vm5556 = vmand %vm3144, %vm5540
    %vm5557 = vmand %vm3145, %vm5541
    %vm5558 = vmand %vm3146, %vm5542
    %vm5559 = vmand %vm3147, %vm5543
    %vm5560 = vmand %vm3148, %vm5544
    %vm5561 = vmand %vm3149, %vm5545
    %vm5562 = vmand %vm3150, %vm5546
    %vm5563 = vmor %vm5515, %vm5547
    %vm5564 = vmor %vm5516, %vm5548
    %vm5565 = vmor %vm5517, %vm5549
    %vm5566 = vmor %vm5518, %vm5550
    %vm5567 = vmor %vm5519, %vm5551
    %vm5568 = vmor %vm5520, %vm5552
    %vm5569 = vmor %vm5521, %vm5553
    %vm5570 = vmor %vm5522, %vm5554
    %vm5571 = vmor %vm5523, %vm5555
    %vm5572 = vmor %vm5524, %vm5556
    %vm5573 = vmor %vm5525, %vm5557
    %vm5574 = vmor %vm5526, %vm5558
    %vm5575 = vmor %vm5527, %vm5559
    %vm5576 = vmor %vm5528, %vm5560
    %vm5577 = vmor %vm5529, %vm5561
    %vm5578 = vmor %vm5530, %vm5562
    %v5579 = vsel %vm5563, 1, 0
    %v5580 = vsel %vm5564, 1, 0
    %v5581 = vsel %vm5565, 1, 0
    %v5582 = vsel %vm5566, 1, 0
    %v5583 = vsel %vm5567, 1, 0
    %v5584 = vsel %vm5568, 1, 0
    %v5585 = vsel %vm5569, 1, 0
    %v5586 = vsel %vm5570, 1, 0
    %v5587 = vsel %vm5571, 1, 0
    %v5588 = vsel %vm5572, 1, 0
    %v5589 = vsel %vm5573, 1, 0
    %v5590 = vsel %vm5574, 1, 0
    %v5591 = vsel %vm5575, 1, 0
    %v5592 = vsel %vm5576, 1, 0
    %v5593 = vsel %vm5577, 1, 0
    %v5594 = vsel %vm5578, 1, 0
    %v5595 = vcvt.s32.f32 %v5579
    %v5596 = vcvt.s32.f32 %v5580
    %v5597 = vcvt.s32.f32 %v5581
    %v5598 = vcvt.s32.f32 %v5582
    %v5599 = vcvt.s32.f32 %v5583
    %v5600 = vcvt.s32.f32 %v5584
    %v5601 = vcvt.s32.f32 %v5585
    %v5602 = vcvt.s32.f32 %v5586
    %v5603 = vcvt.s32.f32 %v5587
    %v5604 = vcvt.s32.f32 %v5588
    %v5605 = vcvt.s32.f32 %v5589
    %v5606 = vcvt.s32.f32 %v5590
    %v5607 = vcvt.s32.f32 %v5591
    %v5608 = vcvt.s32.f32 %v5592
    %v5609 = vcvt.s32.f32 %v5593
    %v5610 = vcvt.s32.f32 %v5594
    %5611 = vadd.xlane.f32.xlu0 %v5595
    %v5612 = vpop.xlane.xlu0 %5611
    %5613 = vadd.xlane.f32.xlu0 %v5596
    %v5614 = vpop.xlane.xlu0 %5613
    %5615 = vadd.xlane.f32.xlu0 %v5597
    %v5616 = vpop.xlane.xlu0 %5615
    %5617 = vadd.xlane.f32.xlu0 %v5598
    %v5618 = vpop.xlane.xlu0 %5617
    %5619 = vadd.xlane.f32.xlu0 %v5599
    %v5620 = vpop.xlane.xlu0 %5619
    %5621 = vadd.xlane.f32.xlu0 %v5600
    %v5622 = vpop.xlane.xlu0 %5621
    %5623 = vadd.xlane.f32.xlu0 %v5601
    %v5624 = vpop.xlane.xlu0 %5623
    %5625 = vadd.xlane.f32.xlu0 %v5602
    %v5626 = vpop.xlane.xlu0 %5625
    %5627 = vadd.xlane.f32.xlu0 %v5603
    %v5628 = vpop.xlane.xlu0 %5627
    %5629 = vadd.xlane.f32.xlu0 %v5604
    %v5630 = vpop.xlane.xlu0 %5629
    %5631 = vadd.xlane.f32.xlu0 %v5605
    %v5632 = vpop.xlane.xlu0 %5631
    %5633 = vadd.xlane.f32.xlu0 %v5606
    %v5634 = vpop.xlane.xlu0 %5633
    %5635 = vadd.xlane.f32.xlu0 %v5607
    %v5636 = vpop.xlane.xlu0 %5635
    %5637 = vadd.xlane.f32.xlu0 %v5608
    %v5638 = vpop.xlane.xlu0 %5637
    %5639 = vadd.xlane.f32.xlu0 %v5609
    %v5640 = vpop.xlane.xlu0 %5639
    %5641 = vadd.xlane.f32.xlu0 %v5610
    %v5642 = vpop.xlane.xlu0 %5641
    %vm5643 = vcmp.eq.f32.partialorder %v5612, %v3183
    %vm5644 = vcmp.eq.f32.partialorder %v5614, %v3184
    %vm5645 = vcmp.eq.f32.partialorder %v5616, %v3185
    %vm5646 = vcmp.eq.f32.partialorder %v5618, %v3186
    %vm5647 = vcmp.eq.f32.partialorder %v5620, %v3187
    %vm5648 = vcmp.eq.f32.partialorder %v5622, %v3188
    %vm5649 = vcmp.eq.f32.partialorder %v5624, %v3189
    %vm5650 = vcmp.eq.f32.partialorder %v5626, %v3190
    %vm5651 = vcmp.eq.f32.partialorder %v5628, %v3191
    %vm5652 = vcmp.eq.f32.partialorder %v5630, %v3192
    %vm5653 = vcmp.eq.f32.partialorder %v5632, %v3193
    %vm5654 = vcmp.eq.f32.partialorder %v5634, %v3194
    %vm5655 = vcmp.eq.f32.partialorder %v5636, %v3195
    %vm5656 = vcmp.eq.f32.partialorder %v5638, %v3196
    %vm5657 = vcmp.eq.f32.partialorder %v5640, %v3197
    %vm5658 = vcmp.eq.f32.partialorder %v5642, %v3198
    %v5659 = vsel %vm5643, 1, 0
    %v5660 = vsel %vm5644, 1, 0
    %v5661 = vsel %vm5645, 1, 0
    %v5662 = vsel %vm5646, 1, 0
    %v5663 = vsel %vm5647, 1, 0
    %v5664 = vsel %vm5648, 1, 0
    %v5665 = vsel %vm5649, 1, 0
    %v5666 = vsel %vm5650, 1, 0
    %v5667 = vsel %vm5651, 1, 0
    %v5668 = vsel %vm5652, 1, 0
    %v5669 = vsel %vm5653, 1, 0
    %v5670 = vsel %vm5654, 1, 0
    %v5671 = vsel %vm5655, 1, 0
    %v5672 = vsel %vm5656, 1, 0
    %v5673 = vsel %vm5657, 1, 0
    %v5674 = vsel %vm5658, 1, 0
    %v5675 = vcvt.s32.f32 %v5659
    %v5676 = vcvt.s32.f32 %v5660
    %v5677 = vcvt.s32.f32 %v5661
    %v5678 = vcvt.s32.f32 %v5662
    %v5679 = vcvt.s32.f32 %v5663
    %v5680 = vcvt.s32.f32 %v5664
    %v5681 = vcvt.s32.f32 %v5665
    %v5682 = vcvt.s32.f32 %v5666
    %v5683 = vcvt.s32.f32 %v5667
    %v5684 = vcvt.s32.f32 %v5668
    %v5685 = vcvt.s32.f32 %v5669
    %v5686 = vcvt.s32.f32 %v5670
    %v5687 = vcvt.s32.f32 %v5671
    %v5688 = vcvt.s32.f32 %v5672
    %v5689 = vcvt.s32.f32 %v5673
    %v5690 = vcvt.s32.f32 %v5674
    %5707 = vrot.lane.b32.xlu0 %v5675, 123
    %v5708 = vpop.permute.xlu0 %5707
    %5709 = vrot.lane.b32.xlu0 %v5676, 123
    %v5710 = vpop.permute.xlu0 %5709
    %5711 = vrot.lane.b32.xlu0 %v5677, 123
    %v5712 = vpop.permute.xlu0 %5711
    %5713 = vrot.lane.b32.xlu0 %v5678, 123
    %v5714 = vpop.permute.xlu0 %5713
    %5715 = vrot.lane.b32.xlu0 %v5679, 123
    %v5716 = vpop.permute.xlu0 %5715
    %5717 = vrot.lane.b32.xlu0 %v5680, 123
    %v5718 = vpop.permute.xlu0 %5717
    %5719 = vrot.lane.b32.xlu0 %v5681, 123
    %v5720 = vpop.permute.xlu0 %5719
    %5721 = vrot.lane.b32.xlu0 %v5682, 123
    %v5722 = vpop.permute.xlu0 %5721
    %5723 = vrot.lane.b32.xlu0 %v5683, 123
    %v5724 = vpop.permute.xlu0 %5723
    %5725 = vrot.lane.b32.xlu0 %v5684, 123
    %v5726 = vpop.permute.xlu0 %5725
    %5727 = vrot.lane.b32.xlu0 %v5685, 123
    %v5728 = vpop.permute.xlu0 %5727
    %5729 = vrot.lane.b32.xlu0 %v5686, 123
    %v5730 = vpop.permute.xlu0 %5729
    %5731 = vrot.lane.b32.xlu0 %v5687, 123
    %v5732 = vpop.permute.xlu0 %5731
    %5733 = vrot.lane.b32.xlu0 %v5688, 123
    %v5734 = vpop.permute.xlu0 %5733
    %5735 = vrot.lane.b32.xlu0 %v5689, 123
    %v5736 = vpop.permute.xlu0 %5735
    %5737 = vrot.lane.b32.xlu0 %v5690, 123
    %v5738 = vpop.permute.xlu0 %5737
    %v5755 = vmul.f32 %v1107, %v5708
    %v5756 = vmul.f32 %v1108, %v5710
    %v5757 = vmul.f32 %v1109, %v5712
    %v5758 = vmul.f32 %v1110, %v5714
    %v5759 = vmul.f32 %v1111, %v5716
    %v5760 = vmul.f32 %v1112, %v5718
    %v5761 = vmul.f32 %v1113, %v5720
    %v5762 = vmul.f32 %v1114, %v5722
    %v5763 = vmul.f32 %v1115, %v5724
    %v5764 = vmul.f32 %v1116, %v5726
    %v5765 = vmul.f32 %v1117, %v5728
    %v5766 = vmul.f32 %v1118, %v5730
    %v5767 = vmul.f32 %v1119, %v5732
    %v5768 = vmul.f32 %v1120, %v5734
    %v5769 = vmul.f32 %v1121, %v5736
    %v5770 = vmul.f32 %v1122, %v5738
    %5772 = vset.pattern.permute.xlu0 2
    %5773 = vperm.xlu0 %5772, %v5755
    %v5774 = vpop.permute.xlu0 %5773
    %5777 = vset.pattern.permute.xlu0 2
    %5778 = vperm.xlu0 %5777, %v5756
    %v5779 = vpop.permute.xlu0 %5778
    %5782 = vset.pattern.permute.xlu0 2
    %5783 = vperm.xlu0 %5782, %v5757
    %v5784 = vpop.permute.xlu0 %5783
    %5787 = vset.pattern.permute.xlu0 2
    %5788 = vperm.xlu0 %5787, %v5758
    %v5789 = vpop.permute.xlu0 %5788
    %5792 = vset.pattern.permute.xlu0 2
    %5793 = vperm.xlu0 %5792, %v5759
    %v5794 = vpop.permute.xlu0 %5793
    %5797 = vset.pattern.permute.xlu0 2
    %5798 = vperm.xlu0 %5797, %v5760
    %v5799 = vpop.permute.xlu0 %5798
    %5802 = vset.pattern.permute.xlu0 2
    %5803 = vperm.xlu0 %5802, %v5761
    %v5804 = vpop.permute.xlu0 %5803
    %5807 = vset.pattern.permute.xlu0 2
    %5808 = vperm.xlu0 %5807, %v5762
    %v5809 = vpop.permute.xlu0 %5808
    %5812 = vset.pattern.permute.xlu0 2
    %5813 = vperm.xlu0 %5812, %v5763
    %v5814 = vpop.permute.xlu0 %5813
    %5817 = vset.pattern.permute.xlu0 2
    %5818 = vperm.xlu0 %5817, %v5764
    %v5819 = vpop.permute.xlu0 %5818
    %5822 = vset.pattern.permute.xlu0 2
    %5823 = vperm.xlu0 %5822, %v5765
    %v5824 = vpop.permute.xlu0 %5823
    %5827 = vset.pattern.permute.xlu0 2
    %5828 = vperm.xlu0 %5827, %v5766
    %v5829 = vpop.permute.xlu0 %5828
    %5832 = vset.pattern.permute.xlu0 2
    %5833 = vperm.xlu0 %5832, %v5767
    %v5834 = vpop.permute.xlu0 %5833
    %5837 = vset.pattern.permute.xlu0 2
    %5838 = vperm.xlu0 %5837, %v5768
    %v5839 = vpop.permute.xlu0 %5838
    %5842 = vset.pattern.permute.xlu0 2
    %5843 = vperm.xlu0 %5842, %v5769
    %v5844 = vpop.permute.xlu0 %5843
    %5847 = vset.pattern.permute.xlu0 2
    %5848 = vperm.xlu0 %5847, %v5770
    %v5849 = vpop.permute.xlu0 %5848
    %v5851 = vmul.f32 %v5774, %v2565
    %v5852 = vmul.f32 %v5779, %v2565
    %v5853 = vmul.f32 %v5784, %v2565
    %v5854 = vmul.f32 %v5789, %v2565
    %v5855 = vmul.f32 %v5794, %v2565
    %v5856 = vmul.f32 %v5799, %v2565
    %v5857 = vmul.f32 %v5804, %v2565
    %v5858 = vmul.f32 %v5809, %v2565
    %v5859 = vmul.f32 %v5814, %v2565
    %v5860 = vmul.f32 %v5819, %v2565
    %v5861 = vmul.f32 %v5824, %v2565
    %v5862 = vmul.f32 %v5829, %v2565
    %v5863 = vmul.f32 %v5834, %v2565
    %v5864 = vmul.f32 %v5839, %v2565
    %v5865 = vmul.f32 %v5844, %v2565
    %v5866 = vmul.f32 %v5849, %v2565
    %v5867 = vadd.f32 %v5479, %v5851
    %v5868 = vadd.f32 %v5480, %v5852
    %v5869 = vadd.f32 %v5481, %v5853
    %v5870 = vadd.f32 %v5482, %v5854
    %v5871 = vadd.f32 %v5483, %v5855
    %v5872 = vadd.f32 %v5484, %v5856
    %v5873 = vadd.f32 %v5485, %v5857
    %v5874 = vadd.f32 %v5486, %v5858
    %v5875 = vadd.f32 %v5487, %v5859
    %v5876 = vadd.f32 %v5488, %v5860
    %v5877 = vadd.f32 %v5489, %v5861
    %v5878 = vadd.f32 %v5490, %v5862
    %v5879 = vadd.f32 %v5491, %v5863
    %v5880 = vadd.f32 %v5492, %v5864
    %v5881 = vadd.f32 %v5493, %v5865
    %v5882 = vadd.f32 %v5494, %v5866
    %v5883 = vmul.f32 %v3001, %v2985
    %v5884 = vmul.f32 %v3002, %v2986
    %v5885 = vmul.f32 %v3003, %v2987
    %v5886 = vmul.f32 %v3004, %v2988
    %v5887 = vmul.f32 %v3005, %v2989
    %v5888 = vmul.f32 %v3006, %v2990
    %v5889 = vmul.f32 %v3007, %v2991
    %v5890 = vmul.f32 %v3008, %v2992
    %v5891 = vmul.f32 %v3009, %v2993
    %v5892 = vmul.f32 %v3010, %v2994
    %v5893 = vmul.f32 %v3011, %v2995
    %v5894 = vmul.f32 %v3012, %v2996
    %v5895 = vmul.f32 %v3013, %v2997
    %v5896 = vmul.f32 %v3014, %v2998
    %v5897 = vmul.f32 %v3015, %v2999
    %v5898 = vmul.f32 %v3016, %v3000
    %v5899 = vmul.f32 %v3001, %v3001
    %v5900 = vmul.f32 %v3002, %v3002
    %v5901 = vmul.f32 %v3003, %v3003
    %v5902 = vmul.f32 %v3004, %v3004
    %v5903 = vmul.f32 %v3005, %v3005
    %v5904 = vmul.f32 %v3006, %v3006
    %v5905 = vmul.f32 %v3007, %v3007
    %v5906 = vmul.f32 %v3008, %v3008
    %v5907 = vmul.f32 %v3009, %v3009
    %v5908 = vmul.f32 %v3010, %v3010
    %v5909 = vmul.f32 %v3011, %v3011
    %v5910 = vmul.f32 %v3012, %v3012
    %v5911 = vmul.f32 %v3013, %v3013
    %v5912 = vmul.f32 %v3014, %v3014
    %v5913 = vmul.f32 %v3015, %v3015
    %v5914 = vmul.f32 %v3016, %v3016
    %5931 = vrot.lane.b32.xlu0 %v5883, 8
    %v5932 = vpop.permute.xlu0 %5931
    %5933 = vrot.lane.b32.xlu0 %v5884, 8
    %v5934 = vpop.permute.xlu0 %5933
    %5935 = vrot.lane.b32.xlu0 %v5885, 8
    %v5936 = vpop.permute.xlu0 %5935
    %5937 = vrot.lane.b32.xlu0 %v5886, 8
    %v5938 = vpop.permute.xlu0 %5937
    %5939 = vrot.lane.b32.xlu0 %v5887, 8
    %v5940 = vpop.permute.xlu0 %5939
    %5941 = vrot.lane.b32.xlu0 %v5888, 8
    %v5942 = vpop.permute.xlu0 %5941
    %5943 = vrot.lane.b32.xlu0 %v5889, 8
    %v5944 = vpop.permute.xlu0 %5943
    %5945 = vrot.lane.b32.xlu0 %v5890, 8
    %v5946 = vpop.permute.xlu0 %5945
    %5947 = vrot.lane.b32.xlu0 %v5891, 8
    %v5948 = vpop.permute.xlu0 %5947
    %5949 = vrot.lane.b32.xlu0 %v5892, 8
    %v5950 = vpop.permute.xlu0 %5949
    %5951 = vrot.lane.b32.xlu0 %v5893, 8
    %v5952 = vpop.permute.xlu0 %5951
    %5953 = vrot.lane.b32.xlu0 %v5894, 8
    %v5954 = vpop.permute.xlu0 %5953
    %5955 = vrot.lane.b32.xlu0 %v5895, 8
    %v5956 = vpop.permute.xlu0 %5955
    %5957 = vrot.lane.b32.xlu0 %v5896, 8
    %v5958 = vpop.permute.xlu0 %5957
    %5959 = vrot.lane.b32.xlu0 %v5897, 8
    %v5960 = vpop.permute.xlu0 %5959
    %5961 = vrot.lane.b32.xlu0 %v5898, 8
    %v5962 = vpop.permute.xlu0 %5961
    %5995 = vrot.lane.b32.xlu0 %v5899, 16
    %v5996 = vpop.permute.xlu0 %5995
    %5997 = vrot.lane.b32.xlu0 %v5900, 16
    %v5998 = vpop.permute.xlu0 %5997
    %5999 = vrot.lane.b32.xlu0 %v5901, 16
    %v6000 = vpop.permute.xlu0 %5999
    %6001 = vrot.lane.b32.xlu0 %v5902, 16
    %v6002 = vpop.permute.xlu0 %6001
    %6003 = vrot.lane.b32.xlu0 %v5903, 16
    %v6004 = vpop.permute.xlu0 %6003
    %6005 = vrot.lane.b32.xlu0 %v5904, 16
    %v6006 = vpop.permute.xlu0 %6005
    %6007 = vrot.lane.b32.xlu0 %v5905, 16
    %v6008 = vpop.permute.xlu0 %6007
    %6009 = vrot.lane.b32.xlu0 %v5906, 16
    %v6010 = vpop.permute.xlu0 %6009
    %6011 = vrot.lane.b32.xlu0 %v5907, 16
    %v6012 = vpop.permute.xlu0 %6011
    %6013 = vrot.lane.b32.xlu0 %v5908, 16
    %v6014 = vpop.permute.xlu0 %6013
    %6015 = vrot.lane.b32.xlu0 %v5909, 16
    %v6016 = vpop.permute.xlu0 %6015
    %6017 = vrot.lane.b32.xlu0 %v5910, 16
    %v6018 = vpop.permute.xlu0 %6017
    %6019 = vrot.lane.b32.xlu0 %v5911, 16
    %v6020 = vpop.permute.xlu0 %6019
    %6021 = vrot.lane.b32.xlu0 %v5912, 16
    %v6022 = vpop.permute.xlu0 %6021
    %6023 = vrot.lane.b32.xlu0 %v5913, 16
    %v6024 = vpop.permute.xlu0 %6023
    %6025 = vrot.lane.b32.xlu0 %v5914, 16
    %v6026 = vpop.permute.xlu0 %6025
    %6059 = vrot.lane.b32.xlu0 %v5867, 24
    %v6060 = vpop.permute.xlu0 %6059
    %6061 = vrot.lane.b32.xlu0 %v5868, 24
    %v6062 = vpop.permute.xlu0 %6061
    %6063 = vrot.lane.b32.xlu0 %v5869, 24
    %v6064 = vpop.permute.xlu0 %6063
    %6065 = vrot.lane.b32.xlu0 %v5870, 24
    %v6066 = vpop.permute.xlu0 %6065
    %6067 = vrot.lane.b32.xlu0 %v5871, 24
    %v6068 = vpop.permute.xlu0 %6067
    %6069 = vrot.lane.b32.xlu0 %v5872, 24
    %v6070 = vpop.permute.xlu0 %6069
    %6071 = vrot.lane.b32.xlu0 %v5873, 24
    %v6072 = vpop.permute.xlu0 %6071
    %6073 = vrot.lane.b32.xlu0 %v5874, 24
    %v6074 = vpop.permute.xlu0 %6073
    %6075 = vrot.lane.b32.xlu0 %v5875, 24
    %v6076 = vpop.permute.xlu0 %6075
    %6077 = vrot.lane.b32.xlu0 %v5876, 24
    %v6078 = vpop.permute.xlu0 %6077
    %6079 = vrot.lane.b32.xlu0 %v5877, 24
    %v6080 = vpop.permute.xlu0 %6079
    %6081 = vrot.lane.b32.xlu0 %v5878, 24
    %v6082 = vpop.permute.xlu0 %6081
    %6083 = vrot.lane.b32.xlu0 %v5879, 24
    %v6084 = vpop.permute.xlu0 %6083
    %6085 = vrot.lane.b32.xlu0 %v5880, 24
    %v6086 = vpop.permute.xlu0 %6085
    %6087 = vrot.lane.b32.xlu0 %v5881, 24
    %v6088 = vpop.permute.xlu0 %6087
    %6089 = vrot.lane.b32.xlu0 %v5882, 24
    %v6090 = vpop.permute.xlu0 %6089
    %v6107 = vsel %vm2791, %v3001, %v5932
    %v6108 = vsel %vm2791, %v3002, %v5934
    %v6109 = vsel %vm2791, %v3003, %v5936
    %v6110 = vsel %vm2791, %v3004, %v5938
    %v6111 = vsel %vm2791, %v3005, %v5940
    %v6112 = vsel %vm2791, %v3006, %v5942
    %v6113 = vsel %vm2791, %v3007, %v5944
    %v6114 = vsel %vm2791, %v3008, %v5946
    %v6115 = vsel %vm2791, %v3009, %v5948
    %v6116 = vsel %vm2791, %v3010, %v5950
    %v6117 = vsel %vm2791, %v3011, %v5952
    %v6118 = vsel %vm2791, %v3012, %v5954
    %v6119 = vsel %vm2791, %v3013, %v5956
    %v6120 = vsel %vm2791, %v3014, %v5958
    %v6121 = vsel %vm2791, %v3015, %v5960
    %v6122 = vsel %vm2791, %v3016, %v5962
    %vm6123 = vcmask 130048
    %v6124 = vsel %vm6123, %v6107, %v5996
    %v6125 = vsel %vm6123, %v6108, %v5998
    %v6126 = vsel %vm6123, %v6109, %v6000
    %v6127 = vsel %vm6123, %v6110, %v6002
    %v6128 = vsel %vm6123, %v6111, %v6004
    %v6129 = vsel %vm6123, %v6112, %v6006
    %v6130 = vsel %vm6123, %v6113, %v6008
    %v6131 = vsel %vm6123, %v6114, %v6010
    %v6132 = vsel %vm6123, %v6115, %v6012
    %v6133 = vsel %vm6123, %v6116, %v6014
    %v6134 = vsel %vm6123, %v6117, %v6016
    %v6135 = vsel %vm6123, %v6118, %v6018
    %v6136 = vsel %vm6123, %v6119, %v6020
    %v6137 = vsel %vm6123, %v6120, %v6022
    %v6138 = vsel %vm6123, %v6121, %v6024
    %v6139 = vsel %vm6123, %v6122, %v6026
    %vm6140 = vcmask 195584
    %v6141 = vsel %vm6140, %v6124, %v6060
    %v6142 = vsel %vm6140, %v6125, %v6062
    %v6143 = vsel %vm6140, %v6126, %v6064
    %v6144 = vsel %vm6140, %v6127, %v6066
    %v6145 = vsel %vm6140, %v6128, %v6068
    %v6146 = vsel %vm6140, %v6129, %v6070
    %v6147 = vsel %vm6140, %v6130, %v6072
    %v6148 = vsel %vm6140, %v6131, %v6074
    %v6149 = vsel %vm6140, %v6132, %v6076
    %v6150 = vsel %vm6140, %v6133, %v6078
    %v6151 = vsel %vm6140, %v6134, %v6080
    %v6152 = vsel %vm6140, %v6135, %v6082
    %v6153 = vsel %vm6140, %v6136, %v6084
    %v6154 = vsel %vm6140, %v6137, %v6086
    %v6155 = vsel %vm6140, %v6138, %v6088
    %v6156 = vsel %vm6140, %v6139, %v6090
    %6157 = vmatprep.subr.mxu0 0.0
    %6158 = vmatpush1.msra.mxu0 %v6141
    %6159 = vmatprep.subr.mxu0 0.0
    %6160 = vmatpush1.msra.mxu0 %v6142
    %6161 = vmatprep.subr.mxu0 0.0
    %6162 = vmatpush1.msra.mxu0 %v6143
    %6163 = vmatprep.subr.mxu0 0.0
    %6164 = vmatpush1.msra.mxu0 %v6144
    %6165 = vmatprep.subr.mxu0 0.0
    %6166 = vmatpush1.msra.mxu0 %v6145
    %6167 = vmatprep.subr.mxu0 0.0
    %6168 = vmatpush1.msra.mxu0 %v6146
    %6169 = vmatprep.subr.mxu0 0.0
    %6170 = vmatpush1.msra.mxu0 %v6147
    %6171 = vmatprep.subr.mxu0 0.0
    %6172 = vmatpush1.msra.mxu0 %v6148
    %6173 = vmatprep.subr.mxu0 0.0
    %6174 = vmatpush1.msra.mxu0 %v6149
    %6175 = vmatprep.subr.mxu0 0.0
    %6176 = vmatpush1.msra.mxu0 %v6150
    %6177 = vmatprep.subr.mxu0 0.0
    %6178 = vmatpush1.msra.mxu0 %v6151
    %6179 = vmatprep.subr.mxu0 0.0
    %6180 = vmatpush1.msra.mxu0 %v6152
    %6181 = vmatprep.subr.mxu0 0.0
    %6182 = vmatpush1.msra.mxu0 %v6153
    %6183 = vmatprep.subr.mxu0 0.0
    %6184 = vmatpush1.msra.mxu0 %v6154
    %6185 = vmatprep.subr.mxu0 0.0
    %6186 = vmatpush1.msra.mxu0 %v6155
    %6187 = vmatprep.subr.mxu0 0.0
    %6188 = vmatpush1.msra.mxu0 %v6156
    %6189 = vmatprep.subr.mxu0 0.0
    %6190 = vmatpush1.msra.mxu0 0.0
    %6191 = vmatprep.subr.mxu0 0.0
    %6192 = vmatpush1.msra.mxu0 0.0
    %6193 = vmatprep.subr.mxu0 0.0
    %6194 = vmatpush1.msra.mxu0 0.0
    %6195 = vmatprep.subr.mxu0 0.0
    %6196 = vmatpush1.msra.mxu0 0.0
    %6197 = vmatprep.subr.mxu0 0.0
    %6198 = vmatpush1.msra.mxu0 0.0
    %6199 = vmatprep.subr.mxu0 0.0
    %6200 = vmatpush1.msra.mxu0 0.0
    %6201 = vmatprep.subr.mxu0 0.0
    %6202 = vmatpush1.msra.mxu0 0.0
    %6203 = vmatprep.subr.mxu0 0.0
    %6204 = vmatpush1.msra.mxu0 0.0
    %6205 = vmatprep.subr.mxu0 0.0
    %6206 = vmatpush1.msra.mxu0 0.0
    %6207 = vmatprep.subr.mxu0 0.0
    %6208 = vmatpush1.msra.mxu0 0.0
    %6209 = vmatprep.subr.mxu0 0.0
    %6210 = vmatpush1.msra.mxu0 0.0
    %6211 = vmatprep.subr.mxu0 0.0
    %6212 = vmatpush1.msra.mxu0 0.0
    %6213 = vmatprep.subr.mxu0 0.0
    %6214 = vmatpush1.msra.mxu0 0.0
    %6215 = vmatprep.subr.mxu0 0.0
    %6216 = vmatpush1.msra.mxu0 0.0
    %6217 = vmatprep.subr.mxu0 0.0
    %6218 = vmatpush1.msra.mxu0 0.0
    %6219 = vmatprep.subr.mxu0 0.0
    %6220 = vmatpush1.msra.mxu0 0.0
    %6221 = vmatprep.mubr.f32.mxu0 0.0
    %6222 = vmatmul.mubr.f32.gmra.mrb[0].mxu0 %v81
    %v6223 = vpop.f32.mrb[0].mxu0
    %v6224 = vadd.f32 0.0, %v6223
    %v6225 = vpop.f32.mrb[0].mxu0
    %6226 = vdwg.mxu0
    %v6227 = vmul.f32 %v6224, %v2682
    %v6228 = vrsqrt.pop %v6227
    %v6229 = vmul.f32 %v6227, %v6228
    %vm6230 = vcmp.eq.f32.partialorder %v6227, inf
    %v6231 = vsel %vm6230, %v6227, %v6229
    %vm6232 = vcmp.eq.f32.partialorder %v6227, 0.0
    %v6233 = vand.u32 %v6227, 2147483648
    %v6234 = vsel %vm6232, %v6233, %v6231
    %v6235 = vmul.f32 %v6227, %v6234
    %v6236 = vmax.f32 %v6235, 0.0001
    %6238 = vrot.lane.b32.xlu0 %v6236, 8
    %v6239 = vpop.permute.xlu0 %6238
    %v6241 = vrcp.pop %v6239
    %v6242 = vmul.f32 %v6227, %v6241
    %v6243 = vmul.f32 %v6227, %v6227
    %v6244 = vmax.f32 %v6243, 0.0001
    %6246 = vrot.lane.b32.xlu0 %v6244, 16
    %v6247 = vpop.permute.xlu0 %6246
    %v6249 = vrcp.pop %v6247
    %v6250 = vmul.f32 %v6227, %v6249
    %6252 = vrot.lane.b32.xlu0 %v6224, 112
    %v6253 = vpop.permute.xlu0 %6252
    %6256 = vrot.lane.b32.xlu0 %v6234, 16
    %v6257 = vpop.permute.xlu0 %6256
    %6260 = vrot.lane.b32.xlu0 %v6242, 16
    %v6261 = vpop.permute.xlu0 %6260
    %6264 = vrot.lane.b32.xlu0 %v6250, 16
    %v6265 = vpop.permute.xlu0 %6264
    %v6267 = vsel %vm2791, %v2753, %v6253
    %v6268 = vsel %vm6123, %v6267, %v6257
    %v6269 = vsel %vm6140, %v6268, %v6261
    %vm6270 = vcmask 261120
    %v6271 = vsel %vm6270, %v6269, %v6265
    %vm6272 = vcmask 326656
    %6273 = vst.msk [vmem:[#allocation10] sm:$0xff] %vm6272, %v6271
    // Predicated region
    $region35: #{tpu_custom_call.1} parent=1 // pred_check
      _
    $region36: #{tpu_custom_call.1} parent=1 // pred_check_branch
      %6275 = sbr.rel (0) target = $region38
    $region37: #{tpu_custom_call.1} parent=1 // pred_region
      %s6277 = ssub.s32 128, 128
      %6278 = vsyncadd [#allocation6], %s6277
      %s6280 = sshll.u32 [#allocation10], 4
      %s6281 = int_to_ptr.vmem [resolvable:$true] %s6280
      %6283 = dma.vmem_to_hbm [thread:$0]  %s6281, 128, %s5, [#allocation6]
    $region38: #{tpu_custom_call.1} parent=1 // pred_fallthru
      _
    // Predicated region
    $region39: #{tpu_custom_call.1} parent=1 // pred_check
      _
    $region40: #{tpu_custom_call.1} parent=1 // pred_check_branch
      %6285 = sbr.rel (0) target = $region42
    $region41: #{tpu_custom_call.1} parent=1 // pred_region
      %6286 = dma.done [#allocation6], 128
    $region42: #{tpu_custom_call.1} parent=1 // pred_fallthru
      _
    %6287 = vsyncpa [#allocation5], 1
    %6288 = vsyncpa [#allocation8], 1
    %6289 = vsyncpa [#allocation6], 1

</llo_original>
